<compile_context>
chip_gen: v6e
topology: v6e:2x2x1
jax: 0.10.0
libtpu: 0.0.40
codegen_flags: <defaults>
</compile_context>

<pallas_src>
import numpy as np
import jax
import jax.numpy as jnp
from jax import lax
from jax.experimental import pallas as pl
from jax.experimental.pallas import tpu as pltpu


# ---------------------------------------------------------------------------
# Helpers
# ---------------------------------------------------------------------------
def _pick_tile(n, target, base=128):
    """Largest multiple of `base` that divides n and is <= min(n, target)."""
    t = max(base, (min(n, target) // base) * base)
    while n % t:
        t -= base
    return t


def _compiler_params(dim_sems):
    # 32 MiB scoped VMEM is the default on v6e/v7x and safely inside v7x's
    # 64 MiB physical VMEM; working sets below are ~6-13 MiB.
    return pltpu.CompilerParams(
        dimension_semantics=dim_sems,
        vmem_limit_bytes=32 * 1024 * 1024,
    )


# ---------------------------------------------------------------------------
# Kernel 1: base_gcn    hidden = relu((adj @ X) @ W1)
# grid = (row tiles [parallel], contraction tiles over N [arbitrary])
# ---------------------------------------------------------------------------
def _make_gcn1_kernel(tk, x_resident):
    def kernel(adj_ref, x_ref, w1_ref, hid_ref, acc_ref):
        k = pl.program_id(1)

        @pl.when(k == 0)
        def _init():
            acc_ref[...] = jnp.zeros_like(acc_ref)

        if x_resident:
            # X is resident in VMEM: read from HBM once, slice per k-step.
            x_blk = x_ref[pl.ds(pl.multiple_of(k * tk, 128), tk), :]
        else:
            x_blk = x_ref[...]

        # (tm, tk) @ (tk, D): bf16 MXU inputs, f32 accumulation.
        acc_ref[...] += jnp.dot(adj_ref[...], x_blk,
                                preferred_element_type=jnp.float32)

        @pl.when(k == pl.num_programs(1) - 1)
        def _finalize():
            ax = acc_ref[...].astype(jnp.bfloat16)          # MXU input precision
            xw = jnp.dot(ax, w1_ref[...], preferred_element_type=jnp.float32)
            hid_ref[...] = jnp.maximum(xw, 0.0).astype(hid_ref.dtype)  # relu in f32

    return kernel


# ---------------------------------------------------------------------------
# Kernel 2: gcn_mean + gcn_logstddev + reparameterisation
#   mean   = relu((adj @ hidden) @ Wm)
#   logstd = relu((adj @ hidden) @ Wl)
#   Z      = noise * exp(logstd) + mean
# ---------------------------------------------------------------------------
def _make_gcn2_kernel(tk, h_resident):
    def kernel(adj_ref, hid_ref, wm_ref, wl_ref, noise_ref, z_ref, acc_ref):
        k = pl.program_id(1)

        @pl.when(k == 0)
        def _init():
            acc_ref[...] = jnp.zeros_like(acc_ref)

        if h_resident:
            h_blk = hid_ref[pl.ds(pl.multiple_of(k * tk, 128), tk), :]
        else:
            h_blk = hid_ref[...]

        acc_ref[...] += jnp.dot(adj_ref[...], h_blk,
                                preferred_element_type=jnp.float32)

        @pl.when(k == pl.num_programs(1) - 1)
        def _finalize():
            ah = acc_ref[...].astype(jnp.bfloat16)
            # Sequential mean / logstd halves keep vreg pressure flat even at
            # large row tiles (perf review item).
            mean = jnp.maximum(
                jnp.dot(ah, wm_ref[...], preferred_element_type=jnp.float32), 0.0)
            logstd = jnp.maximum(
                jnp.dot(ah, wl_ref[...], preferred_element_type=jnp.float32), 0.0)
            z = noise_ref[...] * jnp.exp(logstd) + mean      # reparameterisation
            z_ref[...] = z.astype(z_ref.dtype)

    return kernel


# ---------------------------------------------------------------------------
# Kernel 3: dot_product_decode    A_pred = sigmoid(Z @ Z.T)
# Contract the trailing feature axis of both operands (no explicit transpose).
# ---------------------------------------------------------------------------
def _make_decode_kernel(tn, zj_resident):
    def kernel(zi_ref, zj_ref, a_ref):
        if zj_resident:
            j = pl.program_id(1)
            zj = zj_ref[pl.ds(pl.multiple_of(j * tn, 128), tn), :]
        else:
            zj = zj_ref[...]
        logits = lax.dot_general(zi_ref[...], zj, (((1,), (1,)), ((), ())),
                                 preferred_element_type=jnp.float32)
        # sigmoid(x) = 0.5 * (1 + tanh(x/2)): EUP tanh, stable, no VALU divide.
        a_ref[...] = (0.5 * jnp.tanh(0.5 * logits) + 0.5).astype(a_ref.dtype)

    return kernel


# ---------------------------------------------------------------------------
# Forward wrapper
# ---------------------------------------------------------------------------
def vgae_forward(X, adj, W1, Wm, Wl, noise, *,
                 decode_dtype=jnp.bfloat16,
                 resident_budget_bytes=4 * 1024 * 1024):
    N, D = X.shape
    H1 = W1.shape[1]
    H2 = Wm.shape[1]
    assert N % 128 == 0 and D % 128 == 0 and H1 % 128 == 0 and H2 % 128 == 0

    # Precision policy: bf16 MXU inputs, f32 accumulation / elementwise math.
    # adj should already be bf16 (cast once at setup and reused across calls);
    # the astype below is a tracing no-op in that case.
    adj_bf = adj if adj.dtype == jnp.bfloat16 else adj.astype(jnp.bfloat16)
    x_bf = X.astype(jnp.bfloat16)
    w1_bf = W1.astype(jnp.bfloat16)
    wm_bf = Wm.astype(jnp.bfloat16)
    wl_bf = Wl.astype(jnp.bfloat16)
    noise_f32 = noise.astype(jnp.float32)

    # Tile selection: big tiles, 256-aligned rows where possible, collapsing to
    # a single grid step for small N.
    tm = _pick_tile(N, 512)      # row tile for the GCN layers
    tk = _pick_tile(N, 2048)     # contraction tile over N

    x_resident = N * D * 2 <= resident_budget_bytes
    h_resident = N * H1 * 2 <= resident_budget_bytes

    # ---- layer 1: hidden = relu(adj @ X @ W1) ------------------------------
    x_spec = (pl.BlockSpec((N, D), lambda i, k: (0, 0)) if x_resident
              else pl.BlockSpec((tk, D), lambda i, k: (k, 0)))
    x_reads = 1 if x_resident else (N // tm)

    hidden = pl.pallas_call(
        _make_gcn1_kernel(tk, x_resident),
        out_shape=jax.ShapeDtypeStruct((N, H1), jnp.bfloat16),
        grid_spec=pltpu.PrefetchScalarGridSpec(
            num_scalar_prefetch=0,
            grid=(N // tm, N // tk),
            in_specs=[
                pl.BlockSpec((tm, tk), lambda i, k: (i, k)),
                x_spec,
                pl.BlockSpec((D, H1), lambda i, k: (0, 0)),
            ],
            out_specs=pl.BlockSpec((tm, H1), lambda i, k: (i, 0)),
            scratch_shapes=[pltpu.VMEM((tm, D), jnp.float32)],
        ),
        compiler_params=_compiler_params(("parallel", "arbitrary")),
        cost_estimate=pl.CostEstimate(
            flops=2 * N * N * D + 2 * N * D * H1,
            transcendentals=0,
            bytes_accessed=(N * N * 2 + x_reads * N * D * 2
                            + D * H1 * 2 + N * H1 * 2),
        ),
    )(adj_bf, x_bf, w1_bf)

    # ---- layer 2: mean / logstd GCNs + sampling ----------------------------
    hid_spec = (pl.BlockSpec((N, H1), lambda i, k: (0, 0)) if h_resident
                else pl.BlockSpec((tk, H1), lambda i, k: (k, 0)))
    h_reads = 1 if h_resident else (N // tm)

    z = pl.pallas_call(
        _make_gcn2_kernel(tk, h_resident),
        out_shape=jax.ShapeDtypeStruct((N, H2), jnp.float32),
        grid_spec=pltpu.PrefetchScalarGridSpec(
            num_scalar_prefetch=0,
            grid=(N // tm, N // tk),
            in_specs=[
                pl.BlockSpec((tm, tk), lambda i, k: (i, k)),
                hid_spec,
                pl.BlockSpec((H1, H2), lambda i, k: (0, 0)),
                pl.BlockSpec((H1, H2), lambda i, k: (0, 0)),
                pl.BlockSpec((tm, H2), lambda i, k: (i, 0)),
            ],
            out_specs=pl.BlockSpec((tm, H2), lambda i, k: (i, 0)),
            scratch_shapes=[pltpu.VMEM((tm, H1), jnp.float32)],
        ),
        compiler_params=_compiler_params(("parallel", "arbitrary")),
        cost_estimate=pl.CostEstimate(
            flops=2 * N * N * H1 + 4 * N * H1 * H2,
            transcendentals=N * H2,
            bytes_accessed=(N * N * 2 + h_reads * N * H1 * 2 + 2 * H1 * H2 * 2
                            + N * H2 * 4 + N * H2 * 4),
        ),
    )(adj_bf, hidden, wm_bf, wl_bf, noise_f32)

    # ---- decoder: A_pred = sigmoid(Z @ Z.T) --------------------------------
    z_bf = z.astype(jnp.bfloat16)                 # small (N, H2) pass, halves reads
    tmd = _pick_tile(N, 256)
    tnd = _pick_tile(N, 512)
    zj_resident = N * H2 * 2 <= resident_budget_bytes
    zj_spec = (pl.BlockSpec((N, H2), lambda i, j: (0, 0)) if zj_resident
               else pl.BlockSpec((tnd, H2), lambda i, j: (j, 0)))
    zj_reads = 1 if zj_resident else (N // tmd)
    out_itemsize = jnp.dtype(decode_dtype).itemsize

    a_pred = pl.pallas_call(
        _make_decode_kernel(tnd, zj_resident),
        out_shape=jax.ShapeDtypeStruct((N, N), decode_dtype),
        grid_spec=pltpu.PrefetchScalarGridSpec(
            num_scalar_prefetch=0,
            grid=(N // tmd, N // tnd),
            in_specs=[
                pl.BlockSpec((tmd, H2), lambda i, j: (i, 0)),
                zj_spec,
            ],
            out_specs=pl.BlockSpec((tmd, tnd), lambda i, j: (i, j)),
        ),
        compiler_params=_compiler_params(("parallel", "parallel")),
        cost_estimate=pl.CostEstimate(
            flops=2 * N * N * H2,
            transcendentals=N * N,
            bytes_accessed=(N * H2 * 2 + zj_reads * N * H2 * 2
                            + N * N * out_itemsize),
        ),
    )(z_bf, z_bf)

    return z, a_pred


# ---------------------------------------------------------------------------
# Pure-JAX references
# ---------------------------------------------------------------------------
def glorot_init(key, input_dim, output_dim):
    init_range = np.sqrt(6.0 / (input_dim + output_dim))
    u = jax.random.uniform(key, (input_dim, output_dim), dtype=jnp.float32)
    return u * 2.0 * init_range - init_range


def vgae_reference(X, adj, W1, Wm, Wl, noise, *, mixed_precision=True):
    """mixed_precision=True mirrors the kernel's precision policy / operand
    order; False is the plain-f32 math in the module's original order."""
    if mixed_precision:
        c = lambda a: a.astype(jnp.bfloat16)
        ax = jnp.dot(c(adj), c(X), preferred_element_type=jnp.float32)
        hidden = jnp.maximum(
            jnp.dot(c(ax), c(W1), preferred_element_type=jnp.float32), 0.0)
        ah = jnp.dot(c(adj), c(hidden), preferred_element_type=jnp.float32)
        mean = jnp.maximum(
            jnp.dot(c(ah), c(Wm), preferred_element_type=jnp.float32), 0.0)
        logstd = jnp.maximum(
            jnp.dot(c(ah), c(Wl), preferred_element_type=jnp.float32), 0.0)
        z = noise * jnp.exp(logstd) + mean
        logits = lax.dot_general(c(z), c(z), (((1,), (1,)), ((), ())),
                                 preferred_element_type=jnp.float32)
    else:
        hidden = jnp.maximum(adj @ (X @ W1), 0.0)
        mean = jnp.maximum(adj @ (hidden @ Wm), 0.0)
        logstd = jnp.maximum(adj @ (hidden @ Wl), 0.0)
        z = noise * jnp.exp(logstd) + mean
        logits = z @ z.T
    return z, jax.nn.sigmoid(logits)


if __name__ == "__main__":
    # MXU / lane-friendly sizes: every matmul dim is a multiple of 128.
    N = 256
    input_dim = 128
    hidden1_dim = 128
    hidden2_dim = 128

    key = jax.random.PRNGKey(0)
    k_x, k_adj, k_w1, k_wm, k_wl, k_noise = jax.random.split(key, 6)

    X = jax.random.normal(k_x, (N, input_dim), dtype=jnp.float32)

    # Symmetric adjacency with self loops, row-normalised (dense stand-in for
    # the normalised sparse adjacency the module builds in data_transfer).
    raw = (jax.random.uniform(k_adj, (N, N)) < 0.15).astype(jnp.float32)
    adj = jnp.maximum(raw, raw.T) + jnp.eye(N, dtype=jnp.float32)
    adj = adj / jnp.sum(adj, axis=1, keepdims=True)

    W1 = glorot_init(k_w1, input_dim, hidden1_dim)
    Wm = glorot_init(k_wm, hidden1_dim, hidden2_dim)
    Wl = glorot_init(k_wl, hidden1_dim, hidden2_dim)

    # Reparameterisation noise (torch.randn equivalent), passed explicitly so
    # the run is deterministic and checkable.
    noise = jax.random.normal(k_noise, (N, hidden2_dim), dtype=jnp.float32)

    # Cast the adjacency to bf16 once at setup (reused across calls): no
    # per-call f32->bf16 pass over the largest tensor.
    adj_bf = adj.astype(jnp.bfloat16)

    fwd = jax.jit(vgae_forward)
    Z, A_pred = fwd(X, adj_bf, W1, Wm, Wl, noise)
    Z = jax.block_until_ready(Z)
    A_pred = jax.block_until_ready(A_pred)
    A_pred_f32 = np.asarray(A_pred.astype(jnp.float32))

    # Primary check: mirrors the kernel's mixed-precision policy.
    Z_ref, A_ref = vgae_reference(X, adj, W1, Wm, Wl, noise, mixed_precision=True)
    np.testing.assert_allclose(np.asarray(Z), np.asarray(Z_ref), rtol=1e-2, atol=1e-2)
    np.testing.assert_allclose(A_pred_f32, np.asarray(A_ref), rtol=5e-2, atol=5e-2)

    # Sanity check against plain-f32 module-order math (loose: bf16 MXU inputs
    # and a bf16 A_pred writeback).
    Z_f32, A_f32 = vgae_reference(X, adj, W1, Wm, Wl, noise, mixed_precision=False)
    np.testing.assert_allclose(np.asarray(Z), np.asarray(Z_f32), rtol=0.0, atol=6e-2)
    np.testing.assert_allclose(A_pred_f32, np.asarray(A_f32), rtol=0.0, atol=1.2e-1)

    print("KERNEL_OK")
</pallas_src>

<mosaic_0001>
module attributes {stable_mosaic.version = 11 : i64} {
  func.func @kernel(%arg0: i32, %arg1: i32, %arg2: memref<256x256xbf16, #tpu.memory_space<vmem>>, %arg3: memref<256x128xbf16, #tpu.memory_space<vmem>>, %arg4: memref<128x128xbf16, #tpu.memory_space<vmem>>, %arg5: memref<256x128xbf16, #tpu.memory_space<vmem>>, %arg6: memref<256x128xf32, #tpu.memory_space<vmem>>) attributes {dimension_semantics = [#tpu.dimension_semantics<parallel>, #tpu.dimension_semantics<arbitrary>], iteration_bounds = array<i64: 1, 1>, scalar_prefetch = 0 : i64, scratch_operands = 1 : i64, tpu.core_type = #tpu.core_type<tc>, window_params = [{transform_indices = @transform_0, window_bounds = array<i64: 256, 256>}, {pipeline_mode = #tpu.pipeline_mode<synchronous>, transform_indices = @transform_1, window_bounds = array<i64: 256, 128>}, {pipeline_mode = #tpu.pipeline_mode<synchronous>, transform_indices = @transform_2, window_bounds = array<i64: 128, 128>}, {transform_indices = @transform_3, window_bounds = array<i64: 256, 128>}]} {
    %c0_i32 = arith.constant 0 : i32
    %0 = arith.cmpi eq, %arg1, %c0_i32 : i32
    %1 = arith.extui %0 : i1 to i32
    %c0_i32_0 = arith.constant 0 : i32
    %2 = arith.cmpi ne, %1, %c0_i32_0 : i32
    scf.if %2 {
      %cst_9 = arith.constant 0.000000e+00 : f32
      %15 = vector.broadcast %cst_9 : f32 to vector<256x128xf32>
      %c0_10 = arith.constant 0 : index
      %c0_11 = arith.constant 0 : index
      %16 = vector.load %arg6[%c0_10, %c0_11] : memref<256x128xf32, #tpu.memory_space<vmem>>, vector<256x128xf32>
      tpu.vector_store %arg6[%c0_10, %c0_11], %15 {strides = array<i32>} : memref<256x128xf32, #tpu.memory_space<vmem>>, vector<256x128xf32>,
    } else {
    }
    %c256_i32 = arith.constant 256 : i32
    %3 = arith.muli %arg1, %c256_i32 : i32
    %4 = tpu.assume_multiple %3, 128 : i32
    %5 = arith.index_cast %4 : i32 to index
    %c0 = arith.constant 0 : index
    %6 = vector.load %arg3[%5, %c0] : memref<256x128xbf16, #tpu.memory_space<vmem>>, vector<256x128xbf16>
    %c0_1 = arith.constant 0 : index
    %c0_2 = arith.constant 0 : index
    %7 = vector.load %arg6[%c0_1, %c0_2] : memref<256x128xf32, #tpu.memory_space<vmem>>, vector<256x128xf32>
    %c0_3 = arith.constant 0 : index
    %c0_4 = arith.constant 0 : index
    %8 = vector.load %arg2[%c0_3, %c0_4] : memref<256x256xbf16, #tpu.memory_space<vmem>>, vector<256x256xbf16>
    %cst = arith.constant dense<0.000000e+00> : vector<256x128xf32>
    %9 = tpu.matmul %8, %6, %cst {dimension_numbers = #tpu.dot_dimension_numbers<[1], [0], [0], [1], [0, 0, 1, 1], [], []>} : vector<256x256xbf16>, vector<256x128xbf16>, vector<256x128xf32> -> vector<256x128xf32>
    %10 = arith.addf %7, %9 : vector<256x128xf32>
    %c0_5 = arith.constant 0 : index
    %c0_6 = arith.constant 0 : index
    %11 = vector.load %arg6[%c0_5, %c0_6] : memref<256x128xf32, #tpu.memory_space<vmem>>, vector<256x128xf32>
    tpu.vector_store %arg6[%c0_5, %c0_6], %10 {strides = array<i32>} : memref<256x128xf32, #tpu.memory_space<vmem>>, vector<256x128xf32>,
    %c0_i32_7 = arith.constant 0 : i32
    %12 = arith.cmpi eq, %arg1, %c0_i32_7 : i32
    %13 = arith.extui %12 : i1 to i32
    %c0_i32_8 = arith.constant 0 : i32
    %14 = arith.cmpi ne, %13, %c0_i32_8 : i32
    scf.if %14 {
      %c0_9 = arith.constant 0 : index
      %c0_10 = arith.constant 0 : index
      %15 = vector.load %arg6[%c0_9, %c0_10] : memref<256x128xf32, #tpu.memory_space<vmem>>, vector<256x128xf32>
      %16 = arith.truncf %15 : vector<256x128xf32> to vector<256x128xbf16>
      %c0_11 = arith.constant 0 : index
      %c0_12 = arith.constant 0 : index
      %17 = vector.load %arg4[%c0_11, %c0_12] : memref<128x128xbf16, #tpu.memory_space<vmem>>, vector<128x128xbf16>
      %cst_13 = arith.constant dense<0.000000e+00> : vector<256x128xf32>
      %18 = tpu.matmul %16, %17, %cst_13 {dimension_numbers = #tpu.dot_dimension_numbers<[1], [0], [0], [1], [0, 0, 1, 1], [], []>} : vector<256x128xbf16>, vector<128x128xbf16>, vector<256x128xf32> -> vector<256x128xf32>
      %cst_14 = arith.constant 0.000000e+00 : f32
      %19 = vector.broadcast %cst_14 : f32 to vector<256x128xf32>
      %20 = arith.maximumf %18, %19 : vector<256x128xf32>
      %21 = arith.truncf %20 : vector<256x128xf32> to vector<256x128xbf16>
      %c0_15 = arith.constant 0 : index
      %c0_16 = arith.constant 0 : index
      %22 = vector.load %arg5[%c0_15, %c0_16] : memref<256x128xbf16, #tpu.memory_space<vmem>>, vector<256x128xbf16>
      tpu.vector_store %arg5[%c0_15, %c0_16], %21 {strides = array<i32>} : memref<256x128xbf16, #tpu.memory_space<vmem>>, vector<256x128xbf16>,
    } else {
    }
    return
  }
  func.func @transform_0(%arg0: i32, %arg1: i32) -> (i32, i32) {
    %c0_i32 = arith.constant 0 : i32
    return %arg0, %arg1 : i32, i32
  }
  func.func @transform_1(%arg0: i32, %arg1: i32) -> (i32, i32) {
    %c0_i32 = arith.constant 0 : i32
    %c0_i32_0 = arith.constant 0 : i32
    %c0_i32_1 = arith.constant 0 : i32
    return %c0_i32, %c0_i32_0 : i32, i32
  }
  func.func @transform_2(%arg0: i32, %arg1: i32) -> (i32, i32) {
    %c0_i32 = arith.constant 0 : i32
    %c0_i32_0 = arith.constant 0 : i32
    %c0_i32_1 = arith.constant 0 : i32
    return %c0_i32, %c0_i32_0 : i32, i32
  }
  func.func @transform_3(%arg0: i32, %arg1: i32) -> (i32, i32) {
    %c0_i32 = arith.constant 0 : i32
    %c0_i32_0 = arith.constant 0 : i32
    return %arg0, %c0_i32 : i32, i32
  }
}

module attributes {stable_mosaic.version = 11 : i64} {
  func.func @kernel(%arg0: i32, %arg1: i32, %arg2: memref<256x256xbf16, #tpu.memory_space<vmem>>, %arg3: memref<256x128xbf16, #tpu.memory_space<vmem>>, %arg4: memref<128x128xbf16, #tpu.memory_space<vmem>>, %arg5: memref<128x128xbf16, #tpu.memory_space<vmem>>, %arg6: memref<256x128xf32, #tpu.memory_space<vmem>>, %arg7: memref<256x128xf32, #tpu.memory_space<vmem>>, %arg8: memref<256x128xf32, #tpu.memory_space<vmem>>) attributes {dimension_semantics = [#tpu.dimension_semantics<parallel>, #tpu.dimension_semantics<arbitrary>], iteration_bounds = array<i64: 1, 1>, scalar_prefetch = 0 : i64, scratch_operands = 1 : i64, tpu.core_type = #tpu.core_type<tc>, window_params = [{transform_indices = @transform_0, window_bounds = array<i64: 256, 256>}, {pipeline_mode = #tpu.pipeline_mode<synchronous>, transform_indices = @transform_1, window_bounds = array<i64: 256, 128>}, {pipeline_mode = #tpu.pipeline_mode<synchronous>, transform_indices = @transform_2, window_bounds = array<i64: 128, 128>}, {pipeline_mode = #tpu.pipeline_mode<synchronous>, transform_indices = @transform_3, window_bounds = array<i64: 128, 128>}, {transform_indices = @transform_4, window_bounds = array<i64: 256, 128>}, {transform_indices = @transform_5, window_bounds = array<i64: 256, 128>}]} {
    %c0_i32 = arith.constant 0 : i32
    %0 = arith.cmpi eq, %arg1, %c0_i32 : i32
    %1 = arith.extui %0 : i1 to i32
    %c0_i32_0 = arith.constant 0 : i32
    %2 = arith.cmpi ne, %1, %c0_i32_0 : i32
    scf.if %2 {
      %cst_9 = arith.constant 0.000000e+00 : f32
      %15 = vector.broadcast %cst_9 : f32 to vector<256x128xf32>
      %c0_10 = arith.constant 0 : index
      %c0_11 = arith.constant 0 : index
      %16 = vector.load %arg8[%c0_10, %c0_11] : memref<256x128xf32, #tpu.memory_space<vmem>>, vector<256x128xf32>
      tpu.vector_store %arg8[%c0_10, %c0_11], %15 {strides = array<i32>} : memref<256x128xf32, #tpu.memory_space<vmem>>, vector<256x128xf32>,
    } else {
    }
    %c256_i32 = arith.constant 256 : i32
    %3 = arith.muli %arg1, %c256_i32 : i32
    %4 = tpu.assume_multiple %3, 128 : i32
    %5 = arith.index_cast %4 : i32 to index
    %c0 = arith.constant 0 : index
    %6 = vector.load %arg3[%5, %c0] : memref<256x128xbf16, #tpu.memory_space<vmem>>, vector<256x128xbf16>
    %c0_1 = arith.constant 0 : index
    %c0_2 = arith.constant 0 : index
    %7 = vector.load %arg8[%c0_1, %c0_2] : memref<256x128xf32, #tpu.memory_space<vmem>>, vector<256x128xf32>
    %c0_3 = arith.constant 0 : index
    %c0_4 = arith.constant 0 : index
    %8 = vector.load %arg2[%c0_3, %c0_4] : memref<256x256xbf16, #tpu.memory_space<vmem>>, vector<256x256xbf16>
    %cst = arith.constant dense<0.000000e+00> : vector<256x128xf32>
    %9 = tpu.matmul %8, %6, %cst {dimension_numbers = #tpu.dot_dimension_numbers<[1], [0], [0], [1], [0, 0, 1, 1], [], []>} : vector<256x256xbf16>, vector<256x128xbf16>, vector<256x128xf32> -> vector<256x128xf32>
    %10 = arith.addf %7, %9 : vector<256x128xf32>
    %c0_5 = arith.constant 0 : index
    %c0_6 = arith.constant 0 : index
    %11 = vector.load %arg8[%c0_5, %c0_6] : memref<256x128xf32, #tpu.memory_space<vmem>>, vector<256x128xf32>
    tpu.vector_store %arg8[%c0_5, %c0_6], %10 {strides = array<i32>} : memref<256x128xf32, #tpu.memory_space<vmem>>, vector<256x128xf32>,
    %c0_i32_7 = arith.constant 0 : i32
    %12 = arith.cmpi eq, %arg1, %c0_i32_7 : i32
    %13 = arith.extui %12 : i1 to i32
    %c0_i32_8 = arith.constant 0 : i32
    %14 = arith.cmpi ne, %13, %c0_i32_8 : i32
    scf.if %14 {
      %c0_9 = arith.constant 0 : index
      %c0_10 = arith.constant 0 : index
      %15 = vector.load %arg8[%c0_9, %c0_10] : memref<256x128xf32, #tpu.memory_space<vmem>>, vector<256x128xf32>
      %16 = arith.truncf %15 : vector<256x128xf32> to vector<256x128xbf16>
      %c0_11 = arith.constant 0 : index
      %c0_12 = arith.constant 0 : index
      %17 = vector.load %arg4[%c0_11, %c0_12] : memref<128x128xbf16, #tpu.memory_space<vmem>>, vector<128x128xbf16>
      %cst_13 = arith.constant dense<0.000000e+00> : vector<256x128xf32>
      %18 = tpu.matmul %16, %17, %cst_13 {dimension_numbers = #tpu.dot_dimension_numbers<[1], [0], [0], [1], [0, 0, 1, 1], [], []>} : vector<256x128xbf16>, vector<128x128xbf16>, vector<256x128xf32> -> vector<256x128xf32>
      %cst_14 = arith.constant 0.000000e+00 : f32
      %19 = vector.broadcast %cst_14 : f32 to vector<256x128xf32>
      %20 = arith.maximumf %18, %19 : vector<256x128xf32>
      %c0_15 = arith.constant 0 : index
      %c0_16 = arith.constant 0 : index
      %21 = vector.load %arg5[%c0_15, %c0_16] : memref<128x128xbf16, #tpu.memory_space<vmem>>, vector<128x128xbf16>
      %cst_17 = arith.constant dense<0.000000e+00> : vector<256x128xf32>
      %22 = tpu.matmul %16, %21, %cst_17 {dimension_numbers = #tpu.dot_dimension_numbers<[1], [0], [0], [1], [0, 0, 1, 1], [], []>} : vector<256x128xbf16>, vector<128x128xbf16>, vector<256x128xf32> -> vector<256x128xf32>
      %cst_18 = arith.constant 0.000000e+00 : f32
      %23 = vector.broadcast %cst_18 : f32 to vector<256x128xf32>
      %24 = arith.maximumf %22, %23 : vector<256x128xf32>
      %c0_19 = arith.constant 0 : index
      %c0_20 = arith.constant 0 : index
      %25 = vector.load %arg6[%c0_19, %c0_20] : memref<256x128xf32, #tpu.memory_space<vmem>>, vector<256x128xf32>
      %26 = math.exp %24 : vector<256x128xf32>
      %27 = arith.mulf %25, %26 : vector<256x128xf32>
      %28 = arith.addf %27, %20 : vector<256x128xf32>
      %c0_21 = arith.constant 0 : index
      %c0_22 = arith.constant 0 : index
      %29 = vector.load %arg7[%c0_21, %c0_22] : memref<256x128xf32, #tpu.memory_space<vmem>>, vector<256x128xf32>
      tpu.vector_store %arg7[%c0_21, %c0_22], %28 {strides = array<i32>} : memref<256x128xf32, #tpu.memory_space<vmem>>, vector<256x128xf32>,
    } else {
    }
    return
  }
  func.func @transform_0(%arg0: i32, %arg1: i32) -> (i32, i32) {
    %c0_i32 = arith.constant 0 : i32
    return %arg0, %arg1 : i32, i32
  }
  func.func @transform_1(%arg0: i32, %arg1: i32) -> (i32, i32) {
    %c0_i32 = arith.constant 0 : i32
    %c0_i32_0 = arith.constant 0 : i32
    %c0_i32_1 = arith.constant 0 : i32
    return %c0_i32, %c0_i32_0 : i32, i32
  }
  func.func @transform_2(%arg0: i32, %arg1: i32) -> (i32, i32) {
    %c0_i32 = arith.constant 0 : i32
    %c0_i32_0 = arith.constant 0 : i32
    %c0_i32_1 = arith.constant 0 : i32
    return %c0_i32, %c0_i32_0 : i32, i32
  }
  func.func @transform_3(%arg0: i32, %arg1: i32) -> (i32, i32) {
    %c0_i32 = arith.constant 0 : i32
    %c0_i32_0 = arith.constant 0 : i32
    %c0_i32_1 = arith.constant 0 : i32
    return %c0_i32, %c0_i32_0 : i32, i32
  }
  func.func @transform_4(%arg0: i32, %arg1: i32) -> (i32, i32) {
    %c0_i32 = arith.constant 0 : i32
    %c0_i32_0 = arith.constant 0 : i32
    return %arg0, %c0_i32 : i32, i32
  }
  func.func @transform_5(%arg0: i32, %arg1: i32) -> (i32, i32) {
    %c0_i32 = arith.constant 0 : i32
    %c0_i32_0 = arith.constant 0 : i32
    return %arg0, %c0_i32 : i32, i32
  }
}

module attributes {stable_mosaic.version = 11 : i64} {
  func.func @kernel(%arg0: i32, %arg1: i32, %arg2: memref<256x128xbf16, #tpu.memory_space<vmem>>, %arg3: memref<256x128xbf16, #tpu.memory_space<vmem>>, %arg4: memref<256x256xbf16, #tpu.memory_space<vmem>>) attributes {dimension_semantics = [#tpu.dimension_semantics<parallel>, #tpu.dimension_semantics<parallel>], iteration_bounds = array<i64: 1, 1>, scalar_prefetch = 0 : i64, scratch_operands = 0 : i64, tpu.core_type = #tpu.core_type<tc>, window_params = [{transform_indices = @transform_0, window_bounds = array<i64: 256, 128>}, {pipeline_mode = #tpu.pipeline_mode<synchronous>, transform_indices = @transform_1, window_bounds = array<i64: 256, 128>}, {transform_indices = @transform_2, window_bounds = array<i64: 256, 256>}]} {
    %c256_i32 = arith.constant 256 : i32
    %0 = arith.muli %arg1, %c256_i32 : i32
    %1 = tpu.assume_multiple %0, 128 : i32
    %2 = arith.index_cast %1 : i32 to index
    %c0 = arith.constant 0 : index
    %3 = vector.load %arg3[%2, %c0] : memref<256x128xbf16, #tpu.memory_space<vmem>>, vector<256x128xbf16>
    %c0_0 = arith.constant 0 : index
    %c0_1 = arith.constant 0 : index
    %4 = vector.load %arg2[%c0_0, %c0_1] : memref<256x128xbf16, #tpu.memory_space<vmem>>, vector<256x128xbf16>
    %cst = arith.constant dense<0.000000e+00> : vector<256x256xf32>
    %5 = tpu.matmul %4, %3, %cst {dimension_numbers = #tpu.dot_dimension_numbers<[1], [1], [0], [0], [0, 0, 1, 0], [], []>} : vector<256x128xbf16>, vector<256x128xbf16>, vector<256x256xf32> -> vector<256x256xf32>
    %cst_2 = arith.constant 5.000000e-01 : f32
    %6 = vector.broadcast %cst_2 : f32 to vector<256x256xf32>
    %7 = arith.mulf %6, %5 : vector<256x256xf32>
    %8 = math.tanh %7 : vector<256x256xf32>
    %cst_3 = arith.constant 5.000000e-01 : f32
    %9 = vector.broadcast %cst_3 : f32 to vector<256x256xf32>
    %10 = arith.mulf %9, %8 : vector<256x256xf32>
    %cst_4 = arith.constant 5.000000e-01 : f32
    %11 = vector.broadcast %cst_4 : f32 to vector<256x256xf32>
    %12 = arith.addf %10, %11 : vector<256x256xf32>
    %13 = arith.truncf %12 : vector<256x256xf32> to vector<256x256xbf16>
    %c0_5 = arith.constant 0 : index
    %c0_6 = arith.constant 0 : index
    %14 = vector.load %arg4[%c0_5, %c0_6] : memref<256x256xbf16, #tpu.memory_space<vmem>>, vector<256x256xbf16>
    tpu.vector_store %arg4[%c0_5, %c0_6], %13 {strides = array<i32>} : memref<256x256xbf16, #tpu.memory_space<vmem>>, vector<256x256xbf16>,
    return
  }
  func.func @transform_0(%arg0: i32, %arg1: i32) -> (i32, i32) {
    %c0_i32 = arith.constant 0 : i32
    %c0_i32_0 = arith.constant 0 : i32
    return %arg0, %c0_i32 : i32, i32
  }
  func.func @transform_1(%arg0: i32, %arg1: i32) -> (i32, i32) {
    %c0_i32 = arith.constant 0 : i32
    %c0_i32_0 = arith.constant 0 : i32
    %c0_i32_1 = arith.constant 0 : i32
    return %c0_i32, %c0_i32_0 : i32, i32
  }
  func.func @transform_2(%arg0: i32, %arg1: i32) -> (i32, i32) {
    %c0_i32 = arith.constant 0 : i32
    return %arg0, %arg1 : i32, i32
  }
}

</mosaic_0001>

<llo_original>
// kernel: vgae_forward.5
$region0: #{vgae_forward.5}
  #allocation0 [shape = 'u32[]', space=smem, size = 0x4, offset = 0x4, fixed_abs, tag = 'smem constant byte address 0x4 - core index']
  #allocation1 [shape = 'u32[144,128]{1,0:T(1,128)}', space=vmem, size = 0x12000, scoped, tag = 'internal scratch']
  %s0 = inlined_call_operand.vmem [shape: bf16[256,128], index: 0, kind: input, shape index: {}, may-alias: {0,1}]
  %s1 = inlined_call_operand.vmem [shape: bf16[256,128], index: 1, kind: input, shape index: {}, may-alias: {0,1}]
  %s2 = inlined_call_operand.hbm [shape: bf16[256,256], index: 2, kind: output, shape index: {}]
  %s3 = sld [smem:[#allocation0]]
  $region18: #{vgae_forward.5} parent=0
    _
  %s5 = ssub.s32 1, %s3
  %s6 = scalar_select 0, %s5, %s3
  $region1: #{vgae_forward.5} parent=0
    #allocation2 [shape = 'u8[131072]{0}', space=vmem, size = 0x20000, scoped, tag = 'output window, operand 0, single buffered']
    #allocation3 [shape = 's32[1]{0}', space=sflag, size = 0x4, scoped, tag = 'scoped memory for vgae_forward.5']
    %7 = vsyncpa [#allocation3], 0
    // Predicated region
    $region2: #{vgae_forward.5} parent=1 // pred_check
      _
    $region3: #{vgae_forward.5} parent=1 // pred_check_branch
      %9 = sbr.rel (0) target = $region5
    $region4: #{vgae_forward.5} parent=1 // pred_region
      _
    $region5: #{vgae_forward.5} parent=1 // pred_fallthru
      _
    // Predicated region
    $region6: #{vgae_forward.5} parent=1 // pred_check
      _
    $region7: #{vgae_forward.5} parent=1 // pred_check_branch
      %11 = sbr.rel (0) target = $region9
    $region8: #{vgae_forward.5} parent=1 // pred_region
      _
    $region9: #{vgae_forward.5} parent=1 // pred_fallthru
      _
    %s13 = smul.u32 0, 256
    %s14 = sshra.s32 %s13, 3
    %s15 = sand.u32 %s13, 7
    %s16 = smul.addr %s14, 4
    %s17 = scalar_lea.vmem %s1, %s16
    %v18 = vld [vmem:[%s17] sm:$0xf]
    %v19 = vld [vmem:[%s17 + $0x4] sm:$0xf]
    %v20 = vld [vmem:[%s17 + $0x8] sm:$0xf]
    %v21 = vld [vmem:[%s17 + $0xc] sm:$0xf]
    %v22 = vld [vmem:[%s17 + $0x10] sm:$0xf]
    %v23 = vld [vmem:[%s17 + $0x14] sm:$0xf]
    %v24 = vld [vmem:[%s17 + $0x18] sm:$0xf]
    %v25 = vld [vmem:[%s17 + $0x1c] sm:$0xf]
    %v26 = vld [vmem:[%s17 + $0x20] sm:$0xf]
    %v27 = vld [vmem:[%s17 + $0x24] sm:$0xf]
    %v28 = vld [vmem:[%s17 + $0x28] sm:$0xf]
    %v29 = vld [vmem:[%s17 + $0x2c] sm:$0xf]
    %v30 = vld [vmem:[%s17 + $0x30] sm:$0xf]
    %v31 = vld [vmem:[%s17 + $0x34] sm:$0xf]
    %v32 = vld [vmem:[%s17 + $0x38] sm:$0xf]
    %v33 = vld [vmem:[%s17 + $0x3c] sm:$0xf]
    %v34 = vld [vmem:[%s17 + $0x40] sm:$0xf]
    %v35 = vld [vmem:[%s17 + $0x44] sm:$0xf]
    %v36 = vld [vmem:[%s17 + $0x48] sm:$0xf]
    %v37 = vld [vmem:[%s17 + $0x4c] sm:$0xf]
    %v38 = vld [vmem:[%s17 + $0x50] sm:$0xf]
    %v39 = vld [vmem:[%s17 + $0x54] sm:$0xf]
    %v40 = vld [vmem:[%s17 + $0x58] sm:$0xf]
    %v41 = vld [vmem:[%s17 + $0x5c] sm:$0xf]
    %v42 = vld [vmem:[%s17 + $0x60] sm:$0xf]
    %v43 = vld [vmem:[%s17 + $0x64] sm:$0xf]
    %v44 = vld [vmem:[%s17 + $0x68] sm:$0xf]
    %v45 = vld [vmem:[%s17 + $0x6c] sm:$0xf]
    %v46 = vld [vmem:[%s17 + $0x70] sm:$0xf]
    %v47 = vld [vmem:[%s17 + $0x74] sm:$0xf]
    %v48 = vld [vmem:[%s17 + $0x78] sm:$0xf]
    %v49 = vld [vmem:[%s17 + $0x7c] sm:$0xf]
    %v50 = vld [vmem:[%s0] sm:$0xf]
    %v51 = vld [vmem:[%s0 + $0x4] sm:$0xf]
    %v52 = vld [vmem:[%s0 + $0x8] sm:$0xf]
    %v53 = vld [vmem:[%s0 + $0xc] sm:$0xf]
    %v54 = vld [vmem:[%s0 + $0x10] sm:$0xf]
    %v55 = vld [vmem:[%s0 + $0x14] sm:$0xf]
    %v56 = vld [vmem:[%s0 + $0x18] sm:$0xf]
    %v57 = vld [vmem:[%s0 + $0x1c] sm:$0xf]
    %v58 = vld [vmem:[%s0 + $0x20] sm:$0xf]
    %v59 = vld [vmem:[%s0 + $0x24] sm:$0xf]
    %v60 = vld [vmem:[%s0 + $0x28] sm:$0xf]
    %v61 = vld [vmem:[%s0 + $0x2c] sm:$0xf]
    %v62 = vld [vmem:[%s0 + $0x30] sm:$0xf]
    %v63 = vld [vmem:[%s0 + $0x34] sm:$0xf]
    %v64 = vld [vmem:[%s0 + $0x38] sm:$0xf]
    %v65 = vld [vmem:[%s0 + $0x3c] sm:$0xf]
    %v66 = vld [vmem:[%s0 + $0x40] sm:$0xf]
    %v67 = vld [vmem:[%s0 + $0x44] sm:$0xf]
    %v68 = vld [vmem:[%s0 + $0x48] sm:$0xf]
    %v69 = vld [vmem:[%s0 + $0x4c] sm:$0xf]
    %v70 = vld [vmem:[%s0 + $0x50] sm:$0xf]
    %v71 = vld [vmem:[%s0 + $0x54] sm:$0xf]
    %v72 = vld [vmem:[%s0 + $0x58] sm:$0xf]
    %v73 = vld [vmem:[%s0 + $0x5c] sm:$0xf]
    %v74 = vld [vmem:[%s0 + $0x60] sm:$0xf]
    %v75 = vld [vmem:[%s0 + $0x64] sm:$0xf]
    %v76 = vld [vmem:[%s0 + $0x68] sm:$0xf]
    %v77 = vld [vmem:[%s0 + $0x6c] sm:$0xf]
    %v78 = vld [vmem:[%s0 + $0x70] sm:$0xf]
    %v79 = vld [vmem:[%s0 + $0x74] sm:$0xf]
    %v80 = vld [vmem:[%s0 + $0x78] sm:$0xf]
    %v81 = vld [vmem:[%s0 + $0x7c] sm:$0xf]
    %v114 = vunpack.c.l.b16 %v50
    %v115 = vunpack.c.l.b16 %v51
    %v116 = vunpack.c.l.b16 %v52
    %v117 = vunpack.c.l.b16 %v53
    %v118 = vunpack.c.l.b16 %v54
    %v119 = vunpack.c.l.b16 %v55
    %v120 = vunpack.c.l.b16 %v56
    %v121 = vunpack.c.l.b16 %v57
    %v122 = vunpack.c.l.b16 %v58
    %v123 = vunpack.c.l.b16 %v59
    %v124 = vunpack.c.l.b16 %v60
    %v125 = vunpack.c.l.b16 %v61
    %v126 = vunpack.c.l.b16 %v62
    %v127 = vunpack.c.l.b16 %v63
    %v128 = vunpack.c.l.b16 %v64
    %v129 = vunpack.c.l.b16 %v65
    %v130 = vunpack.c.l.b16 %v66
    %v131 = vunpack.c.l.b16 %v67
    %v132 = vunpack.c.l.b16 %v68
    %v133 = vunpack.c.l.b16 %v69
    %v134 = vunpack.c.l.b16 %v70
    %v135 = vunpack.c.l.b16 %v71
    %v136 = vunpack.c.l.b16 %v72
    %v137 = vunpack.c.l.b16 %v73
    %v138 = vunpack.c.l.b16 %v74
    %v139 = vunpack.c.l.b16 %v75
    %v140 = vunpack.c.l.b16 %v76
    %v141 = vunpack.c.l.b16 %v77
    %v142 = vunpack.c.l.b16 %v78
    %v143 = vunpack.c.l.b16 %v79
    %v144 = vunpack.c.l.b16 %v80
    %v145 = vunpack.c.l.b16 %v81
    %v146 = vpack.c.b16 %v115, %v114
    %v147 = vpack.c.b16 %v117, %v116
    %v148 = vpack.c.b16 %v119, %v118
    %v149 = vpack.c.b16 %v121, %v120
    %v150 = vpack.c.b16 %v123, %v122
    %v151 = vpack.c.b16 %v125, %v124
    %v152 = vpack.c.b16 %v127, %v126
    %v153 = vpack.c.b16 %v129, %v128
    %v154 = vpack.c.b16 %v131, %v130
    %v155 = vpack.c.b16 %v133, %v132
    %v156 = vpack.c.b16 %v135, %v134
    %v157 = vpack.c.b16 %v137, %v136
    %v158 = vpack.c.b16 %v139, %v138
    %v159 = vpack.c.b16 %v141, %v140
    %v160 = vpack.c.b16 %v143, %v142
    %v161 = vpack.c.b16 %v145, %v144
    %v210 = vunpack.c.l.b16 %v18
    %v211 = vunpack.c.l.b16 %v19
    %v212 = vunpack.c.l.b16 %v20
    %v213 = vunpack.c.l.b16 %v21
    %v214 = vunpack.c.l.b16 %v22
    %v215 = vunpack.c.l.b16 %v23
    %v216 = vunpack.c.l.b16 %v24
    %v217 = vunpack.c.l.b16 %v25
    %v218 = vunpack.c.l.b16 %v26
    %v219 = vunpack.c.l.b16 %v27
    %v220 = vunpack.c.l.b16 %v28
    %v221 = vunpack.c.l.b16 %v29
    %v222 = vunpack.c.l.b16 %v30
    %v223 = vunpack.c.l.b16 %v31
    %v224 = vunpack.c.l.b16 %v32
    %v225 = vunpack.c.l.b16 %v33
    %v226 = vunpack.c.l.b16 %v34
    %v227 = vunpack.c.l.b16 %v35
    %v228 = vunpack.c.l.b16 %v36
    %v229 = vunpack.c.l.b16 %v37
    %v230 = vunpack.c.l.b16 %v38
    %v231 = vunpack.c.l.b16 %v39
    %v232 = vunpack.c.l.b16 %v40
    %v233 = vunpack.c.l.b16 %v41
    %v234 = vunpack.c.l.b16 %v42
    %v235 = vunpack.c.l.b16 %v43
    %v236 = vunpack.c.l.b16 %v44
    %v237 = vunpack.c.l.b16 %v45
    %v238 = vunpack.c.l.b16 %v46
    %v239 = vunpack.c.l.b16 %v47
    %v240 = vunpack.c.l.b16 %v48
    %v241 = vunpack.c.l.b16 %v49
    %v242 = vpack.c.b16 %v211, %v210
    %v243 = vpack.c.b16 %v213, %v212
    %v244 = vpack.c.b16 %v215, %v214
    %v245 = vpack.c.b16 %v217, %v216
    %v246 = vpack.c.b16 %v219, %v218
    %v247 = vpack.c.b16 %v221, %v220
    %v248 = vpack.c.b16 %v223, %v222
    %v249 = vpack.c.b16 %v225, %v224
    %v250 = vpack.c.b16 %v227, %v226
    %v251 = vpack.c.b16 %v229, %v228
    %v252 = vpack.c.b16 %v231, %v230
    %v253 = vpack.c.b16 %v233, %v232
    %v254 = vpack.c.b16 %v235, %v234
    %v255 = vpack.c.b16 %v237, %v236
    %v256 = vpack.c.b16 %v239, %v238
    %v257 = vpack.c.b16 %v241, %v240
    %274 = vmatprep.subr.bf16.mxu0 0
    %275 = vmatpush1.bf16.xpose.msra.mxu0 %v249
    %276 = vmatprep.subr.bf16.mxu0 0
    %277 = vmatpush1.bf16.xpose.msra.mxu0 %v248
    %278 = vmatprep.subr.bf16.mxu0 0
    %279 = vmatpush1.bf16.xpose.msra.mxu0 %v247
    %280 = vmatprep.subr.bf16.mxu0 0
    %281 = vmatpush1.bf16.xpose.msra.mxu0 %v246
    %282 = vmatprep.subr.bf16.mxu0 0
    %283 = vmatpush1.bf16.xpose.msra.mxu0 %v245
    %284 = vmatprep.subr.bf16.mxu0 0
    %285 = vmatpush1.bf16.xpose.msra.mxu0 %v244
    %286 = vmatprep.subr.bf16.mxu0 0
    %287 = vmatpush1.bf16.xpose.msra.mxu0 %v243
    %288 = vmatprep.subr.bf16.mxu0 0
    %289 = vmatpush1.bf16.xpose.msra.mxu0 %v242
    %290 = vmatprep.subr.bf16.mxu0 0
    %291 = vmatpush2.bf16.xpose.msra.mxu0 %v257
    %292 = vmatprep.subr.bf16.mxu0 0
    %293 = vmatpush2.bf16.xpose.msra.mxu0 %v256
    %294 = vmatprep.subr.bf16.mxu0 0
    %295 = vmatpush2.bf16.xpose.msra.mxu0 %v255
    %296 = vmatprep.subr.bf16.mxu0 0
    %297 = vmatpush2.bf16.xpose.msra.mxu0 %v254
    %298 = vmatprep.subr.bf16.mxu0 0
    %299 = vmatpush2.bf16.xpose.msra.mxu0 %v253
    %300 = vmatprep.subr.bf16.mxu0 0
    %301 = vmatpush2.bf16.xpose.msra.mxu0 %v252
    %302 = vmatprep.subr.bf16.mxu0 0
    %303 = vmatpush2.bf16.xpose.msra.mxu0 %v251
    %304 = vmatprep.subr.bf16.mxu0 0
    %305 = vmatpush2.bf16.xpose.msra.mxu0 %v250
    %306 = vmatprep.mubr.bf16.mxu0 0
    %307 = vmatmul.mubr.bf16.gmra.mxu0 %v146
    %v308 = vpop.f32.mrf.mxu0
    %v309 = vadd.f32 0.0, %v308
    %v310 = vpop.f32.mrf.mxu0
    %v311 = vadd.f32 0.0, %v310
    %v312 = vpop.f32.mrf.mxu0
    %v313 = vadd.f32 0.0, %v312
    %v314 = vpop.f32.mrf.mxu0
    %v315 = vadd.f32 0.0, %v314
    %316 = vmatprep.mubr.bf16.mxu0 0
    %317 = vmatmul.mubr.bf16.gmra.mxu0 %v147
    %v318 = vpop.f32.mrf.mxu0
    %v319 = vadd.f32 0.0, %v318
    %v320 = vpop.f32.mrf.mxu0
    %v321 = vadd.f32 0.0, %v320
    %v322 = vpop.f32.mrf.mxu0
    %v323 = vadd.f32 0.0, %v322
    %v324 = vpop.f32.mrf.mxu0
    %v325 = vadd.f32 0.0, %v324
    %326 = vmatprep.mubr.bf16.mxu0 0
    %327 = vmatmul.mubr.bf16.gmra.mxu0 %v148
    %v328 = vpop.f32.mrf.mxu0
    %v329 = vadd.f32 0.0, %v328
    %v330 = vpop.f32.mrf.mxu0
    %v331 = vadd.f32 0.0, %v330
    %v332 = vpop.f32.mrf.mxu0
    %v333 = vadd.f32 0.0, %v332
    %v334 = vpop.f32.mrf.mxu0
    %v335 = vadd.f32 0.0, %v334
    %336 = vmatprep.mubr.bf16.mxu0 0
    %337 = vmatmul.mubr.bf16.gmra.mxu0 %v149
    %v338 = vpop.f32.mrf.mxu0
    %v339 = vadd.f32 0.0, %v338
    %v340 = vpop.f32.mrf.mxu0
    %v341 = vadd.f32 0.0, %v340
    %v342 = vpop.f32.mrf.mxu0
    %v343 = vadd.f32 0.0, %v342
    %v344 = vpop.f32.mrf.mxu0
    %v345 = vadd.f32 0.0, %v344
    %346 = vmatprep.mubr.bf16.mxu0 0
    %347 = vmatmul.mubr.bf16.gmra.mxu0 %v150
    %v348 = vpop.f32.mrf.mxu0
    %v349 = vadd.f32 0.0, %v348
    %v350 = vpop.f32.mrf.mxu0
    %v351 = vadd.f32 0.0, %v350
    %v352 = vpop.f32.mrf.mxu0
    %v353 = vadd.f32 0.0, %v352
    %v354 = vpop.f32.mrf.mxu0
    %v355 = vadd.f32 0.0, %v354
    %356 = vmatprep.mubr.bf16.mxu0 0
    %357 = vmatmul.mubr.bf16.gmra.mxu0 %v151
    %v358 = vpop.f32.mrf.mxu0
    %v359 = vadd.f32 0.0, %v358
    %v360 = vpop.f32.mrf.mxu0
    %v361 = vadd.f32 0.0, %v360
    %v362 = vpop.f32.mrf.mxu0
    %v363 = vadd.f32 0.0, %v362
    %v364 = vpop.f32.mrf.mxu0
    %v365 = vadd.f32 0.0, %v364
    %366 = vmatprep.mubr.bf16.mxu0 0
    %367 = vmatmul.mubr.bf16.gmra.mxu0 %v152
    %v368 = vpop.f32.mrf.mxu0
    %v369 = vadd.f32 0.0, %v368
    %v370 = vpop.f32.mrf.mxu0
    %v371 = vadd.f32 0.0, %v370
    %v372 = vpop.f32.mrf.mxu0
    %v373 = vadd.f32 0.0, %v372
    %v374 = vpop.f32.mrf.mxu0
    %v375 = vadd.f32 0.0, %v374
    %376 = vmatprep.mubr.bf16.mxu0 0
    %377 = vmatmul.mubr.bf16.gmra.mxu0 %v153
    %v378 = vpop.f32.mrf.mxu0
    %v379 = vadd.f32 0.0, %v378
    %v380 = vpop.f32.mrf.mxu0
    %v381 = vadd.f32 0.0, %v380
    %v382 = vpop.f32.mrf.mxu0
    %v383 = vadd.f32 0.0, %v382
    %v384 = vpop.f32.mrf.mxu0
    %v385 = vadd.f32 0.0, %v384
    %386 = vmatprep.mubr.bf16.mxu0 0
    %387 = vmatmul.mubr.bf16.gmra.mxu0 %v154
    %v388 = vpop.f32.mrf.mxu0
    %v389 = vadd.f32 0.0, %v388
    %v390 = vpop.f32.mrf.mxu0
    %v391 = vadd.f32 0.0, %v390
    %v392 = vpop.f32.mrf.mxu0
    %v393 = vadd.f32 0.0, %v392
    %v394 = vpop.f32.mrf.mxu0
    %v395 = vadd.f32 0.0, %v394
    %396 = vmatprep.mubr.bf16.mxu0 0
    %397 = vmatmul.mubr.bf16.gmra.mxu0 %v155
    %v398 = vpop.f32.mrf.mxu0
    %v399 = vadd.f32 0.0, %v398
    %v400 = vpop.f32.mrf.mxu0
    %v401 = vadd.f32 0.0, %v400
    %v402 = vpop.f32.mrf.mxu0
    %v403 = vadd.f32 0.0, %v402
    %v404 = vpop.f32.mrf.mxu0
    %v405 = vadd.f32 0.0, %v404
    %406 = vmatprep.mubr.bf16.mxu0 0
    %407 = vmatmul.mubr.bf16.gmra.mxu0 %v156
    %v408 = vpop.f32.mrf.mxu0
    %v409 = vadd.f32 0.0, %v408
    %v410 = vpop.f32.mrf.mxu0
    %v411 = vadd.f32 0.0, %v410
    %v412 = vpop.f32.mrf.mxu0
    %v413 = vadd.f32 0.0, %v412
    %v414 = vpop.f32.mrf.mxu0
    %v415 = vadd.f32 0.0, %v414
    %416 = vmatprep.mubr.bf16.mxu0 0
    %417 = vmatmul.mubr.bf16.gmra.mxu0 %v157
    %v418 = vpop.f32.mrf.mxu0
    %v419 = vadd.f32 0.0, %v418
    %v420 = vpop.f32.mrf.mxu0
    %v421 = vadd.f32 0.0, %v420
    %v422 = vpop.f32.mrf.mxu0
    %v423 = vadd.f32 0.0, %v422
    %v424 = vpop.f32.mrf.mxu0
    %v425 = vadd.f32 0.0, %v424
    %426 = vmatprep.mubr.bf16.mxu0 0
    %427 = vmatmul.mubr.bf16.gmra.mxu0 %v158
    %v428 = vpop.f32.mrf.mxu0
    %v429 = vadd.f32 0.0, %v428
    %v430 = vpop.f32.mrf.mxu0
    %v431 = vadd.f32 0.0, %v430
    %v432 = vpop.f32.mrf.mxu0
    %v433 = vadd.f32 0.0, %v432
    %v434 = vpop.f32.mrf.mxu0
    %v435 = vadd.f32 0.0, %v434
    %436 = vmatprep.mubr.bf16.mxu0 0
    %437 = vmatmul.mubr.bf16.gmra.mxu0 %v159
    %v438 = vpop.f32.mrf.mxu0
    %v439 = vadd.f32 0.0, %v438
    %v440 = vpop.f32.mrf.mxu0
    %v441 = vadd.f32 0.0, %v440
    %v442 = vpop.f32.mrf.mxu0
    %v443 = vadd.f32 0.0, %v442
    %v444 = vpop.f32.mrf.mxu0
    %v445 = vadd.f32 0.0, %v444
    %446 = vmatprep.mubr.bf16.mxu0 0
    %447 = vmatmul.mubr.bf16.gmra.mxu0 %v160
    %v448 = vpop.f32.mrf.mxu0
    %v449 = vadd.f32 0.0, %v448
    %v450 = vpop.f32.mrf.mxu0
    %v451 = vadd.f32 0.0, %v450
    %v452 = vpop.f32.mrf.mxu0
    %v453 = vadd.f32 0.0, %v452
    %v454 = vpop.f32.mrf.mxu0
    %v455 = vadd.f32 0.0, %v454
    %456 = vmatprep.mubr.bf16.mxu0 0
    %457 = vmatmul.mubr.bf16.gmra.mxu0 %v161
    %v458 = vpop.f32.mrf.mxu0
    %v459 = vadd.f32 0.0, %v458
    %v460 = vpop.f32.mrf.mxu0
    %v461 = vadd.f32 0.0, %v460
    %v462 = vpop.f32.mrf.mxu0
    %v463 = vadd.f32 0.0, %v462
    %v464 = vpop.f32.mrf.mxu0
    %v465 = vadd.f32 0.0, %v464
    %466 = vdwg.mxu0
    %v467 = vmul.f32 %v309, 0.5
    %v468 = vmul.f32 %v311, 0.5
    %v469 = vmul.f32 %v313, 0.5
    %v470 = vmul.f32 %v315, 0.5
    %v471 = vmul.f32 %v319, 0.5
    %v472 = vmul.f32 %v321, 0.5
    %v473 = vmul.f32 %v323, 0.5
    %v474 = vmul.f32 %v325, 0.5
    %v475 = vmul.f32 %v329, 0.5
    %v476 = vmul.f32 %v331, 0.5
    %v477 = vmul.f32 %v333, 0.5
    %v478 = vmul.f32 %v335, 0.5
    %v479 = vmul.f32 %v339, 0.5
    %v480 = vmul.f32 %v341, 0.5
    %v481 = vmul.f32 %v343, 0.5
    %v482 = vmul.f32 %v345, 0.5
    %v483 = vmul.f32 %v349, 0.5
    %v484 = vmul.f32 %v351, 0.5
    %v485 = vmul.f32 %v353, 0.5
    %v486 = vmul.f32 %v355, 0.5
    %v487 = vmul.f32 %v359, 0.5
    %v488 = vmul.f32 %v361, 0.5
    %v489 = vmul.f32 %v363, 0.5
    %v490 = vmul.f32 %v365, 0.5
    %v491 = vmul.f32 %v369, 0.5
    %v492 = vmul.f32 %v371, 0.5
    %v493 = vmul.f32 %v373, 0.5
    %v494 = vmul.f32 %v375, 0.5
    %v495 = vmul.f32 %v379, 0.5
    %v496 = vmul.f32 %v381, 0.5
    %v497 = vmul.f32 %v383, 0.5
    %v498 = vmul.f32 %v385, 0.5
    %v499 = vmul.f32 %v389, 0.5
    %v500 = vmul.f32 %v391, 0.5
    %v501 = vmul.f32 %v393, 0.5
    %v502 = vmul.f32 %v395, 0.5
    %v503 = vmul.f32 %v399, 0.5
    %v504 = vmul.f32 %v401, 0.5
    %v505 = vmul.f32 %v403, 0.5
    %v506 = vmul.f32 %v405, 0.5
    %v507 = vmul.f32 %v409, 0.5
    %v508 = vmul.f32 %v411, 0.5
    %v509 = vmul.f32 %v413, 0.5
    %v510 = vmul.f32 %v415, 0.5
    %v511 = vmul.f32 %v419, 0.5
    %v512 = vmul.f32 %v421, 0.5
    %v513 = vmul.f32 %v423, 0.5
    %v514 = vmul.f32 %v425, 0.5
    %v515 = vmul.f32 %v429, 0.5
    %v516 = vmul.f32 %v431, 0.5
    %v517 = vmul.f32 %v433, 0.5
    %v518 = vmul.f32 %v435, 0.5
    %v519 = vmul.f32 %v439, 0.5
    %v520 = vmul.f32 %v441, 0.5
    %v521 = vmul.f32 %v443, 0.5
    %v522 = vmul.f32 %v445, 0.5
    %v523 = vmul.f32 %v449, 0.5
    %v524 = vmul.f32 %v451, 0.5
    %v525 = vmul.f32 %v453, 0.5
    %v526 = vmul.f32 %v455, 0.5
    %v527 = vmul.f32 %v459, 0.5
    %v528 = vmul.f32 %v461, 0.5
    %v529 = vmul.f32 %v463, 0.5
    %v530 = vmul.f32 %v465, 0.5
    %v531 = vtanh.pop %v467
    %v532 = vtanh.pop %v468
    %v533 = vtanh.pop %v469
    %v534 = vtanh.pop %v470
    %v535 = vtanh.pop %v471
    %v536 = vtanh.pop %v472
    %v537 = vtanh.pop %v473
    %v538 = vtanh.pop %v474
    %v539 = vtanh.pop %v475
    %v540 = vtanh.pop %v476
    %v541 = vtanh.pop %v477
    %v542 = vtanh.pop %v478
    %v543 = vtanh.pop %v479
    %v544 = vtanh.pop %v480
    %v545 = vtanh.pop %v481
    %v546 = vtanh.pop %v482
    %v547 = vtanh.pop %v483
    %v548 = vtanh.pop %v484
    %v549 = vtanh.pop %v485
    %v550 = vtanh.pop %v486
    %v551 = vtanh.pop %v487
    %v552 = vtanh.pop %v488
    %v553 = vtanh.pop %v489
    %v554 = vtanh.pop %v490
    %v555 = vtanh.pop %v491
    %v556 = vtanh.pop %v492
    %v557 = vtanh.pop %v493
    %v558 = vtanh.pop %v494
    %v559 = vtanh.pop %v495
    %v560 = vtanh.pop %v496
    %v561 = vtanh.pop %v497
    %v562 = vtanh.pop %v498
    %v563 = vtanh.pop %v499
    %v564 = vtanh.pop %v500
    %v565 = vtanh.pop %v501
    %v566 = vtanh.pop %v502
    %v567 = vtanh.pop %v503
    %v568 = vtanh.pop %v504
    %v569 = vtanh.pop %v505
    %v570 = vtanh.pop %v506
    %v571 = vtanh.pop %v507
    %v572 = vtanh.pop %v508
    %v573 = vtanh.pop %v509
    %v574 = vtanh.pop %v510
    %v575 = vtanh.pop %v511
    %v576 = vtanh.pop %v512
    %v577 = vtanh.pop %v513
    %v578 = vtanh.pop %v514
    %v579 = vtanh.pop %v515
    %v580 = vtanh.pop %v516
    %v581 = vtanh.pop %v517
    %v582 = vtanh.pop %v518
    %v583 = vtanh.pop %v519
    %v584 = vtanh.pop %v520
    %v585 = vtanh.pop %v521
    %v586 = vtanh.pop %v522
    %v587 = vtanh.pop %v523
    %v588 = vtanh.pop %v524
    %v589 = vtanh.pop %v525
    %v590 = vtanh.pop %v526
    %v591 = vtanh.pop %v527
    %v592 = vtanh.pop %v528
    %v593 = vtanh.pop %v529
    %v594 = vtanh.pop %v530
    %v595 = vmul.f32 %v531, 0.5
    %v596 = vmul.f32 %v532, 0.5
    %v597 = vmul.f32 %v533, 0.5
    %v598 = vmul.f32 %v534, 0.5
    %v599 = vmul.f32 %v535, 0.5
    %v600 = vmul.f32 %v536, 0.5
    %v601 = vmul.f32 %v537, 0.5
    %v602 = vmul.f32 %v538, 0.5
    %v603 = vmul.f32 %v539, 0.5
    %v604 = vmul.f32 %v540, 0.5
    %v605 = vmul.f32 %v541, 0.5
    %v606 = vmul.f32 %v542, 0.5
    %v607 = vmul.f32 %v543, 0.5
    %v608 = vmul.f32 %v544, 0.5
    %v609 = vmul.f32 %v545, 0.5
    %v610 = vmul.f32 %v546, 0.5
    %v611 = vmul.f32 %v547, 0.5
    %v612 = vmul.f32 %v548, 0.5
    %v613 = vmul.f32 %v549, 0.5
    %v614 = vmul.f32 %v550, 0.5
    %v615 = vmul.f32 %v551, 0.5
    %v616 = vmul.f32 %v552, 0.5
    %v617 = vmul.f32 %v553, 0.5
    %v618 = vmul.f32 %v554, 0.5
    %v619 = vmul.f32 %v555, 0.5
    %v620 = vmul.f32 %v556, 0.5
    %v621 = vmul.f32 %v557, 0.5
    %v622 = vmul.f32 %v558, 0.5
    %v623 = vmul.f32 %v559, 0.5
    %v624 = vmul.f32 %v560, 0.5
    %v625 = vmul.f32 %v561, 0.5
    %v626 = vmul.f32 %v562, 0.5
    %v627 = vmul.f32 %v563, 0.5
    %v628 = vmul.f32 %v564, 0.5
    %v629 = vmul.f32 %v565, 0.5
    %v630 = vmul.f32 %v566, 0.5
    %v631 = vmul.f32 %v567, 0.5
    %v632 = vmul.f32 %v568, 0.5
    %v633 = vmul.f32 %v569, 0.5
    %v634 = vmul.f32 %v570, 0.5
    %v635 = vmul.f32 %v571, 0.5
    %v636 = vmul.f32 %v572, 0.5
    %v637 = vmul.f32 %v573, 0.5
    %v638 = vmul.f32 %v574, 0.5
    %v639 = vmul.f32 %v575, 0.5
    %v640 = vmul.f32 %v576, 0.5
    %v641 = vmul.f32 %v577, 0.5
    %v642 = vmul.f32 %v578, 0.5
    %v643 = vmul.f32 %v579, 0.5
    %v644 = vmul.f32 %v580, 0.5
    %v645 = vmul.f32 %v581, 0.5
    %v646 = vmul.f32 %v582, 0.5
    %v647 = vmul.f32 %v583, 0.5
    %v648 = vmul.f32 %v584, 0.5
    %v649 = vmul.f32 %v585, 0.5
    %v650 = vmul.f32 %v586, 0.5
    %v651 = vmul.f32 %v587, 0.5
    %v652 = vmul.f32 %v588, 0.5
    %v653 = vmul.f32 %v589, 0.5
    %v654 = vmul.f32 %v590, 0.5
    %v655 = vmul.f32 %v591, 0.5
    %v656 = vmul.f32 %v592, 0.5
    %v657 = vmul.f32 %v593, 0.5
    %v658 = vmul.f32 %v594, 0.5
    %v659 = vadd.f32 %v595, 0.5
    %v660 = vadd.f32 %v596, 0.5
    %v661 = vadd.f32 %v597, 0.5
    %v662 = vadd.f32 %v598, 0.5
    %v663 = vadd.f32 %v599, 0.5
    %v664 = vadd.f32 %v600, 0.5
    %v665 = vadd.f32 %v601, 0.5
    %v666 = vadd.f32 %v602, 0.5
    %v667 = vadd.f32 %v603, 0.5
    %v668 = vadd.f32 %v604, 0.5
    %v669 = vadd.f32 %v605, 0.5
    %v670 = vadd.f32 %v606, 0.5
    %v671 = vadd.f32 %v607, 0.5
    %v672 = vadd.f32 %v608, 0.5
    %v673 = vadd.f32 %v609, 0.5
    %v674 = vadd.f32 %v610, 0.5
    %v675 = vadd.f32 %v611, 0.5
    %v676 = vadd.f32 %v612, 0.5
    %v677 = vadd.f32 %v613, 0.5
    %v678 = vadd.f32 %v614, 0.5
    %v679 = vadd.f32 %v615, 0.5
    %v680 = vadd.f32 %v616, 0.5
    %v681 = vadd.f32 %v617, 0.5
    %v682 = vadd.f32 %v618, 0.5
    %v683 = vadd.f32 %v619, 0.5
    %v684 = vadd.f32 %v620, 0.5
    %v685 = vadd.f32 %v621, 0.5
    %v686 = vadd.f32 %v622, 0.5
    %v687 = vadd.f32 %v623, 0.5
    %v688 = vadd.f32 %v624, 0.5
    %v689 = vadd.f32 %v625, 0.5
    %v690 = vadd.f32 %v626, 0.5
    %v691 = vadd.f32 %v627, 0.5
    %v692 = vadd.f32 %v628, 0.5
    %v693 = vadd.f32 %v629, 0.5
    %v694 = vadd.f32 %v630, 0.5
    %v695 = vadd.f32 %v631, 0.5
    %v696 = vadd.f32 %v632, 0.5
    %v697 = vadd.f32 %v633, 0.5
    %v698 = vadd.f32 %v634, 0.5
    %v699 = vadd.f32 %v635, 0.5
    %v700 = vadd.f32 %v636, 0.5
    %v701 = vadd.f32 %v637, 0.5
    %v702 = vadd.f32 %v638, 0.5
    %v703 = vadd.f32 %v639, 0.5
    %v704 = vadd.f32 %v640, 0.5
    %v705 = vadd.f32 %v641, 0.5
    %v706 = vadd.f32 %v642, 0.5
    %v707 = vadd.f32 %v643, 0.5
    %v708 = vadd.f32 %v644, 0.5
    %v709 = vadd.f32 %v645, 0.5
    %v710 = vadd.f32 %v646, 0.5
    %v711 = vadd.f32 %v647, 0.5
    %v712 = vadd.f32 %v648, 0.5
    %v713 = vadd.f32 %v649, 0.5
    %v714 = vadd.f32 %v650, 0.5
    %v715 = vadd.f32 %v651, 0.5
    %v716 = vadd.f32 %v652, 0.5
    %v717 = vadd.f32 %v653, 0.5
    %v718 = vadd.f32 %v654, 0.5
    %v719 = vadd.f32 %v655, 0.5
    %v720 = vadd.f32 %v656, 0.5
    %v721 = vadd.f32 %v657, 0.5
    %v722 = vadd.f32 %v658, 0.5
    %v723 = vpack.c.bf16 %v661, %v659
    %v724 = vpack.c.bf16 %v662, %v660
    %v725 = vpack.c.bf16 %v665, %v663
    %v726 = vpack.c.bf16 %v666, %v664
    %v727 = vpack.c.bf16 %v669, %v667
    %v728 = vpack.c.bf16 %v670, %v668
    %v729 = vpack.c.bf16 %v673, %v671
    %v730 = vpack.c.bf16 %v674, %v672
    %v731 = vpack.c.bf16 %v677, %v675
    %v732 = vpack.c.bf16 %v678, %v676
    %v733 = vpack.c.bf16 %v681, %v679
    %v734 = vpack.c.bf16 %v682, %v680
    %v735 = vpack.c.bf16 %v685, %v683
    %v736 = vpack.c.bf16 %v686, %v684
    %v737 = vpack.c.bf16 %v689, %v687
    %v738 = vpack.c.bf16 %v690, %v688
    %v739 = vpack.c.bf16 %v693, %v691
    %v740 = vpack.c.bf16 %v694, %v692
    %v741 = vpack.c.bf16 %v697, %v695
    %v742 = vpack.c.bf16 %v698, %v696
    %v743 = vpack.c.bf16 %v701, %v699
    %v744 = vpack.c.bf16 %v702, %v700
    %v745 = vpack.c.bf16 %v705, %v703
    %v746 = vpack.c.bf16 %v706, %v704
    %v747 = vpack.c.bf16 %v709, %v707
    %v748 = vpack.c.bf16 %v710, %v708
    %v749 = vpack.c.bf16 %v713, %v711
    %v750 = vpack.c.bf16 %v714, %v712
    %v751 = vpack.c.bf16 %v717, %v715
    %v752 = vpack.c.bf16 %v718, %v716
    %v753 = vpack.c.bf16 %v721, %v719
    %v754 = vpack.c.bf16 %v722, %v720
    %v787 = vunpack.c.l.b16 %v723
    %v788 = vunpack.c.l.b16 %v724
    %v789 = vunpack.c.h.b16 %v723
    %v790 = vunpack.c.h.b16 %v724
    %v791 = vunpack.c.l.b16 %v725
    %v792 = vunpack.c.l.b16 %v726
    %v793 = vunpack.c.h.b16 %v725
    %v794 = vunpack.c.h.b16 %v726
    %v795 = vunpack.c.l.b16 %v727
    %v796 = vunpack.c.l.b16 %v728
    %v797 = vunpack.c.h.b16 %v727
    %v798 = vunpack.c.h.b16 %v728
    %v799 = vunpack.c.l.b16 %v729
    %v800 = vunpack.c.l.b16 %v730
    %v801 = vunpack.c.h.b16 %v729
    %v802 = vunpack.c.h.b16 %v730
    %v803 = vunpack.c.l.b16 %v731
    %v804 = vunpack.c.l.b16 %v732
    %v805 = vunpack.c.h.b16 %v731
    %v806 = vunpack.c.h.b16 %v732
    %v807 = vunpack.c.l.b16 %v733
    %v808 = vunpack.c.l.b16 %v734
    %v809 = vunpack.c.h.b16 %v733
    %v810 = vunpack.c.h.b16 %v734
    %v811 = vunpack.c.l.b16 %v735
    %v812 = vunpack.c.l.b16 %v736
    %v813 = vunpack.c.h.b16 %v735
    %v814 = vunpack.c.h.b16 %v736
    %v815 = vunpack.c.l.b16 %v737
    %v816 = vunpack.c.l.b16 %v738
    %v817 = vunpack.c.h.b16 %v737
    %v818 = vunpack.c.h.b16 %v738
    %v819 = vunpack.c.l.b16 %v739
    %v820 = vunpack.c.l.b16 %v740
    %v821 = vunpack.c.h.b16 %v739
    %v822 = vunpack.c.h.b16 %v740
    %v823 = vunpack.c.l.b16 %v741
    %v824 = vunpack.c.l.b16 %v742
    %v825 = vunpack.c.h.b16 %v741
    %v826 = vunpack.c.h.b16 %v742
    %v827 = vunpack.c.l.b16 %v743
    %v828 = vunpack.c.l.b16 %v744
    %v829 = vunpack.c.h.b16 %v743
    %v830 = vunpack.c.h.b16 %v744
    %v831 = vunpack.c.l.b16 %v745
    %v832 = vunpack.c.l.b16 %v746
    %v833 = vunpack.c.h.b16 %v745
    %v834 = vunpack.c.h.b16 %v746
    %v835 = vunpack.c.l.b16 %v747
    %v836 = vunpack.c.l.b16 %v748
    %v837 = vunpack.c.h.b16 %v747
    %v838 = vunpack.c.h.b16 %v748
    %v839 = vunpack.c.l.b16 %v749
    %v840 = vunpack.c.l.b16 %v750
    %v841 = vunpack.c.h.b16 %v749
    %v842 = vunpack.c.h.b16 %v750
    %v843 = vunpack.c.l.b16 %v751
    %v844 = vunpack.c.l.b16 %v752
    %v845 = vunpack.c.h.b16 %v751
    %v846 = vunpack.c.h.b16 %v752
    %v847 = vunpack.c.l.b16 %v753
    %v848 = vunpack.c.l.b16 %v754
    %v849 = vunpack.c.h.b16 %v753
    %v850 = vunpack.c.h.b16 %v754
    %v851 = vpack.c.b16 %v788, %v787
    %v852 = vpack.c.b16 %v790, %v789
    %v853 = vpack.c.b16 %v792, %v791
    %v854 = vpack.c.b16 %v794, %v793
    %v855 = vpack.c.b16 %v796, %v795
    %v856 = vpack.c.b16 %v798, %v797
    %v857 = vpack.c.b16 %v800, %v799
    %v858 = vpack.c.b16 %v802, %v801
    %v859 = vpack.c.b16 %v804, %v803
    %v860 = vpack.c.b16 %v806, %v805
    %v861 = vpack.c.b16 %v808, %v807
    %v862 = vpack.c.b16 %v810, %v809
    %v863 = vpack.c.b16 %v812, %v811
    %v864 = vpack.c.b16 %v814, %v813
    %v865 = vpack.c.b16 %v816, %v815
    %v866 = vpack.c.b16 %v818, %v817
    %v867 = vpack.c.b16 %v820, %v819
    %v868 = vpack.c.b16 %v822, %v821
    %v869 = vpack.c.b16 %v824, %v823
    %v870 = vpack.c.b16 %v826, %v825
    %v871 = vpack.c.b16 %v828, %v827
    %v872 = vpack.c.b16 %v830, %v829
    %v873 = vpack.c.b16 %v832, %v831
    %v874 = vpack.c.b16 %v834, %v833
    %v875 = vpack.c.b16 %v836, %v835
    %v876 = vpack.c.b16 %v838, %v837
    %v877 = vpack.c.b16 %v840, %v839
    %v878 = vpack.c.b16 %v842, %v841
    %v879 = vpack.c.b16 %v844, %v843
    %v880 = vpack.c.b16 %v846, %v845
    %v881 = vpack.c.b16 %v848, %v847
    %v882 = vpack.c.b16 %v850, %v849
    %915 = vst [vmem:[#allocation2] sm:$0xff] %v851
    %916 = vst [vmem:[#allocation2 + $0x8] sm:$0xff] %v852
    %917 = vst [vmem:[#allocation2 + $0x10] sm:$0xff] %v853
    %918 = vst [vmem:[#allocation2 + $0x18] sm:$0xff] %v854
    %919 = vst [vmem:[#allocation2 + $0x20] sm:$0xff] %v855
    %920 = vst [vmem:[#allocation2 + $0x28] sm:$0xff] %v856
    %921 = vst [vmem:[#allocation2 + $0x30] sm:$0xff] %v857
    %922 = vst [vmem:[#allocation2 + $0x38] sm:$0xff] %v858
    %923 = vst [vmem:[#allocation2 + $0x40] sm:$0xff] %v859
    %924 = vst [vmem:[#allocation2 + $0x48] sm:$0xff] %v860
    %925 = vst [vmem:[#allocation2 + $0x50] sm:$0xff] %v861
    %926 = vst [vmem:[#allocation2 + $0x58] sm:$0xff] %v862
    %927 = vst [vmem:[#allocation2 + $0x60] sm:$0xff] %v863
    %928 = vst [vmem:[#allocation2 + $0x68] sm:$0xff] %v864
    %929 = vst [vmem:[#allocation2 + $0x70] sm:$0xff] %v865
    %930 = vst [vmem:[#allocation2 + $0x78] sm:$0xff] %v866
    %931 = vst [vmem:[#allocation2 + $0x80] sm:$0xff] %v867
    %932 = vst [vmem:[#allocation2 + $0x88] sm:$0xff] %v868
    %933 = vst [vmem:[#allocation2 + $0x90] sm:$0xff] %v869
    %934 = vst [vmem:[#allocation2 + $0x98] sm:$0xff] %v870
    %935 = vst [vmem:[#allocation2 + $0xa0] sm:$0xff] %v871
    %936 = vst [vmem:[#allocation2 + $0xa8] sm:$0xff] %v872
    %937 = vst [vmem:[#allocation2 + $0xb0] sm:$0xff] %v873
    %938 = vst [vmem:[#allocation2 + $0xb8] sm:$0xff] %v874
    %939 = vst [vmem:[#allocation2 + $0xc0] sm:$0xff] %v875
    %940 = vst [vmem:[#allocation2 + $0xc8] sm:$0xff] %v876
    %941 = vst [vmem:[#allocation2 + $0xd0] sm:$0xff] %v877
    %942 = vst [vmem:[#allocation2 + $0xd8] sm:$0xff] %v878
    %943 = vst [vmem:[#allocation2 + $0xe0] sm:$0xff] %v879
    %944 = vst [vmem:[#allocation2 + $0xe8] sm:$0xff] %v880
    %945 = vst [vmem:[#allocation2 + $0xf0] sm:$0xff] %v881
    %946 = vst [vmem:[#allocation2 + $0xf8] sm:$0xff] %v882
    // Predicated region
    $region10: #{vgae_forward.5} parent=1 // pred_check
      _
    $region11: #{vgae_forward.5} parent=1 // pred_check_branch
      %948 = sbr.rel (0) target = $region13
    $region12: #{vgae_forward.5} parent=1 // pred_region
      %s950 = ssub.s32 4096, 4096
      %951 = vsyncadd [#allocation3], %s950
      %s952 = sshll.u32 [#allocation2], 4
      %s953 = int_to_ptr.vmem [resolvable:$true] %s952
      %958 = dma.vmem_to_hbm [thread:$0]  %s953, 4096, %s2, [#allocation3], 128, 128, 8
    $region13: #{vgae_forward.5} parent=1 // pred_fallthru
      _
    // Predicated region
    $region14: #{vgae_forward.5} parent=1 // pred_check
      _
    $region15: #{vgae_forward.5} parent=1 // pred_check_branch
      %960 = sbr.rel (0) target = $region17
    $region16: #{vgae_forward.5} parent=1 // pred_region
      %961 = dma.done [#allocation3], 4096
    $region17: #{vgae_forward.5} parent=1 // pred_fallthru
      _
    %962 = vsyncpa [#allocation3], 1

// kernel: vgae_forward.3
$region0: #{vgae_forward.3}
  #allocation0 [shape = 'u32[]', space=smem, size = 0x4, offset = 0x4, fixed_abs, tag = 'smem constant byte address 0x4 - core index']
  #allocation1 [shape = 'u32[144,128]{1,0:T(1,128)}', space=vmem, size = 0x12000, scoped, tag = 'internal scratch']
  #allocation2 [shape = 'f32[256,128]{1,0:T(8,128)}', space=vmem, size = 0x20000, scoped, tag = 'scratch operand']
  %s0 = inlined_call_operand.vmem [shape: bf16[256,256], index: 0, kind: input, shape index: {}]
  %s1 = inlined_call_operand.vmem [shape: bf16[256,128], index: 1, kind: input, shape index: {}]
  %s2 = inlined_call_operand.vmem [shape: bf16[128,128], index: 2, kind: input, shape index: {}]
  %s3 = inlined_call_operand.vmem [shape: bf16[256,128], index: 3, kind: output, shape index: {}]
  %s4 = sld [smem:[#allocation0]]
  $region30: #{vgae_forward.3} parent=0
    _
  %s6 = ssub.s32 1, %s4
  %s7 = scalar_select 0, %s6, %s4
  // Predicated region
  $region2: #{vgae_forward.3} parent=0 // pred_check
    _
  $region3: #{vgae_forward.3} parent=0 // pred_check_branch
    %9 = sbr.rel (0) target = $region5
  $region4: #{vgae_forward.3} parent=0 // pred_region
    _
  $region5: #{vgae_forward.3} parent=0 // pred_fallthru
    _
  // Predicated region
  $region6: #{vgae_forward.3} parent=0 // pred_check
    _
  $region7: #{vgae_forward.3} parent=0 // pred_check_branch
    %11 = sbr.rel (0) target = $region9
  $region8: #{vgae_forward.3} parent=0 // pred_region
    _
  $region9: #{vgae_forward.3} parent=0 // pred_fallthru
    _
  // Predicated region
  $region10: #{vgae_forward.3} parent=0 // pred_check
    _
  $region11: #{vgae_forward.3} parent=0 // pred_check_branch
    %13 = sbr.rel (0) target = $region13
  $region12: #{vgae_forward.3} parent=0 // pred_region
    _
  $region13: #{vgae_forward.3} parent=0 // pred_fallthru
    _
  %p15 = scmp.eq.s32.totalorder 0, 0
  // Predicated region
  $region14: #{vgae_forward.3} parent=0 // pred_check
    %p16 = pneg %p15
  $region15: #{vgae_forward.3} parent=0 // pred_check_branch
    %18 = sbr.rel (%p16) target = $region17
  $region16: #{vgae_forward.3} parent=0 // pred_region
    %19 = vst [vmem:[#allocation2] sm:$0xff] 0.0
    %20 = vst [vmem:[#allocation2 + $0x8] sm:$0xff] 0.0
    %21 = vst [vmem:[#allocation2 + $0x10] sm:$0xff] 0.0
    %22 = vst [vmem:[#allocation2 + $0x18] sm:$0xff] 0.0
    %23 = vst [vmem:[#allocation2 + $0x20] sm:$0xff] 0.0
    %24 = vst [vmem:[#allocation2 + $0x28] sm:$0xff] 0.0
    %25 = vst [vmem:[#allocation2 + $0x30] sm:$0xff] 0.0
    %26 = vst [vmem:[#allocation2 + $0x38] sm:$0xff] 0.0
    %27 = vst [vmem:[#allocation2 + $0x40] sm:$0xff] 0.0
    %28 = vst [vmem:[#allocation2 + $0x48] sm:$0xff] 0.0
    %29 = vst [vmem:[#allocation2 + $0x50] sm:$0xff] 0.0
    %30 = vst [vmem:[#allocation2 + $0x58] sm:$0xff] 0.0
    %31 = vst [vmem:[#allocation2 + $0x60] sm:$0xff] 0.0
    %32 = vst [vmem:[#allocation2 + $0x68] sm:$0xff] 0.0
    %33 = vst [vmem:[#allocation2 + $0x70] sm:$0xff] 0.0
    %34 = vst [vmem:[#allocation2 + $0x78] sm:$0xff] 0.0
    %35 = vst [vmem:[#allocation2 + $0x80] sm:$0xff] 0.0
    %36 = vst [vmem:[#allocation2 + $0x88] sm:$0xff] 0.0
    %37 = vst [vmem:[#allocation2 + $0x90] sm:$0xff] 0.0
    %38 = vst [vmem:[#allocation2 + $0x98] sm:$0xff] 0.0
    %39 = vst [vmem:[#allocation2 + $0xa0] sm:$0xff] 0.0
    %40 = vst [vmem:[#allocation2 + $0xa8] sm:$0xff] 0.0
    %41 = vst [vmem:[#allocation2 + $0xb0] sm:$0xff] 0.0
    %42 = vst [vmem:[#allocation2 + $0xb8] sm:$0xff] 0.0
    %43 = vst [vmem:[#allocation2 + $0xc0] sm:$0xff] 0.0
    %44 = vst [vmem:[#allocation2 + $0xc8] sm:$0xff] 0.0
    %45 = vst [vmem:[#allocation2 + $0xd0] sm:$0xff] 0.0
    %46 = vst [vmem:[#allocation2 + $0xd8] sm:$0xff] 0.0
    %47 = vst [vmem:[#allocation2 + $0xe0] sm:$0xff] 0.0
    %48 = vst [vmem:[#allocation2 + $0xe8] sm:$0xff] 0.0
    %49 = vst [vmem:[#allocation2 + $0xf0] sm:$0xff] 0.0
    %50 = vst [vmem:[#allocation2 + $0xf8] sm:$0xff] 0.0
  $region17: #{vgae_forward.3} parent=0 // pred_fallthru
    _
  %s51 = smul.u32 0, 256
  %s52 = sshra.s32 %s51, 3
  %s53 = sand.u32 %s51, 7
  %s54 = smul.addr %s52, 4
  %s55 = scalar_lea.vmem %s1, %s54
  %v56 = vld [vmem:[%s55] sm:$0xf]
  %v57 = vld [vmem:[%s55 + $0x4] sm:$0xf]
  %v58 = vld [vmem:[%s55 + $0x8] sm:$0xf]
  %v59 = vld [vmem:[%s55 + $0xc] sm:$0xf]
  %v60 = vld [vmem:[%s55 + $0x10] sm:$0xf]
  %v61 = vld [vmem:[%s55 + $0x14] sm:$0xf]
  %v62 = vld [vmem:[%s55 + $0x18] sm:$0xf]
  %v63 = vld [vmem:[%s55 + $0x1c] sm:$0xf]
  %v64 = vld [vmem:[%s55 + $0x20] sm:$0xf]
  %v65 = vld [vmem:[%s55 + $0x24] sm:$0xf]
  %v66 = vld [vmem:[%s55 + $0x28] sm:$0xf]
  %v67 = vld [vmem:[%s55 + $0x2c] sm:$0xf]
  %v68 = vld [vmem:[%s55 + $0x30] sm:$0xf]
  %v69 = vld [vmem:[%s55 + $0x34] sm:$0xf]
  %v70 = vld [vmem:[%s55 + $0x38] sm:$0xf]
  %v71 = vld [vmem:[%s55 + $0x3c] sm:$0xf]
  %v72 = vld [vmem:[%s55 + $0x40] sm:$0xf]
  %v73 = vld [vmem:[%s55 + $0x44] sm:$0xf]
  %v74 = vld [vmem:[%s55 + $0x48] sm:$0xf]
  %v75 = vld [vmem:[%s55 + $0x4c] sm:$0xf]
  %v76 = vld [vmem:[%s55 + $0x50] sm:$0xf]
  %v77 = vld [vmem:[%s55 + $0x54] sm:$0xf]
  %v78 = vld [vmem:[%s55 + $0x58] sm:$0xf]
  %v79 = vld [vmem:[%s55 + $0x5c] sm:$0xf]
  %v80 = vld [vmem:[%s55 + $0x60] sm:$0xf]
  %v81 = vld [vmem:[%s55 + $0x64] sm:$0xf]
  %v82 = vld [vmem:[%s55 + $0x68] sm:$0xf]
  %v83 = vld [vmem:[%s55 + $0x6c] sm:$0xf]
  %v84 = vld [vmem:[%s55 + $0x70] sm:$0xf]
  %v85 = vld [vmem:[%s55 + $0x74] sm:$0xf]
  %v86 = vld [vmem:[%s55 + $0x78] sm:$0xf]
  %v87 = vld [vmem:[%s55 + $0x7c] sm:$0xf]
  %v88 = vld [vmem:[#allocation2] sm:$0xff]
  %v89 = vld [vmem:[#allocation2 + $0x8] sm:$0xff]
  %v90 = vld [vmem:[#allocation2 + $0x10] sm:$0xff]
  %v91 = vld [vmem:[#allocation2 + $0x18] sm:$0xff]
  %v92 = vld [vmem:[#allocation2 + $0x20] sm:$0xff]
  %v93 = vld [vmem:[#allocation2 + $0x28] sm:$0xff]
  %v94 = vld [vmem:[#allocation2 + $0x30] sm:$0xff]
  %v95 = vld [vmem:[#allocation2 + $0x38] sm:$0xff]
  %v96 = vld [vmem:[#allocation2 + $0x40] sm:$0xff]
  %v97 = vld [vmem:[#allocation2 + $0x48] sm:$0xff]
  %v98 = vld [vmem:[#allocation2 + $0x50] sm:$0xff]
  %v99 = vld [vmem:[#allocation2 + $0x58] sm:$0xff]
  %v100 = vld [vmem:[#allocation2 + $0x60] sm:$0xff]
  %v101 = vld [vmem:[#allocation2 + $0x68] sm:$0xff]
  %v102 = vld [vmem:[#allocation2 + $0x70] sm:$0xff]
  %v103 = vld [vmem:[#allocation2 + $0x78] sm:$0xff]
  %v104 = vld [vmem:[#allocation2 + $0x80] sm:$0xff]
  %v105 = vld [vmem:[#allocation2 + $0x88] sm:$0xff]
  %v106 = vld [vmem:[#allocation2 + $0x90] sm:$0xff]
  %v107 = vld [vmem:[#allocation2 + $0x98] sm:$0xff]
  %v108 = vld [vmem:[#allocation2 + $0xa0] sm:$0xff]
  %v109 = vld [vmem:[#allocation2 + $0xa8] sm:$0xff]
  %v110 = vld [vmem:[#allocation2 + $0xb0] sm:$0xff]
  %v111 = vld [vmem:[#allocation2 + $0xb8] sm:$0xff]
  %v112 = vld [vmem:[#allocation2 + $0xc0] sm:$0xff]
  %v113 = vld [vmem:[#allocation2 + $0xc8] sm:$0xff]
  %v114 = vld [vmem:[#allocation2 + $0xd0] sm:$0xff]
  %v115 = vld [vmem:[#allocation2 + $0xd8] sm:$0xff]
  %v116 = vld [vmem:[#allocation2 + $0xe0] sm:$0xff]
  %v117 = vld [vmem:[#allocation2 + $0xe8] sm:$0xff]
  %v118 = vld [vmem:[#allocation2 + $0xf0] sm:$0xff]
  %v119 = vld [vmem:[#allocation2 + $0xf8] sm:$0xff]
  %v120 = vld [vmem:[%s0] sm:$0xff]
  %v121 = vld [vmem:[%s0 + $0x8] sm:$0xff]
  %v122 = vld [vmem:[%s0 + $0x10] sm:$0xff]
  %v123 = vld [vmem:[%s0 + $0x18] sm:$0xff]
  %v124 = vld [vmem:[%s0 + $0x20] sm:$0xff]
  %v125 = vld [vmem:[%s0 + $0x28] sm:$0xff]
  %v126 = vld [vmem:[%s0 + $0x30] sm:$0xff]
  %v127 = vld [vmem:[%s0 + $0x38] sm:$0xff]
  %v128 = vld [vmem:[%s0 + $0x40] sm:$0xff]
  %v129 = vld [vmem:[%s0 + $0x48] sm:$0xff]
  %v130 = vld [vmem:[%s0 + $0x50] sm:$0xff]
  %v131 = vld [vmem:[%s0 + $0x58] sm:$0xff]
  %v132 = vld [vmem:[%s0 + $0x60] sm:$0xff]
  %v133 = vld [vmem:[%s0 + $0x68] sm:$0xff]
  %v134 = vld [vmem:[%s0 + $0x70] sm:$0xff]
  %v135 = vld [vmem:[%s0 + $0x78] sm:$0xff]
  %v136 = vld [vmem:[%s0 + $0x80] sm:$0xff]
  %v137 = vld [vmem:[%s0 + $0x88] sm:$0xff]
  %v138 = vld [vmem:[%s0 + $0x90] sm:$0xff]
  %v139 = vld [vmem:[%s0 + $0x98] sm:$0xff]
  %v140 = vld [vmem:[%s0 + $0xa0] sm:$0xff]
  %v141 = vld [vmem:[%s0 + $0xa8] sm:$0xff]
  %v142 = vld [vmem:[%s0 + $0xb0] sm:$0xff]
  %v143 = vld [vmem:[%s0 + $0xb8] sm:$0xff]
  %v144 = vld [vmem:[%s0 + $0xc0] sm:$0xff]
  %v145 = vld [vmem:[%s0 + $0xc8] sm:$0xff]
  %v146 = vld [vmem:[%s0 + $0xd0] sm:$0xff]
  %v147 = vld [vmem:[%s0 + $0xd8] sm:$0xff]
  %v148 = vld [vmem:[%s0 + $0xe0] sm:$0xff]
  %v149 = vld [vmem:[%s0 + $0xe8] sm:$0xff]
  %v150 = vld [vmem:[%s0 + $0xf0] sm:$0xff]
  %v151 = vld [vmem:[%s0 + $0xf8] sm:$0xff]
  %v184 = vunpack.c.l.b16 %v120
  %v185 = vunpack.c.h.b16 %v120
  %v186 = vunpack.c.l.b16 %v121
  %v187 = vunpack.c.h.b16 %v121
  %v188 = vunpack.c.l.b16 %v122
  %v189 = vunpack.c.h.b16 %v122
  %v190 = vunpack.c.l.b16 %v123
  %v191 = vunpack.c.h.b16 %v123
  %v192 = vunpack.c.l.b16 %v124
  %v193 = vunpack.c.h.b16 %v124
  %v194 = vunpack.c.l.b16 %v125
  %v195 = vunpack.c.h.b16 %v125
  %v196 = vunpack.c.l.b16 %v126
  %v197 = vunpack.c.h.b16 %v126
  %v198 = vunpack.c.l.b16 %v127
  %v199 = vunpack.c.h.b16 %v127
  %v200 = vunpack.c.l.b16 %v128
  %v201 = vunpack.c.h.b16 %v128
  %v202 = vunpack.c.l.b16 %v129
  %v203 = vunpack.c.h.b16 %v129
  %v204 = vunpack.c.l.b16 %v130
  %v205 = vunpack.c.h.b16 %v130
  %v206 = vunpack.c.l.b16 %v131
  %v207 = vunpack.c.h.b16 %v131
  %v208 = vunpack.c.l.b16 %v132
  %v209 = vunpack.c.h.b16 %v132
  %v210 = vunpack.c.l.b16 %v133
  %v211 = vunpack.c.h.b16 %v133
  %v212 = vunpack.c.l.b16 %v134
  %v213 = vunpack.c.h.b16 %v134
  %v214 = vunpack.c.l.b16 %v135
  %v215 = vunpack.c.h.b16 %v135
  %v216 = vunpack.c.l.b16 %v136
  %v217 = vunpack.c.h.b16 %v136
  %v218 = vunpack.c.l.b16 %v137
  %v219 = vunpack.c.h.b16 %v137
  %v220 = vunpack.c.l.b16 %v138
  %v221 = vunpack.c.h.b16 %v138
  %v222 = vunpack.c.l.b16 %v139
  %v223 = vunpack.c.h.b16 %v139
  %v224 = vunpack.c.l.b16 %v140
  %v225 = vunpack.c.h.b16 %v140
  %v226 = vunpack.c.l.b16 %v141
  %v227 = vunpack.c.h.b16 %v141
  %v228 = vunpack.c.l.b16 %v142
  %v229 = vunpack.c.h.b16 %v142
  %v230 = vunpack.c.l.b16 %v143
  %v231 = vunpack.c.h.b16 %v143
  %v232 = vunpack.c.l.b16 %v144
  %v233 = vunpack.c.h.b16 %v144
  %v234 = vunpack.c.l.b16 %v145
  %v235 = vunpack.c.h.b16 %v145
  %v236 = vunpack.c.l.b16 %v146
  %v237 = vunpack.c.h.b16 %v146
  %v238 = vunpack.c.l.b16 %v147
  %v239 = vunpack.c.h.b16 %v147
  %v240 = vunpack.c.l.b16 %v148
  %v241 = vunpack.c.h.b16 %v148
  %v242 = vunpack.c.l.b16 %v149
  %v243 = vunpack.c.h.b16 %v149
  %v244 = vunpack.c.l.b16 %v150
  %v245 = vunpack.c.h.b16 %v150
  %v246 = vunpack.c.l.b16 %v151
  %v247 = vunpack.c.h.b16 %v151
  %v248 = vpack.c.b16 %v186, %v184
  %v249 = vpack.c.b16 %v187, %v185
  %v250 = vpack.c.b16 %v190, %v188
  %v251 = vpack.c.b16 %v191, %v189
  %v252 = vpack.c.b16 %v194, %v192
  %v253 = vpack.c.b16 %v195, %v193
  %v254 = vpack.c.b16 %v198, %v196
  %v255 = vpack.c.b16 %v199, %v197
  %v256 = vpack.c.b16 %v202, %v200
  %v257 = vpack.c.b16 %v203, %v201
  %v258 = vpack.c.b16 %v206, %v204
  %v259 = vpack.c.b16 %v207, %v205
  %v260 = vpack.c.b16 %v210, %v208
  %v261 = vpack.c.b16 %v211, %v209
  %v262 = vpack.c.b16 %v214, %v212
  %v263 = vpack.c.b16 %v215, %v213
  %v264 = vpack.c.b16 %v218, %v216
  %v265 = vpack.c.b16 %v219, %v217
  %v266 = vpack.c.b16 %v222, %v220
  %v267 = vpack.c.b16 %v223, %v221
  %v268 = vpack.c.b16 %v226, %v224
  %v269 = vpack.c.b16 %v227, %v225
  %v270 = vpack.c.b16 %v230, %v228
  %v271 = vpack.c.b16 %v231, %v229
  %v272 = vpack.c.b16 %v234, %v232
  %v273 = vpack.c.b16 %v235, %v233
  %v274 = vpack.c.b16 %v238, %v236
  %v275 = vpack.c.b16 %v239, %v237
  %v276 = vpack.c.b16 %v242, %v240
  %v277 = vpack.c.b16 %v243, %v241
  %v278 = vpack.c.b16 %v246, %v244
  %v279 = vpack.c.b16 %v247, %v245
  %v344 = vunpack.c.l.b16 %v56
  %v345 = vunpack.c.l.b16 %v57
  %v346 = vunpack.c.l.b16 %v58
  %v347 = vunpack.c.l.b16 %v59
  %v348 = vunpack.c.l.b16 %v60
  %v349 = vunpack.c.l.b16 %v61
  %v350 = vunpack.c.l.b16 %v62
  %v351 = vunpack.c.l.b16 %v63
  %v352 = vunpack.c.l.b16 %v64
  %v353 = vunpack.c.l.b16 %v65
  %v354 = vunpack.c.l.b16 %v66
  %v355 = vunpack.c.l.b16 %v67
  %v356 = vunpack.c.l.b16 %v68
  %v357 = vunpack.c.l.b16 %v69
  %v358 = vunpack.c.l.b16 %v70
  %v359 = vunpack.c.l.b16 %v71
  %v360 = vunpack.c.l.b16 %v72
  %v361 = vunpack.c.l.b16 %v73
  %v362 = vunpack.c.l.b16 %v74
  %v363 = vunpack.c.l.b16 %v75
  %v364 = vunpack.c.l.b16 %v76
  %v365 = vunpack.c.l.b16 %v77
  %v366 = vunpack.c.l.b16 %v78
  %v367 = vunpack.c.l.b16 %v79
  %v368 = vunpack.c.l.b16 %v80
  %v369 = vunpack.c.l.b16 %v81
  %v370 = vunpack.c.l.b16 %v82
  %v371 = vunpack.c.l.b16 %v83
  %v372 = vunpack.c.l.b16 %v84
  %v373 = vunpack.c.l.b16 %v85
  %v374 = vunpack.c.l.b16 %v86
  %v375 = vunpack.c.l.b16 %v87
  %v376 = vpack.c.b16 %v345, %v344
  %v377 = vpack.c.b16 %v347, %v346
  %v378 = vpack.c.b16 %v349, %v348
  %v379 = vpack.c.b16 %v351, %v350
  %v380 = vpack.c.b16 %v353, %v352
  %v381 = vpack.c.b16 %v355, %v354
  %v382 = vpack.c.b16 %v357, %v356
  %v383 = vpack.c.b16 %v359, %v358
  %v384 = vpack.c.b16 %v361, %v360
  %v385 = vpack.c.b16 %v363, %v362
  %v386 = vpack.c.b16 %v365, %v364
  %v387 = vpack.c.b16 %v367, %v366
  %v388 = vpack.c.b16 %v369, %v368
  %v389 = vpack.c.b16 %v371, %v370
  %v390 = vpack.c.b16 %v373, %v372
  %v391 = vpack.c.b16 %v375, %v374
  %408 = vmatprep.subr.bf16.mxu0 0
  %409 = vmatpush1.bf16.msra.mxu0 %v383
  %410 = vmatprep.subr.bf16.mxu0 0
  %411 = vmatpush1.bf16.msra.mxu0 %v382
  %412 = vmatprep.subr.bf16.mxu0 0
  %413 = vmatpush1.bf16.msra.mxu0 %v381
  %414 = vmatprep.subr.bf16.mxu0 0
  %415 = vmatpush1.bf16.msra.mxu0 %v380
  %416 = vmatprep.subr.bf16.mxu0 0
  %417 = vmatpush1.bf16.msra.mxu0 %v379
  %418 = vmatprep.subr.bf16.mxu0 0
  %419 = vmatpush1.bf16.msra.mxu0 %v378
  %420 = vmatprep.subr.bf16.mxu0 0
  %421 = vmatpush1.bf16.msra.mxu0 %v377
  %422 = vmatprep.subr.bf16.mxu0 0
  %423 = vmatpush1.bf16.msra.mxu0 %v376
  %424 = vmatprep.subr.bf16.mxu0 0
  %425 = vmatpush2.bf16.msra.mxu0 %v391
  %426 = vmatprep.subr.bf16.mxu0 0
  %427 = vmatpush2.bf16.msra.mxu0 %v390
  %428 = vmatprep.subr.bf16.mxu0 0
  %429 = vmatpush2.bf16.msra.mxu0 %v389
  %430 = vmatprep.subr.bf16.mxu0 0
  %431 = vmatpush2.bf16.msra.mxu0 %v388
  %432 = vmatprep.subr.bf16.mxu0 0
  %433 = vmatpush2.bf16.msra.mxu0 %v387
  %434 = vmatprep.subr.bf16.mxu0 0
  %435 = vmatpush2.bf16.msra.mxu0 %v386
  %436 = vmatprep.subr.bf16.mxu0 0
  %437 = vmatpush2.bf16.msra.mxu0 %v385
  %438 = vmatprep.subr.bf16.mxu0 0
  %439 = vmatpush2.bf16.msra.mxu0 %v384
  %440 = vmatprep.mubr.bf16.mxu0 %v249
  %441 = vmatmul.mubr.bf16.gmra.mxu0 %v248
  %v442 = vpop.f32.mrf.mxu0
  %v443 = vadd.f32 0.0, %v442
  %v444 = vpop.f32.mrf.mxu0
  %v445 = vpop.f32.mrf.mxu0
  %v446 = vadd.f32 0.0, %v445
  %v447 = vpop.f32.mrf.mxu0
  %448 = vmatprep.mubr.bf16.mxu0 %v251
  %449 = vmatmul.mubr.bf16.gmra.mxu0 %v250
  %v450 = vpop.f32.mrf.mxu0
  %v451 = vadd.f32 0.0, %v450
  %v452 = vpop.f32.mrf.mxu0
  %v453 = vpop.f32.mrf.mxu0
  %v454 = vadd.f32 0.0, %v453
  %v455 = vpop.f32.mrf.mxu0
  %456 = vmatprep.mubr.bf16.mxu0 %v253
  %457 = vmatmul.mubr.bf16.gmra.mxu0 %v252
  %v458 = vpop.f32.mrf.mxu0
  %v459 = vadd.f32 0.0, %v458
  %v460 = vpop.f32.mrf.mxu0
  %v461 = vpop.f32.mrf.mxu0
  %v462 = vadd.f32 0.0, %v461
  %v463 = vpop.f32.mrf.mxu0
  %464 = vmatprep.mubr.bf16.mxu0 %v255
  %465 = vmatmul.mubr.bf16.gmra.mxu0 %v254
  %v466 = vpop.f32.mrf.mxu0
  %v467 = vadd.f32 0.0, %v466
  %v468 = vpop.f32.mrf.mxu0
  %v469 = vpop.f32.mrf.mxu0
  %v470 = vadd.f32 0.0, %v469
  %v471 = vpop.f32.mrf.mxu0
  %472 = vmatprep.mubr.bf16.mxu0 %v257
  %473 = vmatmul.mubr.bf16.gmra.mxu0 %v256
  %v474 = vpop.f32.mrf.mxu0
  %v475 = vadd.f32 0.0, %v474
  %v476 = vpop.f32.mrf.mxu0
  %v477 = vpop.f32.mrf.mxu0
  %v478 = vadd.f32 0.0, %v477
  %v479 = vpop.f32.mrf.mxu0
  %480 = vmatprep.mubr.bf16.mxu0 %v259
  %481 = vmatmul.mubr.bf16.gmra.mxu0 %v258
  %v482 = vpop.f32.mrf.mxu0
  %v483 = vadd.f32 0.0, %v482
  %v484 = vpop.f32.mrf.mxu0
  %v485 = vpop.f32.mrf.mxu0
  %v486 = vadd.f32 0.0, %v485
  %v487 = vpop.f32.mrf.mxu0
  %488 = vmatprep.mubr.bf16.mxu0 %v261
  %489 = vmatmul.mubr.bf16.gmra.mxu0 %v260
  %v490 = vpop.f32.mrf.mxu0
  %v491 = vadd.f32 0.0, %v490
  %v492 = vpop.f32.mrf.mxu0
  %v493 = vpop.f32.mrf.mxu0
  %v494 = vadd.f32 0.0, %v493
  %v495 = vpop.f32.mrf.mxu0
  %496 = vmatprep.mubr.bf16.mxu0 %v263
  %497 = vmatmul.mubr.bf16.gmra.mxu0 %v262
  %v498 = vpop.f32.mrf.mxu0
  %v499 = vadd.f32 0.0, %v498
  %v500 = vpop.f32.mrf.mxu0
  %v501 = vpop.f32.mrf.mxu0
  %v502 = vadd.f32 0.0, %v501
  %v503 = vpop.f32.mrf.mxu0
  %504 = vmatprep.mubr.bf16.mxu0 %v265
  %505 = vmatmul.mubr.bf16.gmra.mxu0 %v264
  %v506 = vpop.f32.mrf.mxu0
  %v507 = vadd.f32 0.0, %v506
  %v508 = vpop.f32.mrf.mxu0
  %v509 = vpop.f32.mrf.mxu0
  %v510 = vadd.f32 0.0, %v509
  %v511 = vpop.f32.mrf.mxu0
  %512 = vmatprep.mubr.bf16.mxu0 %v267
  %513 = vmatmul.mubr.bf16.gmra.mxu0 %v266
  %v514 = vpop.f32.mrf.mxu0
  %v515 = vadd.f32 0.0, %v514
  %v516 = vpop.f32.mrf.mxu0
  %v517 = vpop.f32.mrf.mxu0
  %v518 = vadd.f32 0.0, %v517
  %v519 = vpop.f32.mrf.mxu0
  %520 = vmatprep.mubr.bf16.mxu0 %v269
  %521 = vmatmul.mubr.bf16.gmra.mxu0 %v268
  %v522 = vpop.f32.mrf.mxu0
  %v523 = vadd.f32 0.0, %v522
  %v524 = vpop.f32.mrf.mxu0
  %v525 = vpop.f32.mrf.mxu0
  %v526 = vadd.f32 0.0, %v525
  %v527 = vpop.f32.mrf.mxu0
  %528 = vmatprep.mubr.bf16.mxu0 %v271
  %529 = vmatmul.mubr.bf16.gmra.mxu0 %v270
  %v530 = vpop.f32.mrf.mxu0
  %v531 = vadd.f32 0.0, %v530
  %v532 = vpop.f32.mrf.mxu0
  %v533 = vpop.f32.mrf.mxu0
  %v534 = vadd.f32 0.0, %v533
  %v535 = vpop.f32.mrf.mxu0
  %536 = vmatprep.mubr.bf16.mxu0 %v273
  %537 = vmatmul.mubr.bf16.gmra.mxu0 %v272
  %v538 = vpop.f32.mrf.mxu0
  %v539 = vadd.f32 0.0, %v538
  %v540 = vpop.f32.mrf.mxu0
  %v541 = vpop.f32.mrf.mxu0
  %v542 = vadd.f32 0.0, %v541
  %v543 = vpop.f32.mrf.mxu0
  %544 = vmatprep.mubr.bf16.mxu0 %v275
  %545 = vmatmul.mubr.bf16.gmra.mxu0 %v274
  %v546 = vpop.f32.mrf.mxu0
  %v547 = vadd.f32 0.0, %v546
  %v548 = vpop.f32.mrf.mxu0
  %v549 = vpop.f32.mrf.mxu0
  %v550 = vadd.f32 0.0, %v549
  %v551 = vpop.f32.mrf.mxu0
  %552 = vmatprep.mubr.bf16.mxu0 %v277
  %553 = vmatmul.mubr.bf16.gmra.mxu0 %v276
  %v554 = vpop.f32.mrf.mxu0
  %v555 = vadd.f32 0.0, %v554
  %v556 = vpop.f32.mrf.mxu0
  %v557 = vpop.f32.mrf.mxu0
  %v558 = vadd.f32 0.0, %v557
  %v559 = vpop.f32.mrf.mxu0
  %560 = vmatprep.mubr.bf16.mxu0 %v279
  %561 = vmatmul.mubr.bf16.gmra.mxu0 %v278
  %v562 = vpop.f32.mrf.mxu0
  %v563 = vadd.f32 0.0, %v562
  %v564 = vpop.f32.mrf.mxu0
  %v565 = vpop.f32.mrf.mxu0
  %v566 = vadd.f32 0.0, %v565
  %v567 = vpop.f32.mrf.mxu0
  %568 = vdwg.mxu0
  %v569 = vadd.f32 %v88, %v443
  %v570 = vadd.f32 %v89, %v446
  %v571 = vadd.f32 %v90, %v451
  %v572 = vadd.f32 %v91, %v454
  %v573 = vadd.f32 %v92, %v459
  %v574 = vadd.f32 %v93, %v462
  %v575 = vadd.f32 %v94, %v467
  %v576 = vadd.f32 %v95, %v470
  %v577 = vadd.f32 %v96, %v475
  %v578 = vadd.f32 %v97, %v478
  %v579 = vadd.f32 %v98, %v483
  %v580 = vadd.f32 %v99, %v486
  %v581 = vadd.f32 %v100, %v491
  %v582 = vadd.f32 %v101, %v494
  %v583 = vadd.f32 %v102, %v499
  %v584 = vadd.f32 %v103, %v502
  %v585 = vadd.f32 %v104, %v507
  %v586 = vadd.f32 %v105, %v510
  %v587 = vadd.f32 %v106, %v515
  %v588 = vadd.f32 %v107, %v518
  %v589 = vadd.f32 %v108, %v523
  %v590 = vadd.f32 %v109, %v526
  %v591 = vadd.f32 %v110, %v531
  %v592 = vadd.f32 %v111, %v534
  %v593 = vadd.f32 %v112, %v539
  %v594 = vadd.f32 %v113, %v542
  %v595 = vadd.f32 %v114, %v547
  %v596 = vadd.f32 %v115, %v550
  %v597 = vadd.f32 %v116, %v555
  %v598 = vadd.f32 %v117, %v558
  %v599 = vadd.f32 %v118, %v563
  %v600 = vadd.f32 %v119, %v566
  %601 = vst [vmem:[#allocation2] sm:$0xff] %v569
  %602 = vst [vmem:[#allocation2 + $0x8] sm:$0xff] %v570
  %603 = vst [vmem:[#allocation2 + $0x10] sm:$0xff] %v571
  %604 = vst [vmem:[#allocation2 + $0x18] sm:$0xff] %v572
  %605 = vst [vmem:[#allocation2 + $0x20] sm:$0xff] %v573
  %606 = vst [vmem:[#allocation2 + $0x28] sm:$0xff] %v574
  %607 = vst [vmem:[#allocation2 + $0x30] sm:$0xff] %v575
  %608 = vst [vmem:[#allocation2 + $0x38] sm:$0xff] %v576
  %609 = vst [vmem:[#allocation2 + $0x40] sm:$0xff] %v577
  %610 = vst [vmem:[#allocation2 + $0x48] sm:$0xff] %v578
  %611 = vst [vmem:[#allocation2 + $0x50] sm:$0xff] %v579
  %612 = vst [vmem:[#allocation2 + $0x58] sm:$0xff] %v580
  %613 = vst [vmem:[#allocation2 + $0x60] sm:$0xff] %v581
  %614 = vst [vmem:[#allocation2 + $0x68] sm:$0xff] %v582
  %615 = vst [vmem:[#allocation2 + $0x70] sm:$0xff] %v583
  %616 = vst [vmem:[#allocation2 + $0x78] sm:$0xff] %v584
  %617 = vst [vmem:[#allocation2 + $0x80] sm:$0xff] %v585
  %618 = vst [vmem:[#allocation2 + $0x88] sm:$0xff] %v586
  %619 = vst [vmem:[#allocation2 + $0x90] sm:$0xff] %v587
  %620 = vst [vmem:[#allocation2 + $0x98] sm:$0xff] %v588
  %621 = vst [vmem:[#allocation2 + $0xa0] sm:$0xff] %v589
  %622 = vst [vmem:[#allocation2 + $0xa8] sm:$0xff] %v590
  %623 = vst [vmem:[#allocation2 + $0xb0] sm:$0xff] %v591
  %624 = vst [vmem:[#allocation2 + $0xb8] sm:$0xff] %v592
  %625 = vst [vmem:[#allocation2 + $0xc0] sm:$0xff] %v593
  %626 = vst [vmem:[#allocation2 + $0xc8] sm:$0xff] %v594
  %627 = vst [vmem:[#allocation2 + $0xd0] sm:$0xff] %v595
  %628 = vst [vmem:[#allocation2 + $0xd8] sm:$0xff] %v596
  %629 = vst [vmem:[#allocation2 + $0xe0] sm:$0xff] %v597
  %630 = vst [vmem:[#allocation2 + $0xe8] sm:$0xff] %v598
  %631 = vst [vmem:[#allocation2 + $0xf0] sm:$0xff] %v599
  %632 = vst [vmem:[#allocation2 + $0xf8] sm:$0xff] %v600
  // Predicated region
  $region18: #{vgae_forward.3} parent=0 // pred_check
    %p633 = pneg %p15
  $region19: #{vgae_forward.3} parent=0 // pred_check_branch
    %635 = sbr.rel (%p633) target = $region21
  $region20: #{vgae_forward.3} parent=0 // pred_region
    %v636 = vld [vmem:[#allocation2] sm:$0xff]
    %v637 = vld [vmem:[#allocation2 + $0x8] sm:$0xff]
    %v638 = vld [vmem:[#allocation2 + $0x10] sm:$0xff]
    %v639 = vld [vmem:[#allocation2 + $0x18] sm:$0xff]
    %v640 = vld [vmem:[#allocation2 + $0x20] sm:$0xff]
    %v641 = vld [vmem:[#allocation2 + $0x28] sm:$0xff]
    %v642 = vld [vmem:[#allocation2 + $0x30] sm:$0xff]
    %v643 = vld [vmem:[#allocation2 + $0x38] sm:$0xff]
    %v644 = vld [vmem:[#allocation2 + $0x40] sm:$0xff]
    %v645 = vld [vmem:[#allocation2 + $0x48] sm:$0xff]
    %v646 = vld [vmem:[#allocation2 + $0x50] sm:$0xff]
    %v647 = vld [vmem:[#allocation2 + $0x58] sm:$0xff]
    %v648 = vld [vmem:[#allocation2 + $0x60] sm:$0xff]
    %v649 = vld [vmem:[#allocation2 + $0x68] sm:$0xff]
    %v650 = vld [vmem:[#allocation2 + $0x70] sm:$0xff]
    %v651 = vld [vmem:[#allocation2 + $0x78] sm:$0xff]
    %v652 = vld [vmem:[#allocation2 + $0x80] sm:$0xff]
    %v653 = vld [vmem:[#allocation2 + $0x88] sm:$0xff]
    %v654 = vld [vmem:[#allocation2 + $0x90] sm:$0xff]
    %v655 = vld [vmem:[#allocation2 + $0x98] sm:$0xff]
    %v656 = vld [vmem:[#allocation2 + $0xa0] sm:$0xff]
    %v657 = vld [vmem:[#allocation2 + $0xa8] sm:$0xff]
    %v658 = vld [vmem:[#allocation2 + $0xb0] sm:$0xff]
    %v659 = vld [vmem:[#allocation2 + $0xb8] sm:$0xff]
    %v660 = vld [vmem:[#allocation2 + $0xc0] sm:$0xff]
    %v661 = vld [vmem:[#allocation2 + $0xc8] sm:$0xff]
    %v662 = vld [vmem:[#allocation2 + $0xd0] sm:$0xff]
    %v663 = vld [vmem:[#allocation2 + $0xd8] sm:$0xff]
    %v664 = vld [vmem:[#allocation2 + $0xe0] sm:$0xff]
    %v665 = vld [vmem:[#allocation2 + $0xe8] sm:$0xff]
    %v666 = vld [vmem:[#allocation2 + $0xf0] sm:$0xff]
    %v667 = vld [vmem:[#allocation2 + $0xf8] sm:$0xff]
    %v668 = vpack.c.bf16 %v637, %v636
    %v669 = vpack.c.bf16 %v639, %v638
    %v670 = vpack.c.bf16 %v641, %v640
    %v671 = vpack.c.bf16 %v643, %v642
    %v672 = vpack.c.bf16 %v645, %v644
    %v673 = vpack.c.bf16 %v647, %v646
    %v674 = vpack.c.bf16 %v649, %v648
    %v675 = vpack.c.bf16 %v651, %v650
    %v676 = vpack.c.bf16 %v653, %v652
    %v677 = vpack.c.bf16 %v655, %v654
    %v678 = vpack.c.bf16 %v657, %v656
    %v679 = vpack.c.bf16 %v659, %v658
    %v680 = vpack.c.bf16 %v661, %v660
    %v681 = vpack.c.bf16 %v663, %v662
    %v682 = vpack.c.bf16 %v665, %v664
    %v683 = vpack.c.bf16 %v667, %v666
    %v684 = vld [vmem:[%s2] sm:$0xf]
    %v685 = vld [vmem:[%s2 + $0x4] sm:$0xf]
    %v686 = vld [vmem:[%s2 + $0x8] sm:$0xf]
    %v687 = vld [vmem:[%s2 + $0xc] sm:$0xf]
    %v688 = vld [vmem:[%s2 + $0x10] sm:$0xf]
    %v689 = vld [vmem:[%s2 + $0x14] sm:$0xf]
    %v690 = vld [vmem:[%s2 + $0x18] sm:$0xf]
    %v691 = vld [vmem:[%s2 + $0x1c] sm:$0xf]
    %v692 = vld [vmem:[%s2 + $0x20] sm:$0xf]
    %v693 = vld [vmem:[%s2 + $0x24] sm:$0xf]
    %v694 = vld [vmem:[%s2 + $0x28] sm:$0xf]
    %v695 = vld [vmem:[%s2 + $0x2c] sm:$0xf]
    %v696 = vld [vmem:[%s2 + $0x30] sm:$0xf]
    %v697 = vld [vmem:[%s2 + $0x34] sm:$0xf]
    %v698 = vld [vmem:[%s2 + $0x38] sm:$0xf]
    %v699 = vld [vmem:[%s2 + $0x3c] sm:$0xf]
    %v716 = vunpack.c.l.b16 %v684
    %v717 = vunpack.c.l.b16 %v685
    %v718 = vunpack.c.l.b16 %v686
    %v719 = vunpack.c.l.b16 %v687
    %v720 = vunpack.c.l.b16 %v688
    %v721 = vunpack.c.l.b16 %v689
    %v722 = vunpack.c.l.b16 %v690
    %v723 = vunpack.c.l.b16 %v691
    %v724 = vunpack.c.l.b16 %v692
    %v725 = vunpack.c.l.b16 %v693
    %v726 = vunpack.c.l.b16 %v694
    %v727 = vunpack.c.l.b16 %v695
    %v728 = vunpack.c.l.b16 %v696
    %v729 = vunpack.c.l.b16 %v697
    %v730 = vunpack.c.l.b16 %v698
    %v731 = vunpack.c.l.b16 %v699
    %v732 = vpack.c.b16 %v717, %v716
    %v733 = vpack.c.b16 %v719, %v718
    %v734 = vpack.c.b16 %v721, %v720
    %v735 = vpack.c.b16 %v723, %v722
    %v736 = vpack.c.b16 %v725, %v724
    %v737 = vpack.c.b16 %v727, %v726
    %v738 = vpack.c.b16 %v729, %v728
    %v739 = vpack.c.b16 %v731, %v730
    %748 = vmatprep.subr.bf16.mxu0 0
    %749 = vmatpush1.bf16.msra.mxu0 %v739
    %750 = vmatprep.subr.bf16.mxu0 0
    %751 = vmatpush1.bf16.msra.mxu0 %v738
    %752 = vmatprep.subr.bf16.mxu0 0
    %753 = vmatpush1.bf16.msra.mxu0 %v737
    %754 = vmatprep.subr.bf16.mxu0 0
    %755 = vmatpush1.bf16.msra.mxu0 %v736
    %756 = vmatprep.subr.bf16.mxu0 0
    %757 = vmatpush1.bf16.msra.mxu0 %v735
    %758 = vmatprep.subr.bf16.mxu0 0
    %759 = vmatpush1.bf16.msra.mxu0 %v734
    %760 = vmatprep.subr.bf16.mxu0 0
    %761 = vmatpush1.bf16.msra.mxu0 %v733
    %762 = vmatprep.subr.bf16.mxu0 0
    %763 = vmatpush1.bf16.msra.mxu0 %v732
    %764 = vmatprep.subr.bf16.mxu0 0
    %765 = vmatpush2.bf16.msra.mxu0 0
    %766 = vmatprep.subr.bf16.mxu0 0
    %767 = vmatpush2.bf16.msra.mxu0 0
    %768 = vmatprep.subr.bf16.mxu0 0
    %769 = vmatpush2.bf16.msra.mxu0 0
    %770 = vmatprep.subr.bf16.mxu0 0
    %771 = vmatpush2.bf16.msra.mxu0 0
    %772 = vmatprep.subr.bf16.mxu0 0
    %773 = vmatpush2.bf16.msra.mxu0 0
    %774 = vmatprep.subr.bf16.mxu0 0
    %775 = vmatpush2.bf16.msra.mxu0 0
    %776 = vmatprep.subr.bf16.mxu0 0
    %777 = vmatpush2.bf16.msra.mxu0 0
    %778 = vmatprep.subr.bf16.mxu0 0
    %779 = vmatpush2.bf16.msra.mxu0 0
    %780 = vmatprep.mubr.bf16.mxu0 0
    %781 = vmatmul.mubr.bf16.gmra.mxu0 %v668
    %v782 = vpop.f32.mrf.mxu0
    %v783 = vadd.f32 0.0, %v782
    %v784 = vpop.f32.mrf.mxu0
    %v785 = vpop.f32.mrf.mxu0
    %v786 = vadd.f32 0.0, %v785
    %v787 = vpop.f32.mrf.mxu0
    %788 = vmatprep.mubr.bf16.mxu0 0
    %789 = vmatmul.mubr.bf16.gmra.mxu0 %v669
    %v790 = vpop.f32.mrf.mxu0
    %v791 = vadd.f32 0.0, %v790
    %v792 = vpop.f32.mrf.mxu0
    %v793 = vpop.f32.mrf.mxu0
    %v794 = vadd.f32 0.0, %v793
    %v795 = vpop.f32.mrf.mxu0
    %796 = vmatprep.mubr.bf16.mxu0 0
    %797 = vmatmul.mubr.bf16.gmra.mxu0 %v670
    %v798 = vpop.f32.mrf.mxu0
    %v799 = vadd.f32 0.0, %v798
    %v800 = vpop.f32.mrf.mxu0
    %v801 = vpop.f32.mrf.mxu0
    %v802 = vadd.f32 0.0, %v801
    %v803 = vpop.f32.mrf.mxu0
    %804 = vmatprep.mubr.bf16.mxu0 0
    %805 = vmatmul.mubr.bf16.gmra.mxu0 %v671
    %v806 = vpop.f32.mrf.mxu0
    %v807 = vadd.f32 0.0, %v806
    %v808 = vpop.f32.mrf.mxu0
    %v809 = vpop.f32.mrf.mxu0
    %v810 = vadd.f32 0.0, %v809
    %v811 = vpop.f32.mrf.mxu0
    %812 = vmatprep.mubr.bf16.mxu0 0
    %813 = vmatmul.mubr.bf16.gmra.mxu0 %v672
    %v814 = vpop.f32.mrf.mxu0
    %v815 = vadd.f32 0.0, %v814
    %v816 = vpop.f32.mrf.mxu0
    %v817 = vpop.f32.mrf.mxu0
    %v818 = vadd.f32 0.0, %v817
    %v819 = vpop.f32.mrf.mxu0
    %820 = vmatprep.mubr.bf16.mxu0 0
    %821 = vmatmul.mubr.bf16.gmra.mxu0 %v673
    %v822 = vpop.f32.mrf.mxu0
    %v823 = vadd.f32 0.0, %v822
    %v824 = vpop.f32.mrf.mxu0
    %v825 = vpop.f32.mrf.mxu0
    %v826 = vadd.f32 0.0, %v825
    %v827 = vpop.f32.mrf.mxu0
    %828 = vmatprep.mubr.bf16.mxu0 0
    %829 = vmatmul.mubr.bf16.gmra.mxu0 %v674
    %v830 = vpop.f32.mrf.mxu0
    %v831 = vadd.f32 0.0, %v830
    %v832 = vpop.f32.mrf.mxu0
    %v833 = vpop.f32.mrf.mxu0
    %v834 = vadd.f32 0.0, %v833
    %v835 = vpop.f32.mrf.mxu0
    %836 = vmatprep.mubr.bf16.mxu0 0
    %837 = vmatmul.mubr.bf16.gmra.mxu0 %v675
    %v838 = vpop.f32.mrf.mxu0
    %v839 = vadd.f32 0.0, %v838
    %v840 = vpop.f32.mrf.mxu0
    %v841 = vpop.f32.mrf.mxu0
    %v842 = vadd.f32 0.0, %v841
    %v843 = vpop.f32.mrf.mxu0
    %844 = vmatprep.mubr.bf16.mxu0 0
    %845 = vmatmul.mubr.bf16.gmra.mxu0 %v676
    %v846 = vpop.f32.mrf.mxu0
    %v847 = vadd.f32 0.0, %v846
    %v848 = vpop.f32.mrf.mxu0
    %v849 = vpop.f32.mrf.mxu0
    %v850 = vadd.f32 0.0, %v849
    %v851 = vpop.f32.mrf.mxu0
    %852 = vmatprep.mubr.bf16.mxu0 0
    %853 = vmatmul.mubr.bf16.gmra.mxu0 %v677
    %v854 = vpop.f32.mrf.mxu0
    %v855 = vadd.f32 0.0, %v854
    %v856 = vpop.f32.mrf.mxu0
    %v857 = vpop.f32.mrf.mxu0
    %v858 = vadd.f32 0.0, %v857
    %v859 = vpop.f32.mrf.mxu0
    %860 = vmatprep.mubr.bf16.mxu0 0
    %861 = vmatmul.mubr.bf16.gmra.mxu0 %v678
    %v862 = vpop.f32.mrf.mxu0
    %v863 = vadd.f32 0.0, %v862
    %v864 = vpop.f32.mrf.mxu0
    %v865 = vpop.f32.mrf.mxu0
    %v866 = vadd.f32 0.0, %v865
    %v867 = vpop.f32.mrf.mxu0
    %868 = vmatprep.mubr.bf16.mxu0 0
    %869 = vmatmul.mubr.bf16.gmra.mxu0 %v679
    %v870 = vpop.f32.mrf.mxu0
    %v871 = vadd.f32 0.0, %v870
    %v872 = vpop.f32.mrf.mxu0
    %v873 = vpop.f32.mrf.mxu0
    %v874 = vadd.f32 0.0, %v873
    %v875 = vpop.f32.mrf.mxu0
    %876 = vmatprep.mubr.bf16.mxu0 0
    %877 = vmatmul.mubr.bf16.gmra.mxu0 %v680
    %v878 = vpop.f32.mrf.mxu0
    %v879 = vadd.f32 0.0, %v878
    %v880 = vpop.f32.mrf.mxu0
    %v881 = vpop.f32.mrf.mxu0
    %v882 = vadd.f32 0.0, %v881
    %v883 = vpop.f32.mrf.mxu0
    %884 = vmatprep.mubr.bf16.mxu0 0
    %885 = vmatmul.mubr.bf16.gmra.mxu0 %v681
    %v886 = vpop.f32.mrf.mxu0
    %v887 = vadd.f32 0.0, %v886
    %v888 = vpop.f32.mrf.mxu0
    %v889 = vpop.f32.mrf.mxu0
    %v890 = vadd.f32 0.0, %v889
    %v891 = vpop.f32.mrf.mxu0
    %892 = vmatprep.mubr.bf16.mxu0 0
    %893 = vmatmul.mubr.bf16.gmra.mxu0 %v682
    %v894 = vpop.f32.mrf.mxu0
    %v895 = vadd.f32 0.0, %v894
    %v896 = vpop.f32.mrf.mxu0
    %v897 = vpop.f32.mrf.mxu0
    %v898 = vadd.f32 0.0, %v897
    %v899 = vpop.f32.mrf.mxu0
    %900 = vmatprep.mubr.bf16.mxu0 0
    %901 = vmatmul.mubr.bf16.gmra.mxu0 %v683
    %v902 = vpop.f32.mrf.mxu0
    %v903 = vadd.f32 0.0, %v902
    %v904 = vpop.f32.mrf.mxu0
    %v905 = vpop.f32.mrf.mxu0
    %v906 = vadd.f32 0.0, %v905
    %v907 = vpop.f32.mrf.mxu0
    %908 = vdwg.mxu0
    %v909 = vmax.f32 %v783, 0.0
    %v910 = vmax.f32 %v786, 0.0
    %v911 = vmax.f32 %v791, 0.0
    %v912 = vmax.f32 %v794, 0.0
    %v913 = vmax.f32 %v799, 0.0
    %v914 = vmax.f32 %v802, 0.0
    %v915 = vmax.f32 %v807, 0.0
    %v916 = vmax.f32 %v810, 0.0
    %v917 = vmax.f32 %v815, 0.0
    %v918 = vmax.f32 %v818, 0.0
    %v919 = vmax.f32 %v823, 0.0
    %v920 = vmax.f32 %v826, 0.0
    %v921 = vmax.f32 %v831, 0.0
    %v922 = vmax.f32 %v834, 0.0
    %v923 = vmax.f32 %v839, 0.0
    %v924 = vmax.f32 %v842, 0.0
    %v925 = vmax.f32 %v847, 0.0
    %v926 = vmax.f32 %v850, 0.0
    %v927 = vmax.f32 %v855, 0.0
    %v928 = vmax.f32 %v858, 0.0
    %v929 = vmax.f32 %v863, 0.0
    %v930 = vmax.f32 %v866, 0.0
    %v931 = vmax.f32 %v871, 0.0
    %v932 = vmax.f32 %v874, 0.0
    %v933 = vmax.f32 %v879, 0.0
    %v934 = vmax.f32 %v882, 0.0
    %v935 = vmax.f32 %v887, 0.0
    %v936 = vmax.f32 %v890, 0.0
    %v937 = vmax.f32 %v895, 0.0
    %v938 = vmax.f32 %v898, 0.0
    %v939 = vmax.f32 %v903, 0.0
    %v940 = vmax.f32 %v906, 0.0
    %v941 = vpack.c.bf16 %v910, %v909
    %v942 = vpack.c.bf16 %v912, %v911
    %v943 = vpack.c.bf16 %v914, %v913
    %v944 = vpack.c.bf16 %v916, %v915
    %v945 = vpack.c.bf16 %v918, %v917
    %v946 = vpack.c.bf16 %v920, %v919
    %v947 = vpack.c.bf16 %v922, %v921
    %v948 = vpack.c.bf16 %v924, %v923
    %v949 = vpack.c.bf16 %v926, %v925
    %v950 = vpack.c.bf16 %v928, %v927
    %v951 = vpack.c.bf16 %v930, %v929
    %v952 = vpack.c.bf16 %v932, %v931
    %v953 = vpack.c.bf16 %v934, %v933
    %v954 = vpack.c.bf16 %v936, %v935
    %v955 = vpack.c.bf16 %v938, %v937
    %v956 = vpack.c.bf16 %v940, %v939
    %v973 = vunpack.c.l.b16 %v941
    %v974 = vunpack.c.h.b16 %v941
    %v975 = vunpack.c.l.b16 %v942
    %v976 = vunpack.c.h.b16 %v942
    %v977 = vunpack.c.l.b16 %v943
    %v978 = vunpack.c.h.b16 %v943
    %v979 = vunpack.c.l.b16 %v944
    %v980 = vunpack.c.h.b16 %v944
    %v981 = vunpack.c.l.b16 %v945
    %v982 = vunpack.c.h.b16 %v945
    %v983 = vunpack.c.l.b16 %v946
    %v984 = vunpack.c.h.b16 %v946
    %v985 = vunpack.c.l.b16 %v947
    %v986 = vunpack.c.h.b16 %v947
    %v987 = vunpack.c.l.b16 %v948
    %v988 = vunpack.c.h.b16 %v948
    %v989 = vunpack.c.l.b16 %v949
    %v990 = vunpack.c.h.b16 %v949
    %v991 = vunpack.c.l.b16 %v950
    %v992 = vunpack.c.h.b16 %v950
    %v993 = vunpack.c.l.b16 %v951
    %v994 = vunpack.c.h.b16 %v951
    %v995 = vunpack.c.l.b16 %v952
    %v996 = vunpack.c.h.b16 %v952
    %v997 = vunpack.c.l.b16 %v953
    %v998 = vunpack.c.h.b16 %v953
    %v999 = vunpack.c.l.b16 %v954
    %v1000 = vunpack.c.h.b16 %v954
    %v1001 = vunpack.c.l.b16 %v955
    %v1002 = vunpack.c.h.b16 %v955
    %v1003 = vunpack.c.l.b16 %v956
    %v1004 = vunpack.c.h.b16 %v956
    %v1005 = vpack.c.b16 %v973, %v973
    %v1006 = vpack.c.b16 %v974, %v974
    %v1007 = vpack.c.b16 %v975, %v975
    %v1008 = vpack.c.b16 %v976, %v976
    %v1009 = vpack.c.b16 %v977, %v977
    %v1010 = vpack.c.b16 %v978, %v978
    %v1011 = vpack.c.b16 %v979, %v979
    %v1012 = vpack.c.b16 %v980, %v980
    %v1013 = vpack.c.b16 %v981, %v981
    %v1014 = vpack.c.b16 %v982, %v982
    %v1015 = vpack.c.b16 %v983, %v983
    %v1016 = vpack.c.b16 %v984, %v984
    %v1017 = vpack.c.b16 %v985, %v985
    %v1018 = vpack.c.b16 %v986, %v986
    %v1019 = vpack.c.b16 %v987, %v987
    %v1020 = vpack.c.b16 %v988, %v988
    %v1021 = vpack.c.b16 %v989, %v989
    %v1022 = vpack.c.b16 %v990, %v990
    %v1023 = vpack.c.b16 %v991, %v991
    %v1024 = vpack.c.b16 %v992, %v992
    %v1025 = vpack.c.b16 %v993, %v993
    %v1026 = vpack.c.b16 %v994, %v994
    %v1027 = vpack.c.b16 %v995, %v995
    %v1028 = vpack.c.b16 %v996, %v996
    %v1029 = vpack.c.b16 %v997, %v997
    %v1030 = vpack.c.b16 %v998, %v998
    %v1031 = vpack.c.b16 %v999, %v999
    %v1032 = vpack.c.b16 %v1000, %v1000
    %v1033 = vpack.c.b16 %v1001, %v1001
    %v1034 = vpack.c.b16 %v1002, %v1002
    %v1035 = vpack.c.b16 %v1003, %v1003
    %v1036 = vpack.c.b16 %v1004, %v1004
    %1069 = vst [vmem:[%s3] sm:$0xf] %v1005
    %1070 = vst [vmem:[%s3 + $0x4] sm:$0xf] %v1006
    %1071 = vst [vmem:[%s3 + $0x8] sm:$0xf] %v1007
    %1072 = vst [vmem:[%s3 + $0xc] sm:$0xf] %v1008
    %1073 = vst [vmem:[%s3 + $0x10] sm:$0xf] %v1009
    %1074 = vst [vmem:[%s3 + $0x14] sm:$0xf] %v1010
    %1075 = vst [vmem:[%s3 + $0x18] sm:$0xf] %v1011
    %1076 = vst [vmem:[%s3 + $0x1c] sm:$0xf] %v1012
    %1077 = vst [vmem:[%s3 + $0x20] sm:$0xf] %v1013
    %1078 = vst [vmem:[%s3 + $0x24] sm:$0xf] %v1014
    %1079 = vst [vmem:[%s3 + $0x28] sm:$0xf] %v1015
    %1080 = vst [vmem:[%s3 + $0x2c] sm:$0xf] %v1016
    %1081 = vst [vmem:[%s3 + $0x30] sm:$0xf] %v1017
    %1082 = vst [vmem:[%s3 + $0x34] sm:$0xf] %v1018
    %1083 = vst [vmem:[%s3 + $0x38] sm:$0xf] %v1019
    %1084 = vst [vmem:[%s3 + $0x3c] sm:$0xf] %v1020
    %1085 = vst [vmem:[%s3 + $0x40] sm:$0xf] %v1021
    %1086 = vst [vmem:[%s3 + $0x44] sm:$0xf] %v1022
    %1087 = vst [vmem:[%s3 + $0x48] sm:$0xf] %v1023
    %1088 = vst [vmem:[%s3 + $0x4c] sm:$0xf] %v1024
    %1089 = vst [vmem:[%s3 + $0x50] sm:$0xf] %v1025
    %1090 = vst [vmem:[%s3 + $0x54] sm:$0xf] %v1026
    %1091 = vst [vmem:[%s3 + $0x58] sm:$0xf] %v1027
    %1092 = vst [vmem:[%s3 + $0x5c] sm:$0xf] %v1028
    %1093 = vst [vmem:[%s3 + $0x60] sm:$0xf] %v1029
    %1094 = vst [vmem:[%s3 + $0x64] sm:$0xf] %v1030
    %1095 = vst [vmem:[%s3 + $0x68] sm:$0xf] %v1031
    %1096 = vst [vmem:[%s3 + $0x6c] sm:$0xf] %v1032
    %1097 = vst [vmem:[%s3 + $0x70] sm:$0xf] %v1033
    %1098 = vst [vmem:[%s3 + $0x74] sm:$0xf] %v1034
    %1099 = vst [vmem:[%s3 + $0x78] sm:$0xf] %v1035
    %1100 = vst [vmem:[%s3 + $0x7c] sm:$0xf] %v1036
  $region21: #{vgae_forward.3} parent=0 // pred_fallthru
    _
  // Predicated region
  $region22: #{vgae_forward.3} parent=0 // pred_check
    _
  $region23: #{vgae_forward.3} parent=0 // pred_check_branch
    %1102 = sbr.rel (0) target = $region25
  $region24: #{vgae_forward.3} parent=0 // pred_region
    _
  $region25: #{vgae_forward.3} parent=0 // pred_fallthru
    _
  // Predicated region
  $region26: #{vgae_forward.3} parent=0 // pred_check
    _
  $region27: #{vgae_forward.3} parent=0 // pred_check_branch
    %1104 = sbr.rel (0) target = $region29
  $region28: #{vgae_forward.3} parent=0 // pred_region
    _
  $region29: #{vgae_forward.3} parent=0 // pred_fallthru
    _

// kernel: vgae_forward.4
$region0: #{vgae_forward.4}
  #allocation0 [shape = 'u32[]', space=smem, size = 0x4, offset = 0x4, fixed_abs, tag = 'smem constant byte address 0x4 - core index']
  #allocation1 [shape = 'u32[144,128]{1,0:T(1,128)}', space=vmem, size = 0x12000, scoped, tag = 'internal scratch']
  #allocation2 [shape = 'f32[256,128]{1,0:T(8,128)}', space=vmem, size = 0x20000, scoped, tag = 'scratch operand']
  %s0 = inlined_call_operand.vmem [shape: bf16[256,256], index: 0, kind: input, shape index: {}]
  %s1 = inlined_call_operand.vmem [shape: bf16[256,128], index: 1, kind: input, shape index: {}]
  %s2 = inlined_call_operand.vmem [shape: bf16[128,128], index: 2, kind: input, shape index: {}]
  %s3 = inlined_call_operand.vmem [shape: bf16[128,128], index: 3, kind: input, shape index: {}]
  %s4 = inlined_call_operand.vmem [shape: f32[256,128], index: 4, kind: input, shape index: {}]
  %s5 = inlined_call_operand.vmem [shape: f32[256,128], index: 5, kind: output, shape index: {}]
  %s6 = sld [smem:[#allocation0]]
  $region38: #{vgae_forward.4} parent=0
    _
  %s8 = ssub.s32 1, %s6
  %s9 = scalar_select 0, %s8, %s6
  // Predicated region
  $region2: #{vgae_forward.4} parent=0 // pred_check
    _
  $region3: #{vgae_forward.4} parent=0 // pred_check_branch
    %11 = sbr.rel (0) target = $region5
  $region4: #{vgae_forward.4} parent=0 // pred_region
    _
  $region5: #{vgae_forward.4} parent=0 // pred_fallthru
    _
  // Predicated region
  $region6: #{vgae_forward.4} parent=0 // pred_check
    _
  $region7: #{vgae_forward.4} parent=0 // pred_check_branch
    %13 = sbr.rel (0) target = $region9
  $region8: #{vgae_forward.4} parent=0 // pred_region
    _
  $region9: #{vgae_forward.4} parent=0 // pred_fallthru
    _
  // Predicated region
  $region10: #{vgae_forward.4} parent=0 // pred_check
    _
  $region11: #{vgae_forward.4} parent=0 // pred_check_branch
    %15 = sbr.rel (0) target = $region13
  $region12: #{vgae_forward.4} parent=0 // pred_region
    _
  $region13: #{vgae_forward.4} parent=0 // pred_fallthru
    _
  // Predicated region
  $region14: #{vgae_forward.4} parent=0 // pred_check
    _
  $region15: #{vgae_forward.4} parent=0 // pred_check_branch
    %17 = sbr.rel (0) target = $region17
  $region16: #{vgae_forward.4} parent=0 // pred_region
    _
  $region17: #{vgae_forward.4} parent=0 // pred_fallthru
    _
  // Predicated region
  $region18: #{vgae_forward.4} parent=0 // pred_check
    _
  $region19: #{vgae_forward.4} parent=0 // pred_check_branch
    %19 = sbr.rel (0) target = $region21
  $region20: #{vgae_forward.4} parent=0 // pred_region
    _
  $region21: #{vgae_forward.4} parent=0 // pred_fallthru
    _
  %p21 = scmp.eq.s32.totalorder 0, 0
  // Predicated region
  $region22: #{vgae_forward.4} parent=0 // pred_check
    %p22 = pneg %p21
  $region23: #{vgae_forward.4} parent=0 // pred_check_branch
    %24 = sbr.rel (%p22) target = $region25
  $region24: #{vgae_forward.4} parent=0 // pred_region
    %25 = vst [vmem:[#allocation2] sm:$0xff] 0.0
    %26 = vst [vmem:[#allocation2 + $0x8] sm:$0xff] 0.0
    %27 = vst [vmem:[#allocation2 + $0x10] sm:$0xff] 0.0
    %28 = vst [vmem:[#allocation2 + $0x18] sm:$0xff] 0.0
    %29 = vst [vmem:[#allocation2 + $0x20] sm:$0xff] 0.0
    %30 = vst [vmem:[#allocation2 + $0x28] sm:$0xff] 0.0
    %31 = vst [vmem:[#allocation2 + $0x30] sm:$0xff] 0.0
    %32 = vst [vmem:[#allocation2 + $0x38] sm:$0xff] 0.0
    %33 = vst [vmem:[#allocation2 + $0x40] sm:$0xff] 0.0
    %34 = vst [vmem:[#allocation2 + $0x48] sm:$0xff] 0.0
    %35 = vst [vmem:[#allocation2 + $0x50] sm:$0xff] 0.0
    %36 = vst [vmem:[#allocation2 + $0x58] sm:$0xff] 0.0
    %37 = vst [vmem:[#allocation2 + $0x60] sm:$0xff] 0.0
    %38 = vst [vmem:[#allocation2 + $0x68] sm:$0xff] 0.0
    %39 = vst [vmem:[#allocation2 + $0x70] sm:$0xff] 0.0
    %40 = vst [vmem:[#allocation2 + $0x78] sm:$0xff] 0.0
    %41 = vst [vmem:[#allocation2 + $0x80] sm:$0xff] 0.0
    %42 = vst [vmem:[#allocation2 + $0x88] sm:$0xff] 0.0
    %43 = vst [vmem:[#allocation2 + $0x90] sm:$0xff] 0.0
    %44 = vst [vmem:[#allocation2 + $0x98] sm:$0xff] 0.0
    %45 = vst [vmem:[#allocation2 + $0xa0] sm:$0xff] 0.0
    %46 = vst [vmem:[#allocation2 + $0xa8] sm:$0xff] 0.0
    %47 = vst [vmem:[#allocation2 + $0xb0] sm:$0xff] 0.0
    %48 = vst [vmem:[#allocation2 + $0xb8] sm:$0xff] 0.0
    %49 = vst [vmem:[#allocation2 + $0xc0] sm:$0xff] 0.0
    %50 = vst [vmem:[#allocation2 + $0xc8] sm:$0xff] 0.0
    %51 = vst [vmem:[#allocation2 + $0xd0] sm:$0xff] 0.0
    %52 = vst [vmem:[#allocation2 + $0xd8] sm:$0xff] 0.0
    %53 = vst [vmem:[#allocation2 + $0xe0] sm:$0xff] 0.0
    %54 = vst [vmem:[#allocation2 + $0xe8] sm:$0xff] 0.0
    %55 = vst [vmem:[#allocation2 + $0xf0] sm:$0xff] 0.0
    %56 = vst [vmem:[#allocation2 + $0xf8] sm:$0xff] 0.0
  $region25: #{vgae_forward.4} parent=0 // pred_fallthru
    _
  %s57 = smul.u32 0, 256
  %s58 = sshra.s32 %s57, 3
  %s59 = sand.u32 %s57, 7
  %s60 = smul.addr %s58, 4
  %s61 = scalar_lea.vmem %s1, %s60
  %v62 = vld [vmem:[%s61] sm:$0xf]
  %v63 = vld [vmem:[%s61 + $0x4] sm:$0xf]
  %v64 = vld [vmem:[%s61 + $0x8] sm:$0xf]
  %v65 = vld [vmem:[%s61 + $0xc] sm:$0xf]
  %v66 = vld [vmem:[%s61 + $0x10] sm:$0xf]
  %v67 = vld [vmem:[%s61 + $0x14] sm:$0xf]
  %v68 = vld [vmem:[%s61 + $0x18] sm:$0xf]
  %v69 = vld [vmem:[%s61 + $0x1c] sm:$0xf]
  %v70 = vld [vmem:[%s61 + $0x20] sm:$0xf]
  %v71 = vld [vmem:[%s61 + $0x24] sm:$0xf]
  %v72 = vld [vmem:[%s61 + $0x28] sm:$0xf]
  %v73 = vld [vmem:[%s61 + $0x2c] sm:$0xf]
  %v74 = vld [vmem:[%s61 + $0x30] sm:$0xf]
  %v75 = vld [vmem:[%s61 + $0x34] sm:$0xf]
  %v76 = vld [vmem:[%s61 + $0x38] sm:$0xf]
  %v77 = vld [vmem:[%s61 + $0x3c] sm:$0xf]
  %v78 = vld [vmem:[%s61 + $0x40] sm:$0xf]
  %v79 = vld [vmem:[%s61 + $0x44] sm:$0xf]
  %v80 = vld [vmem:[%s61 + $0x48] sm:$0xf]
  %v81 = vld [vmem:[%s61 + $0x4c] sm:$0xf]
  %v82 = vld [vmem:[%s61 + $0x50] sm:$0xf]
  %v83 = vld [vmem:[%s61 + $0x54] sm:$0xf]
  %v84 = vld [vmem:[%s61 + $0x58] sm:$0xf]
  %v85 = vld [vmem:[%s61 + $0x5c] sm:$0xf]
  %v86 = vld [vmem:[%s61 + $0x60] sm:$0xf]
  %v87 = vld [vmem:[%s61 + $0x64] sm:$0xf]
  %v88 = vld [vmem:[%s61 + $0x68] sm:$0xf]
  %v89 = vld [vmem:[%s61 + $0x6c] sm:$0xf]
  %v90 = vld [vmem:[%s61 + $0x70] sm:$0xf]
  %v91 = vld [vmem:[%s61 + $0x74] sm:$0xf]
  %v92 = vld [vmem:[%s61 + $0x78] sm:$0xf]
  %v93 = vld [vmem:[%s61 + $0x7c] sm:$0xf]
  %v94 = vld [vmem:[#allocation2] sm:$0xff]
  %v95 = vld [vmem:[#allocation2 + $0x8] sm:$0xff]
  %v96 = vld [vmem:[#allocation2 + $0x10] sm:$0xff]
  %v97 = vld [vmem:[#allocation2 + $0x18] sm:$0xff]
  %v98 = vld [vmem:[#allocation2 + $0x20] sm:$0xff]
  %v99 = vld [vmem:[#allocation2 + $0x28] sm:$0xff]
  %v100 = vld [vmem:[#allocation2 + $0x30] sm:$0xff]
  %v101 = vld [vmem:[#allocation2 + $0x38] sm:$0xff]
  %v102 = vld [vmem:[#allocation2 + $0x40] sm:$0xff]
  %v103 = vld [vmem:[#allocation2 + $0x48] sm:$0xff]
  %v104 = vld [vmem:[#allocation2 + $0x50] sm:$0xff]
  %v105 = vld [vmem:[#allocation2 + $0x58] sm:$0xff]
  %v106 = vld [vmem:[#allocation2 + $0x60] sm:$0xff]
  %v107 = vld [vmem:[#allocation2 + $0x68] sm:$0xff]
  %v108 = vld [vmem:[#allocation2 + $0x70] sm:$0xff]
  %v109 = vld [vmem:[#allocation2 + $0x78] sm:$0xff]
  %v110 = vld [vmem:[#allocation2 + $0x80] sm:$0xff]
  %v111 = vld [vmem:[#allocation2 + $0x88] sm:$0xff]
  %v112 = vld [vmem:[#allocation2 + $0x90] sm:$0xff]
  %v113 = vld [vmem:[#allocation2 + $0x98] sm:$0xff]
  %v114 = vld [vmem:[#allocation2 + $0xa0] sm:$0xff]
  %v115 = vld [vmem:[#allocation2 + $0xa8] sm:$0xff]
  %v116 = vld [vmem:[#allocation2 + $0xb0] sm:$0xff]
  %v117 = vld [vmem:[#allocation2 + $0xb8] sm:$0xff]
  %v118 = vld [vmem:[#allocation2 + $0xc0] sm:$0xff]
  %v119 = vld [vmem:[#allocation2 + $0xc8] sm:$0xff]
  %v120 = vld [vmem:[#allocation2 + $0xd0] sm:$0xff]
  %v121 = vld [vmem:[#allocation2 + $0xd8] sm:$0xff]
  %v122 = vld [vmem:[#allocation2 + $0xe0] sm:$0xff]
  %v123 = vld [vmem:[#allocation2 + $0xe8] sm:$0xff]
  %v124 = vld [vmem:[#allocation2 + $0xf0] sm:$0xff]
  %v125 = vld [vmem:[#allocation2 + $0xf8] sm:$0xff]
  %v126 = vld [vmem:[%s0] sm:$0xff]
  %v127 = vld [vmem:[%s0 + $0x8] sm:$0xff]
  %v128 = vld [vmem:[%s0 + $0x10] sm:$0xff]
  %v129 = vld [vmem:[%s0 + $0x18] sm:$0xff]
  %v130 = vld [vmem:[%s0 + $0x20] sm:$0xff]
  %v131 = vld [vmem:[%s0 + $0x28] sm:$0xff]
  %v132 = vld [vmem:[%s0 + $0x30] sm:$0xff]
  %v133 = vld [vmem:[%s0 + $0x38] sm:$0xff]
  %v134 = vld [vmem:[%s0 + $0x40] sm:$0xff]
  %v135 = vld [vmem:[%s0 + $0x48] sm:$0xff]
  %v136 = vld [vmem:[%s0 + $0x50] sm:$0xff]
  %v137 = vld [vmem:[%s0 + $0x58] sm:$0xff]
  %v138 = vld [vmem:[%s0 + $0x60] sm:$0xff]
  %v139 = vld [vmem:[%s0 + $0x68] sm:$0xff]
  %v140 = vld [vmem:[%s0 + $0x70] sm:$0xff]
  %v141 = vld [vmem:[%s0 + $0x78] sm:$0xff]
  %v142 = vld [vmem:[%s0 + $0x80] sm:$0xff]
  %v143 = vld [vmem:[%s0 + $0x88] sm:$0xff]
  %v144 = vld [vmem:[%s0 + $0x90] sm:$0xff]
  %v145 = vld [vmem:[%s0 + $0x98] sm:$0xff]
  %v146 = vld [vmem:[%s0 + $0xa0] sm:$0xff]
  %v147 = vld [vmem:[%s0 + $0xa8] sm:$0xff]
  %v148 = vld [vmem:[%s0 + $0xb0] sm:$0xff]
  %v149 = vld [vmem:[%s0 + $0xb8] sm:$0xff]
  %v150 = vld [vmem:[%s0 + $0xc0] sm:$0xff]
  %v151 = vld [vmem:[%s0 + $0xc8] sm:$0xff]
  %v152 = vld [vmem:[%s0 + $0xd0] sm:$0xff]
  %v153 = vld [vmem:[%s0 + $0xd8] sm:$0xff]
  %v154 = vld [vmem:[%s0 + $0xe0] sm:$0xff]
  %v155 = vld [vmem:[%s0 + $0xe8] sm:$0xff]
  %v156 = vld [vmem:[%s0 + $0xf0] sm:$0xff]
  %v157 = vld [vmem:[%s0 + $0xf8] sm:$0xff]
  %v190 = vunpack.c.l.b16 %v126
  %v191 = vunpack.c.h.b16 %v126
  %v192 = vunpack.c.l.b16 %v127
  %v193 = vunpack.c.h.b16 %v127
  %v194 = vunpack.c.l.b16 %v128
  %v195 = vunpack.c.h.b16 %v128
  %v196 = vunpack.c.l.b16 %v129
  %v197 = vunpack.c.h.b16 %v129
  %v198 = vunpack.c.l.b16 %v130
  %v199 = vunpack.c.h.b16 %v130
  %v200 = vunpack.c.l.b16 %v131
  %v201 = vunpack.c.h.b16 %v131
  %v202 = vunpack.c.l.b16 %v132
  %v203 = vunpack.c.h.b16 %v132
  %v204 = vunpack.c.l.b16 %v133
  %v205 = vunpack.c.h.b16 %v133
  %v206 = vunpack.c.l.b16 %v134
  %v207 = vunpack.c.h.b16 %v134
  %v208 = vunpack.c.l.b16 %v135
  %v209 = vunpack.c.h.b16 %v135
  %v210 = vunpack.c.l.b16 %v136
  %v211 = vunpack.c.h.b16 %v136
  %v212 = vunpack.c.l.b16 %v137
  %v213 = vunpack.c.h.b16 %v137
  %v214 = vunpack.c.l.b16 %v138
  %v215 = vunpack.c.h.b16 %v138
  %v216 = vunpack.c.l.b16 %v139
  %v217 = vunpack.c.h.b16 %v139
  %v218 = vunpack.c.l.b16 %v140
  %v219 = vunpack.c.h.b16 %v140
  %v220 = vunpack.c.l.b16 %v141
  %v221 = vunpack.c.h.b16 %v141
  %v222 = vunpack.c.l.b16 %v142
  %v223 = vunpack.c.h.b16 %v142
  %v224 = vunpack.c.l.b16 %v143
  %v225 = vunpack.c.h.b16 %v143
  %v226 = vunpack.c.l.b16 %v144
  %v227 = vunpack.c.h.b16 %v144
  %v228 = vunpack.c.l.b16 %v145
  %v229 = vunpack.c.h.b16 %v145
  %v230 = vunpack.c.l.b16 %v146
  %v231 = vunpack.c.h.b16 %v146
  %v232 = vunpack.c.l.b16 %v147
  %v233 = vunpack.c.h.b16 %v147
  %v234 = vunpack.c.l.b16 %v148
  %v235 = vunpack.c.h.b16 %v148
  %v236 = vunpack.c.l.b16 %v149
  %v237 = vunpack.c.h.b16 %v149
  %v238 = vunpack.c.l.b16 %v150
  %v239 = vunpack.c.h.b16 %v150
  %v240 = vunpack.c.l.b16 %v151
  %v241 = vunpack.c.h.b16 %v151
  %v242 = vunpack.c.l.b16 %v152
  %v243 = vunpack.c.h.b16 %v152
  %v244 = vunpack.c.l.b16 %v153
  %v245 = vunpack.c.h.b16 %v153
  %v246 = vunpack.c.l.b16 %v154
  %v247 = vunpack.c.h.b16 %v154
  %v248 = vunpack.c.l.b16 %v155
  %v249 = vunpack.c.h.b16 %v155
  %v250 = vunpack.c.l.b16 %v156
  %v251 = vunpack.c.h.b16 %v156
  %v252 = vunpack.c.l.b16 %v157
  %v253 = vunpack.c.h.b16 %v157
  %v254 = vpack.c.b16 %v192, %v190
  %v255 = vpack.c.b16 %v193, %v191
  %v256 = vpack.c.b16 %v196, %v194
  %v257 = vpack.c.b16 %v197, %v195
  %v258 = vpack.c.b16 %v200, %v198
  %v259 = vpack.c.b16 %v201, %v199
  %v260 = vpack.c.b16 %v204, %v202
  %v261 = vpack.c.b16 %v205, %v203
  %v262 = vpack.c.b16 %v208, %v206
  %v263 = vpack.c.b16 %v209, %v207
  %v264 = vpack.c.b16 %v212, %v210
  %v265 = vpack.c.b16 %v213, %v211
  %v266 = vpack.c.b16 %v216, %v214
  %v267 = vpack.c.b16 %v217, %v215
  %v268 = vpack.c.b16 %v220, %v218
  %v269 = vpack.c.b16 %v221, %v219
  %v270 = vpack.c.b16 %v224, %v222
  %v271 = vpack.c.b16 %v225, %v223
  %v272 = vpack.c.b16 %v228, %v226
  %v273 = vpack.c.b16 %v229, %v227
  %v274 = vpack.c.b16 %v232, %v230
  %v275 = vpack.c.b16 %v233, %v231
  %v276 = vpack.c.b16 %v236, %v234
  %v277 = vpack.c.b16 %v237, %v235
  %v278 = vpack.c.b16 %v240, %v238
  %v279 = vpack.c.b16 %v241, %v239
  %v280 = vpack.c.b16 %v244, %v242
  %v281 = vpack.c.b16 %v245, %v243
  %v282 = vpack.c.b16 %v248, %v246
  %v283 = vpack.c.b16 %v249, %v247
  %v284 = vpack.c.b16 %v252, %v250
  %v285 = vpack.c.b16 %v253, %v251
  %v350 = vunpack.c.l.b16 %v62
  %v351 = vunpack.c.l.b16 %v63
  %v352 = vunpack.c.l.b16 %v64
  %v353 = vunpack.c.l.b16 %v65
  %v354 = vunpack.c.l.b16 %v66
  %v355 = vunpack.c.l.b16 %v67
  %v356 = vunpack.c.l.b16 %v68
  %v357 = vunpack.c.l.b16 %v69
  %v358 = vunpack.c.l.b16 %v70
  %v359 = vunpack.c.l.b16 %v71
  %v360 = vunpack.c.l.b16 %v72
  %v361 = vunpack.c.l.b16 %v73
  %v362 = vunpack.c.l.b16 %v74
  %v363 = vunpack.c.l.b16 %v75
  %v364 = vunpack.c.l.b16 %v76
  %v365 = vunpack.c.l.b16 %v77
  %v366 = vunpack.c.l.b16 %v78
  %v367 = vunpack.c.l.b16 %v79
  %v368 = vunpack.c.l.b16 %v80
  %v369 = vunpack.c.l.b16 %v81
  %v370 = vunpack.c.l.b16 %v82
  %v371 = vunpack.c.l.b16 %v83
  %v372 = vunpack.c.l.b16 %v84
  %v373 = vunpack.c.l.b16 %v85
  %v374 = vunpack.c.l.b16 %v86
  %v375 = vunpack.c.l.b16 %v87
  %v376 = vunpack.c.l.b16 %v88
  %v377 = vunpack.c.l.b16 %v89
  %v378 = vunpack.c.l.b16 %v90
  %v379 = vunpack.c.l.b16 %v91
  %v380 = vunpack.c.l.b16 %v92
  %v381 = vunpack.c.l.b16 %v93
  %v382 = vpack.c.b16 %v351, %v350
  %v383 = vpack.c.b16 %v353, %v352
  %v384 = vpack.c.b16 %v355, %v354
  %v385 = vpack.c.b16 %v357, %v356
  %v386 = vpack.c.b16 %v359, %v358
  %v387 = vpack.c.b16 %v361, %v360
  %v388 = vpack.c.b16 %v363, %v362
  %v389 = vpack.c.b16 %v365, %v364
  %v390 = vpack.c.b16 %v367, %v366
  %v391 = vpack.c.b16 %v369, %v368
  %v392 = vpack.c.b16 %v371, %v370
  %v393 = vpack.c.b16 %v373, %v372
  %v394 = vpack.c.b16 %v375, %v374
  %v395 = vpack.c.b16 %v377, %v376
  %v396 = vpack.c.b16 %v379, %v378
  %v397 = vpack.c.b16 %v381, %v380
  %414 = vmatprep.subr.bf16.mxu0 0
  %415 = vmatpush1.bf16.msra.mxu0 %v389
  %416 = vmatprep.subr.bf16.mxu0 0
  %417 = vmatpush1.bf16.msra.mxu0 %v388
  %418 = vmatprep.subr.bf16.mxu0 0
  %419 = vmatpush1.bf16.msra.mxu0 %v387
  %420 = vmatprep.subr.bf16.mxu0 0
  %421 = vmatpush1.bf16.msra.mxu0 %v386
  %422 = vmatprep.subr.bf16.mxu0 0
  %423 = vmatpush1.bf16.msra.mxu0 %v385
  %424 = vmatprep.subr.bf16.mxu0 0
  %425 = vmatpush1.bf16.msra.mxu0 %v384
  %426 = vmatprep.subr.bf16.mxu0 0
  %427 = vmatpush1.bf16.msra.mxu0 %v383
  %428 = vmatprep.subr.bf16.mxu0 0
  %429 = vmatpush1.bf16.msra.mxu0 %v382
  %430 = vmatprep.subr.bf16.mxu0 0
  %431 = vmatpush2.bf16.msra.mxu0 %v397
  %432 = vmatprep.subr.bf16.mxu0 0
  %433 = vmatpush2.bf16.msra.mxu0 %v396
  %434 = vmatprep.subr.bf16.mxu0 0
  %435 = vmatpush2.bf16.msra.mxu0 %v395
  %436 = vmatprep.subr.bf16.mxu0 0
  %437 = vmatpush2.bf16.msra.mxu0 %v394
  %438 = vmatprep.subr.bf16.mxu0 0
  %439 = vmatpush2.bf16.msra.mxu0 %v393
  %440 = vmatprep.subr.bf16.mxu0 0
  %441 = vmatpush2.bf16.msra.mxu0 %v392
  %442 = vmatprep.subr.bf16.mxu0 0
  %443 = vmatpush2.bf16.msra.mxu0 %v391
  %444 = vmatprep.subr.bf16.mxu0 0
  %445 = vmatpush2.bf16.msra.mxu0 %v390
  %446 = vmatprep.mubr.bf16.mxu0 %v255
  %447 = vmatmul.mubr.bf16.gmra.mxu0 %v254
  %v448 = vpop.f32.mrf.mxu0
  %v449 = vadd.f32 0.0, %v448
  %v450 = vpop.f32.mrf.mxu0
  %v451 = vpop.f32.mrf.mxu0
  %v452 = vadd.f32 0.0, %v451
  %v453 = vpop.f32.mrf.mxu0
  %454 = vmatprep.mubr.bf16.mxu0 %v257
  %455 = vmatmul.mubr.bf16.gmra.mxu0 %v256
  %v456 = vpop.f32.mrf.mxu0
  %v457 = vadd.f32 0.0, %v456
  %v458 = vpop.f32.mrf.mxu0
  %v459 = vpop.f32.mrf.mxu0
  %v460 = vadd.f32 0.0, %v459
  %v461 = vpop.f32.mrf.mxu0
  %462 = vmatprep.mubr.bf16.mxu0 %v259
  %463 = vmatmul.mubr.bf16.gmra.mxu0 %v258
  %v464 = vpop.f32.mrf.mxu0
  %v465 = vadd.f32 0.0, %v464
  %v466 = vpop.f32.mrf.mxu0
  %v467 = vpop.f32.mrf.mxu0
  %v468 = vadd.f32 0.0, %v467
  %v469 = vpop.f32.mrf.mxu0
  %470 = vmatprep.mubr.bf16.mxu0 %v261
  %471 = vmatmul.mubr.bf16.gmra.mxu0 %v260
  %v472 = vpop.f32.mrf.mxu0
  %v473 = vadd.f32 0.0, %v472
  %v474 = vpop.f32.mrf.mxu0
  %v475 = vpop.f32.mrf.mxu0
  %v476 = vadd.f32 0.0, %v475
  %v477 = vpop.f32.mrf.mxu0
  %478 = vmatprep.mubr.bf16.mxu0 %v263
  %479 = vmatmul.mubr.bf16.gmra.mxu0 %v262
  %v480 = vpop.f32.mrf.mxu0
  %v481 = vadd.f32 0.0, %v480
  %v482 = vpop.f32.mrf.mxu0
  %v483 = vpop.f32.mrf.mxu0
  %v484 = vadd.f32 0.0, %v483
  %v485 = vpop.f32.mrf.mxu0
  %486 = vmatprep.mubr.bf16.mxu0 %v265
  %487 = vmatmul.mubr.bf16.gmra.mxu0 %v264
  %v488 = vpop.f32.mrf.mxu0
  %v489 = vadd.f32 0.0, %v488
  %v490 = vpop.f32.mrf.mxu0
  %v491 = vpop.f32.mrf.mxu0
  %v492 = vadd.f32 0.0, %v491
  %v493 = vpop.f32.mrf.mxu0
  %494 = vmatprep.mubr.bf16.mxu0 %v267
  %495 = vmatmul.mubr.bf16.gmra.mxu0 %v266
  %v496 = vpop.f32.mrf.mxu0
  %v497 = vadd.f32 0.0, %v496
  %v498 = vpop.f32.mrf.mxu0
  %v499 = vpop.f32.mrf.mxu0
  %v500 = vadd.f32 0.0, %v499
  %v501 = vpop.f32.mrf.mxu0
  %502 = vmatprep.mubr.bf16.mxu0 %v269
  %503 = vmatmul.mubr.bf16.gmra.mxu0 %v268
  %v504 = vpop.f32.mrf.mxu0
  %v505 = vadd.f32 0.0, %v504
  %v506 = vpop.f32.mrf.mxu0
  %v507 = vpop.f32.mrf.mxu0
  %v508 = vadd.f32 0.0, %v507
  %v509 = vpop.f32.mrf.mxu0
  %510 = vmatprep.mubr.bf16.mxu0 %v271
  %511 = vmatmul.mubr.bf16.gmra.mxu0 %v270
  %v512 = vpop.f32.mrf.mxu0
  %v513 = vadd.f32 0.0, %v512
  %v514 = vpop.f32.mrf.mxu0
  %v515 = vpop.f32.mrf.mxu0
  %v516 = vadd.f32 0.0, %v515
  %v517 = vpop.f32.mrf.mxu0
  %518 = vmatprep.mubr.bf16.mxu0 %v273
  %519 = vmatmul.mubr.bf16.gmra.mxu0 %v272
  %v520 = vpop.f32.mrf.mxu0
  %v521 = vadd.f32 0.0, %v520
  %v522 = vpop.f32.mrf.mxu0
  %v523 = vpop.f32.mrf.mxu0
  %v524 = vadd.f32 0.0, %v523
  %v525 = vpop.f32.mrf.mxu0
  %526 = vmatprep.mubr.bf16.mxu0 %v275
  %527 = vmatmul.mubr.bf16.gmra.mxu0 %v274
  %v528 = vpop.f32.mrf.mxu0
  %v529 = vadd.f32 0.0, %v528
  %v530 = vpop.f32.mrf.mxu0
  %v531 = vpop.f32.mrf.mxu0
  %v532 = vadd.f32 0.0, %v531
  %v533 = vpop.f32.mrf.mxu0
  %534 = vmatprep.mubr.bf16.mxu0 %v277
  %535 = vmatmul.mubr.bf16.gmra.mxu0 %v276
  %v536 = vpop.f32.mrf.mxu0
  %v537 = vadd.f32 0.0, %v536
  %v538 = vpop.f32.mrf.mxu0
  %v539 = vpop.f32.mrf.mxu0
  %v540 = vadd.f32 0.0, %v539
  %v541 = vpop.f32.mrf.mxu0
  %542 = vmatprep.mubr.bf16.mxu0 %v279
  %543 = vmatmul.mubr.bf16.gmra.mxu0 %v278
  %v544 = vpop.f32.mrf.mxu0
  %v545 = vadd.f32 0.0, %v544
  %v546 = vpop.f32.mrf.mxu0
  %v547 = vpop.f32.mrf.mxu0
  %v548 = vadd.f32 0.0, %v547
  %v549 = vpop.f32.mrf.mxu0
  %550 = vmatprep.mubr.bf16.mxu0 %v281
  %551 = vmatmul.mubr.bf16.gmra.mxu0 %v280
  %v552 = vpop.f32.mrf.mxu0
  %v553 = vadd.f32 0.0, %v552
  %v554 = vpop.f32.mrf.mxu0
  %v555 = vpop.f32.mrf.mxu0
  %v556 = vadd.f32 0.0, %v555
  %v557 = vpop.f32.mrf.mxu0
  %558 = vmatprep.mubr.bf16.mxu0 %v283
  %559 = vmatmul.mubr.bf16.gmra.mxu0 %v282
  %v560 = vpop.f32.mrf.mxu0
  %v561 = vadd.f32 0.0, %v560
  %v562 = vpop.f32.mrf.mxu0
  %v563 = vpop.f32.mrf.mxu0
  %v564 = vadd.f32 0.0, %v563
  %v565 = vpop.f32.mrf.mxu0
  %566 = vmatprep.mubr.bf16.mxu0 %v285
  %567 = vmatmul.mubr.bf16.gmra.mxu0 %v284
  %v568 = vpop.f32.mrf.mxu0
  %v569 = vadd.f32 0.0, %v568
  %v570 = vpop.f32.mrf.mxu0
  %v571 = vpop.f32.mrf.mxu0
  %v572 = vadd.f32 0.0, %v571
  %v573 = vpop.f32.mrf.mxu0
  %574 = vdwg.mxu0
  %v575 = vadd.f32 %v94, %v449
  %v576 = vadd.f32 %v95, %v452
  %v577 = vadd.f32 %v96, %v457
  %v578 = vadd.f32 %v97, %v460
  %v579 = vadd.f32 %v98, %v465
  %v580 = vadd.f32 %v99, %v468
  %v581 = vadd.f32 %v100, %v473
  %v582 = vadd.f32 %v101, %v476
  %v583 = vadd.f32 %v102, %v481
  %v584 = vadd.f32 %v103, %v484
  %v585 = vadd.f32 %v104, %v489
  %v586 = vadd.f32 %v105, %v492
  %v587 = vadd.f32 %v106, %v497
  %v588 = vadd.f32 %v107, %v500
  %v589 = vadd.f32 %v108, %v505
  %v590 = vadd.f32 %v109, %v508
  %v591 = vadd.f32 %v110, %v513
  %v592 = vadd.f32 %v111, %v516
  %v593 = vadd.f32 %v112, %v521
  %v594 = vadd.f32 %v113, %v524
  %v595 = vadd.f32 %v114, %v529
  %v596 = vadd.f32 %v115, %v532
  %v597 = vadd.f32 %v116, %v537
  %v598 = vadd.f32 %v117, %v540
  %v599 = vadd.f32 %v118, %v545
  %v600 = vadd.f32 %v119, %v548
  %v601 = vadd.f32 %v120, %v553
  %v602 = vadd.f32 %v121, %v556
  %v603 = vadd.f32 %v122, %v561
  %v604 = vadd.f32 %v123, %v564
  %v605 = vadd.f32 %v124, %v569
  %v606 = vadd.f32 %v125, %v572
  %607 = vst [vmem:[#allocation2] sm:$0xff] %v575
  %608 = vst [vmem:[#allocation2 + $0x8] sm:$0xff] %v576
  %609 = vst [vmem:[#allocation2 + $0x10] sm:$0xff] %v577
  %610 = vst [vmem:[#allocation2 + $0x18] sm:$0xff] %v578
  %611 = vst [vmem:[#allocation2 + $0x20] sm:$0xff] %v579
  %612 = vst [vmem:[#allocation2 + $0x28] sm:$0xff] %v580
  %613 = vst [vmem:[#allocation2 + $0x30] sm:$0xff] %v581
  %614 = vst [vmem:[#allocation2 + $0x38] sm:$0xff] %v582
  %615 = vst [vmem:[#allocation2 + $0x40] sm:$0xff] %v583
  %616 = vst [vmem:[#allocation2 + $0x48] sm:$0xff] %v584
  %617 = vst [vmem:[#allocation2 + $0x50] sm:$0xff] %v585
  %618 = vst [vmem:[#allocation2 + $0x58] sm:$0xff] %v586
  %619 = vst [vmem:[#allocation2 + $0x60] sm:$0xff] %v587
  %620 = vst [vmem:[#allocation2 + $0x68] sm:$0xff] %v588
  %621 = vst [vmem:[#allocation2 + $0x70] sm:$0xff] %v589
  %622 = vst [vmem:[#allocation2 + $0x78] sm:$0xff] %v590
  %623 = vst [vmem:[#allocation2 + $0x80] sm:$0xff] %v591
  %624 = vst [vmem:[#allocation2 + $0x88] sm:$0xff] %v592
  %625 = vst [vmem:[#allocation2 + $0x90] sm:$0xff] %v593
  %626 = vst [vmem:[#allocation2 + $0x98] sm:$0xff] %v594
  %627 = vst [vmem:[#allocation2 + $0xa0] sm:$0xff] %v595
  %628 = vst [vmem:[#allocation2 + $0xa8] sm:$0xff] %v596
  %629 = vst [vmem:[#allocation2 + $0xb0] sm:$0xff] %v597
  %630 = vst [vmem:[#allocation2 + $0xb8] sm:$0xff] %v598
  %631 = vst [vmem:[#allocation2 + $0xc0] sm:$0xff] %v599
  %632 = vst [vmem:[#allocation2 + $0xc8] sm:$0xff] %v600
  %633 = vst [vmem:[#allocation2 + $0xd0] sm:$0xff] %v601
  %634 = vst [vmem:[#allocation2 + $0xd8] sm:$0xff] %v602
  %635 = vst [vmem:[#allocation2 + $0xe0] sm:$0xff] %v603
  %636 = vst [vmem:[#allocation2 + $0xe8] sm:$0xff] %v604
  %637 = vst [vmem:[#allocation2 + $0xf0] sm:$0xff] %v605
  %638 = vst [vmem:[#allocation2 + $0xf8] sm:$0xff] %v606
  // Predicated region
  $region26: #{vgae_forward.4} parent=0 // pred_check
    %p639 = pneg %p21
  $region27: #{vgae_forward.4} parent=0 // pred_check_branch
    %641 = sbr.rel (%p639) target = $region29
  $region28: #{vgae_forward.4} parent=0 // pred_region
    %v642 = vld [vmem:[#allocation2] sm:$0xff]
    %v643 = vld [vmem:[#allocation2 + $0x8] sm:$0xff]
    %v644 = vld [vmem:[#allocation2 + $0x10] sm:$0xff]
    %v645 = vld [vmem:[#allocation2 + $0x18] sm:$0xff]
    %v646 = vld [vmem:[#allocation2 + $0x20] sm:$0xff]
    %v647 = vld [vmem:[#allocation2 + $0x28] sm:$0xff]
    %v648 = vld [vmem:[#allocation2 + $0x30] sm:$0xff]
    %v649 = vld [vmem:[#allocation2 + $0x38] sm:$0xff]
    %v650 = vld [vmem:[#allocation2 + $0x40] sm:$0xff]
    %v651 = vld [vmem:[#allocation2 + $0x48] sm:$0xff]
    %v652 = vld [vmem:[#allocation2 + $0x50] sm:$0xff]
    %v653 = vld [vmem:[#allocation2 + $0x58] sm:$0xff]
    %v654 = vld [vmem:[#allocation2 + $0x60] sm:$0xff]
    %v655 = vld [vmem:[#allocation2 + $0x68] sm:$0xff]
    %v656 = vld [vmem:[#allocation2 + $0x70] sm:$0xff]
    %v657 = vld [vmem:[#allocation2 + $0x78] sm:$0xff]
    %v658 = vld [vmem:[#allocation2 + $0x80] sm:$0xff]
    %v659 = vld [vmem:[#allocation2 + $0x88] sm:$0xff]
    %v660 = vld [vmem:[#allocation2 + $0x90] sm:$0xff]
    %v661 = vld [vmem:[#allocation2 + $0x98] sm:$0xff]
    %v662 = vld [vmem:[#allocation2 + $0xa0] sm:$0xff]
    %v663 = vld [vmem:[#allocation2 + $0xa8] sm:$0xff]
    %v664 = vld [vmem:[#allocation2 + $0xb0] sm:$0xff]
    %v665 = vld [vmem:[#allocation2 + $0xb8] sm:$0xff]
    %v666 = vld [vmem:[#allocation2 + $0xc0] sm:$0xff]
    %v667 = vld [vmem:[#allocation2 + $0xc8] sm:$0xff]
    %v668 = vld [vmem:[#allocation2 + $0xd0] sm:$0xff]
    %v669 = vld [vmem:[#allocation2 + $0xd8] sm:$0xff]
    %v670 = vld [vmem:[#allocation2 + $0xe0] sm:$0xff]
    %v671 = vld [vmem:[#allocation2 + $0xe8] sm:$0xff]
    %v672 = vld [vmem:[#allocation2 + $0xf0] sm:$0xff]
    %v673 = vld [vmem:[#allocation2 + $0xf8] sm:$0xff]
    %v674 = vpack.c.bf16 %v643, %v642
    %v675 = vpack.c.bf16 %v645, %v644
    %v676 = vpack.c.bf16 %v647, %v646
    %v677 = vpack.c.bf16 %v649, %v648
    %v678 = vpack.c.bf16 %v651, %v650
    %v679 = vpack.c.bf16 %v653, %v652
    %v680 = vpack.c.bf16 %v655, %v654
    %v681 = vpack.c.bf16 %v657, %v656
    %v682 = vpack.c.bf16 %v659, %v658
    %v683 = vpack.c.bf16 %v661, %v660
    %v684 = vpack.c.bf16 %v663, %v662
    %v685 = vpack.c.bf16 %v665, %v664
    %v686 = vpack.c.bf16 %v667, %v666
    %v687 = vpack.c.bf16 %v669, %v668
    %v688 = vpack.c.bf16 %v671, %v670
    %v689 = vpack.c.bf16 %v673, %v672
    %v690 = vld [vmem:[%s2] sm:$0xf]
    %v691 = vld [vmem:[%s2 + $0x4] sm:$0xf]
    %v692 = vld [vmem:[%s2 + $0x8] sm:$0xf]
    %v693 = vld [vmem:[%s2 + $0xc] sm:$0xf]
    %v694 = vld [vmem:[%s2 + $0x10] sm:$0xf]
    %v695 = vld [vmem:[%s2 + $0x14] sm:$0xf]
    %v696 = vld [vmem:[%s2 + $0x18] sm:$0xf]
    %v697 = vld [vmem:[%s2 + $0x1c] sm:$0xf]
    %v698 = vld [vmem:[%s2 + $0x20] sm:$0xf]
    %v699 = vld [vmem:[%s2 + $0x24] sm:$0xf]
    %v700 = vld [vmem:[%s2 + $0x28] sm:$0xf]
    %v701 = vld [vmem:[%s2 + $0x2c] sm:$0xf]
    %v702 = vld [vmem:[%s2 + $0x30] sm:$0xf]
    %v703 = vld [vmem:[%s2 + $0x34] sm:$0xf]
    %v704 = vld [vmem:[%s2 + $0x38] sm:$0xf]
    %v705 = vld [vmem:[%s2 + $0x3c] sm:$0xf]
    %v722 = vunpack.c.l.b16 %v690
    %v723 = vunpack.c.l.b16 %v691
    %v724 = vunpack.c.l.b16 %v692
    %v725 = vunpack.c.l.b16 %v693
    %v726 = vunpack.c.l.b16 %v694
    %v727 = vunpack.c.l.b16 %v695
    %v728 = vunpack.c.l.b16 %v696
    %v729 = vunpack.c.l.b16 %v697
    %v730 = vunpack.c.l.b16 %v698
    %v731 = vunpack.c.l.b16 %v699
    %v732 = vunpack.c.l.b16 %v700
    %v733 = vunpack.c.l.b16 %v701
    %v734 = vunpack.c.l.b16 %v702
    %v735 = vunpack.c.l.b16 %v703
    %v736 = vunpack.c.l.b16 %v704
    %v737 = vunpack.c.l.b16 %v705
    %v738 = vpack.c.b16 %v723, %v722
    %v739 = vpack.c.b16 %v725, %v724
    %v740 = vpack.c.b16 %v727, %v726
    %v741 = vpack.c.b16 %v729, %v728
    %v742 = vpack.c.b16 %v731, %v730
    %v743 = vpack.c.b16 %v733, %v732
    %v744 = vpack.c.b16 %v735, %v734
    %v745 = vpack.c.b16 %v737, %v736
    %754 = vmatprep.subr.bf16.mxu0 0
    %755 = vmatpush1.bf16.msra.mxu0 %v745
    %756 = vmatprep.subr.bf16.mxu0 0
    %757 = vmatpush1.bf16.msra.mxu0 %v744
    %758 = vmatprep.subr.bf16.mxu0 0
    %759 = vmatpush1.bf16.msra.mxu0 %v743
    %760 = vmatprep.subr.bf16.mxu0 0
    %761 = vmatpush1.bf16.msra.mxu0 %v742
    %762 = vmatprep.subr.bf16.mxu0 0
    %763 = vmatpush1.bf16.msra.mxu0 %v741
    %764 = vmatprep.subr.bf16.mxu0 0
    %765 = vmatpush1.bf16.msra.mxu0 %v740
    %766 = vmatprep.subr.bf16.mxu0 0
    %767 = vmatpush1.bf16.msra.mxu0 %v739
    %768 = vmatprep.subr.bf16.mxu0 0
    %769 = vmatpush1.bf16.msra.mxu0 %v738
    %770 = vmatprep.subr.bf16.mxu0 0
    %771 = vmatpush2.bf16.msra.mxu0 0
    %772 = vmatprep.subr.bf16.mxu0 0
    %773 = vmatpush2.bf16.msra.mxu0 0
    %774 = vmatprep.subr.bf16.mxu0 0
    %775 = vmatpush2.bf16.msra.mxu0 0
    %776 = vmatprep.subr.bf16.mxu0 0
    %777 = vmatpush2.bf16.msra.mxu0 0
    %778 = vmatprep.subr.bf16.mxu0 0
    %779 = vmatpush2.bf16.msra.mxu0 0
    %780 = vmatprep.subr.bf16.mxu0 0
    %781 = vmatpush2.bf16.msra.mxu0 0
    %782 = vmatprep.subr.bf16.mxu0 0
    %783 = vmatpush2.bf16.msra.mxu0 0
    %784 = vmatprep.subr.bf16.mxu0 0
    %785 = vmatpush2.bf16.msra.mxu0 0
    %786 = vmatprep.mubr.bf16.mxu0 0
    %787 = vmatmul.mubr.bf16.gmra.mxu0 %v674
    %v788 = vpop.f32.mrf.mxu0
    %v789 = vadd.f32 0.0, %v788
    %v790 = vpop.f32.mrf.mxu0
    %v791 = vpop.f32.mrf.mxu0
    %v792 = vadd.f32 0.0, %v791
    %v793 = vpop.f32.mrf.mxu0
    %794 = vmatprep.mubr.bf16.mxu0 0
    %795 = vmatmul.mubr.bf16.gmra.mxu0 %v675
    %v796 = vpop.f32.mrf.mxu0
    %v797 = vadd.f32 0.0, %v796
    %v798 = vpop.f32.mrf.mxu0
    %v799 = vpop.f32.mrf.mxu0
    %v800 = vadd.f32 0.0, %v799
    %v801 = vpop.f32.mrf.mxu0
    %802 = vmatprep.mubr.bf16.mxu0 0
    %803 = vmatmul.mubr.bf16.gmra.mxu0 %v676
    %v804 = vpop.f32.mrf.mxu0
    %v805 = vadd.f32 0.0, %v804
    %v806 = vpop.f32.mrf.mxu0
    %v807 = vpop.f32.mrf.mxu0
    %v808 = vadd.f32 0.0, %v807
    %v809 = vpop.f32.mrf.mxu0
    %810 = vmatprep.mubr.bf16.mxu0 0
    %811 = vmatmul.mubr.bf16.gmra.mxu0 %v677
    %v812 = vpop.f32.mrf.mxu0
    %v813 = vadd.f32 0.0, %v812
    %v814 = vpop.f32.mrf.mxu0
    %v815 = vpop.f32.mrf.mxu0
    %v816 = vadd.f32 0.0, %v815
    %v817 = vpop.f32.mrf.mxu0
    %818 = vmatprep.mubr.bf16.mxu0 0
    %819 = vmatmul.mubr.bf16.gmra.mxu0 %v678
    %v820 = vpop.f32.mrf.mxu0
    %v821 = vadd.f32 0.0, %v820
    %v822 = vpop.f32.mrf.mxu0
    %v823 = vpop.f32.mrf.mxu0
    %v824 = vadd.f32 0.0, %v823
    %v825 = vpop.f32.mrf.mxu0
    %826 = vmatprep.mubr.bf16.mxu0 0
    %827 = vmatmul.mubr.bf16.gmra.mxu0 %v679
    %v828 = vpop.f32.mrf.mxu0
    %v829 = vadd.f32 0.0, %v828
    %v830 = vpop.f32.mrf.mxu0
    %v831 = vpop.f32.mrf.mxu0
    %v832 = vadd.f32 0.0, %v831
    %v833 = vpop.f32.mrf.mxu0
    %834 = vmatprep.mubr.bf16.mxu0 0
    %835 = vmatmul.mubr.bf16.gmra.mxu0 %v680
    %v836 = vpop.f32.mrf.mxu0
    %v837 = vadd.f32 0.0, %v836
    %v838 = vpop.f32.mrf.mxu0
    %v839 = vpop.f32.mrf.mxu0
    %v840 = vadd.f32 0.0, %v839
    %v841 = vpop.f32.mrf.mxu0
    %842 = vmatprep.mubr.bf16.mxu0 0
    %843 = vmatmul.mubr.bf16.gmra.mxu0 %v681
    %v844 = vpop.f32.mrf.mxu0
    %v845 = vadd.f32 0.0, %v844
    %v846 = vpop.f32.mrf.mxu0
    %v847 = vpop.f32.mrf.mxu0
    %v848 = vadd.f32 0.0, %v847
    %v849 = vpop.f32.mrf.mxu0
    %850 = vmatprep.mubr.bf16.mxu0 0
    %851 = vmatmul.mubr.bf16.gmra.mxu0 %v682
    %v852 = vpop.f32.mrf.mxu0
    %v853 = vadd.f32 0.0, %v852
    %v854 = vpop.f32.mrf.mxu0
    %v855 = vpop.f32.mrf.mxu0
    %v856 = vadd.f32 0.0, %v855
    %v857 = vpop.f32.mrf.mxu0
    %858 = vmatprep.mubr.bf16.mxu0 0
    %859 = vmatmul.mubr.bf16.gmra.mxu0 %v683
    %v860 = vpop.f32.mrf.mxu0
    %v861 = vadd.f32 0.0, %v860
    %v862 = vpop.f32.mrf.mxu0
    %v863 = vpop.f32.mrf.mxu0
    %v864 = vadd.f32 0.0, %v863
    %v865 = vpop.f32.mrf.mxu0
    %866 = vmatprep.mubr.bf16.mxu0 0
    %867 = vmatmul.mubr.bf16.gmra.mxu0 %v684
    %v868 = vpop.f32.mrf.mxu0
    %v869 = vadd.f32 0.0, %v868
    %v870 = vpop.f32.mrf.mxu0
    %v871 = vpop.f32.mrf.mxu0
    %v872 = vadd.f32 0.0, %v871
    %v873 = vpop.f32.mrf.mxu0
    %874 = vmatprep.mubr.bf16.mxu0 0
    %875 = vmatmul.mubr.bf16.gmra.mxu0 %v685
    %v876 = vpop.f32.mrf.mxu0
    %v877 = vadd.f32 0.0, %v876
    %v878 = vpop.f32.mrf.mxu0
    %v879 = vpop.f32.mrf.mxu0
    %v880 = vadd.f32 0.0, %v879
    %v881 = vpop.f32.mrf.mxu0
    %882 = vmatprep.mubr.bf16.mxu0 0
    %883 = vmatmul.mubr.bf16.gmra.mxu0 %v686
    %v884 = vpop.f32.mrf.mxu0
    %v885 = vadd.f32 0.0, %v884
    %v886 = vpop.f32.mrf.mxu0
    %v887 = vpop.f32.mrf.mxu0
    %v888 = vadd.f32 0.0, %v887
    %v889 = vpop.f32.mrf.mxu0
    %890 = vmatprep.mubr.bf16.mxu0 0
    %891 = vmatmul.mubr.bf16.gmra.mxu0 %v687
    %v892 = vpop.f32.mrf.mxu0
    %v893 = vadd.f32 0.0, %v892
    %v894 = vpop.f32.mrf.mxu0
    %v895 = vpop.f32.mrf.mxu0
    %v896 = vadd.f32 0.0, %v895
    %v897 = vpop.f32.mrf.mxu0
    %898 = vmatprep.mubr.bf16.mxu0 0
    %899 = vmatmul.mubr.bf16.gmra.mxu0 %v688
    %v900 = vpop.f32.mrf.mxu0
    %v901 = vadd.f32 0.0, %v900
    %v902 = vpop.f32.mrf.mxu0
    %v903 = vpop.f32.mrf.mxu0
    %v904 = vadd.f32 0.0, %v903
    %v905 = vpop.f32.mrf.mxu0
    %906 = vmatprep.mubr.bf16.mxu0 0
    %907 = vmatmul.mubr.bf16.gmra.mxu0 %v689
    %v908 = vpop.f32.mrf.mxu0
    %v909 = vadd.f32 0.0, %v908
    %v910 = vpop.f32.mrf.mxu0
    %v911 = vpop.f32.mrf.mxu0
    %v912 = vadd.f32 0.0, %v911
    %v913 = vpop.f32.mrf.mxu0
    %914 = vdwg.mxu0
    %v915 = vmax.f32 %v789, 0.0
    %v916 = vmax.f32 %v792, 0.0
    %v917 = vmax.f32 %v797, 0.0
    %v918 = vmax.f32 %v800, 0.0
    %v919 = vmax.f32 %v805, 0.0
    %v920 = vmax.f32 %v808, 0.0
    %v921 = vmax.f32 %v813, 0.0
    %v922 = vmax.f32 %v816, 0.0
    %v923 = vmax.f32 %v821, 0.0
    %v924 = vmax.f32 %v824, 0.0
    %v925 = vmax.f32 %v829, 0.0
    %v926 = vmax.f32 %v832, 0.0
    %v927 = vmax.f32 %v837, 0.0
    %v928 = vmax.f32 %v840, 0.0
    %v929 = vmax.f32 %v845, 0.0
    %v930 = vmax.f32 %v848, 0.0
    %v931 = vmax.f32 %v853, 0.0
    %v932 = vmax.f32 %v856, 0.0
    %v933 = vmax.f32 %v861, 0.0
    %v934 = vmax.f32 %v864, 0.0
    %v935 = vmax.f32 %v869, 0.0
    %v936 = vmax.f32 %v872, 0.0
    %v937 = vmax.f32 %v877, 0.0
    %v938 = vmax.f32 %v880, 0.0
    %v939 = vmax.f32 %v885, 0.0
    %v940 = vmax.f32 %v888, 0.0
    %v941 = vmax.f32 %v893, 0.0
    %v942 = vmax.f32 %v896, 0.0
    %v943 = vmax.f32 %v901, 0.0
    %v944 = vmax.f32 %v904, 0.0
    %v945 = vmax.f32 %v909, 0.0
    %v946 = vmax.f32 %v912, 0.0
    %v947 = vld [vmem:[%s3] sm:$0xf]
    %v948 = vld [vmem:[%s3 + $0x4] sm:$0xf]
    %v949 = vld [vmem:[%s3 + $0x8] sm:$0xf]
    %v950 = vld [vmem:[%s3 + $0xc] sm:$0xf]
    %v951 = vld [vmem:[%s3 + $0x10] sm:$0xf]
    %v952 = vld [vmem:[%s3 + $0x14] sm:$0xf]
    %v953 = vld [vmem:[%s3 + $0x18] sm:$0xf]
    %v954 = vld [vmem:[%s3 + $0x1c] sm:$0xf]
    %v955 = vld [vmem:[%s3 + $0x20] sm:$0xf]
    %v956 = vld [vmem:[%s3 + $0x24] sm:$0xf]
    %v957 = vld [vmem:[%s3 + $0x28] sm:$0xf]
    %v958 = vld [vmem:[%s3 + $0x2c] sm:$0xf]
    %v959 = vld [vmem:[%s3 + $0x30] sm:$0xf]
    %v960 = vld [vmem:[%s3 + $0x34] sm:$0xf]
    %v961 = vld [vmem:[%s3 + $0x38] sm:$0xf]
    %v962 = vld [vmem:[%s3 + $0x3c] sm:$0xf]
    %v979 = vunpack.c.l.b16 %v947
    %v980 = vunpack.c.l.b16 %v948
    %v981 = vunpack.c.l.b16 %v949
    %v982 = vunpack.c.l.b16 %v950
    %v983 = vunpack.c.l.b16 %v951
    %v984 = vunpack.c.l.b16 %v952
    %v985 = vunpack.c.l.b16 %v953
    %v986 = vunpack.c.l.b16 %v954
    %v987 = vunpack.c.l.b16 %v955
    %v988 = vunpack.c.l.b16 %v956
    %v989 = vunpack.c.l.b16 %v957
    %v990 = vunpack.c.l.b16 %v958
    %v991 = vunpack.c.l.b16 %v959
    %v992 = vunpack.c.l.b16 %v960
    %v993 = vunpack.c.l.b16 %v961
    %v994 = vunpack.c.l.b16 %v962
    %v995 = vpack.c.b16 %v980, %v979
    %v996 = vpack.c.b16 %v982, %v981
    %v997 = vpack.c.b16 %v984, %v983
    %v998 = vpack.c.b16 %v986, %v985
    %v999 = vpack.c.b16 %v988, %v987
    %v1000 = vpack.c.b16 %v990, %v989
    %v1001 = vpack.c.b16 %v992, %v991
    %v1002 = vpack.c.b16 %v994, %v993
    %1011 = vmatprep.subr.bf16.mxu0 0
    %1012 = vmatpush1.bf16.msra.mxu0 %v1002
    %1013 = vmatprep.subr.bf16.mxu0 0
    %1014 = vmatpush1.bf16.msra.mxu0 %v1001
    %1015 = vmatprep.subr.bf16.mxu0 0
    %1016 = vmatpush1.bf16.msra.mxu0 %v1000
    %1017 = vmatprep.subr.bf16.mxu0 0
    %1018 = vmatpush1.bf16.msra.mxu0 %v999
    %1019 = vmatprep.subr.bf16.mxu0 0
    %1020 = vmatpush1.bf16.msra.mxu0 %v998
    %1021 = vmatprep.subr.bf16.mxu0 0
    %1022 = vmatpush1.bf16.msra.mxu0 %v997
    %1023 = vmatprep.subr.bf16.mxu0 0
    %1024 = vmatpush1.bf16.msra.mxu0 %v996
    %1025 = vmatprep.subr.bf16.mxu0 0
    %1026 = vmatpush1.bf16.msra.mxu0 %v995
    %1027 = vmatprep.subr.bf16.mxu0 0
    %1028 = vmatpush2.bf16.msra.mxu0 0
    %1029 = vmatprep.subr.bf16.mxu0 0
    %1030 = vmatpush2.bf16.msra.mxu0 0
    %1031 = vmatprep.subr.bf16.mxu0 0
    %1032 = vmatpush2.bf16.msra.mxu0 0
    %1033 = vmatprep.subr.bf16.mxu0 0
    %1034 = vmatpush2.bf16.msra.mxu0 0
    %1035 = vmatprep.subr.bf16.mxu0 0
    %1036 = vmatpush2.bf16.msra.mxu0 0
    %1037 = vmatprep.subr.bf16.mxu0 0
    %1038 = vmatpush2.bf16.msra.mxu0 0
    %1039 = vmatprep.subr.bf16.mxu0 0
    %1040 = vmatpush2.bf16.msra.mxu0 0
    %1041 = vmatprep.subr.bf16.mxu0 0
    %1042 = vmatpush2.bf16.msra.mxu0 0
    %1043 = vmatprep.mubr.bf16.mxu0 0
    %1044 = vmatmul.mubr.bf16.gmra.mxu0 %v674
    %v1045 = vpop.f32.mrf.mxu0
    %v1046 = vadd.f32 0.0, %v1045
    %v1047 = vpop.f32.mrf.mxu0
    %v1048 = vpop.f32.mrf.mxu0
    %v1049 = vadd.f32 0.0, %v1048
    %v1050 = vpop.f32.mrf.mxu0
    %1051 = vmatprep.mubr.bf16.mxu0 0
    %1052 = vmatmul.mubr.bf16.gmra.mxu0 %v675
    %v1053 = vpop.f32.mrf.mxu0
    %v1054 = vadd.f32 0.0, %v1053
    %v1055 = vpop.f32.mrf.mxu0
    %v1056 = vpop.f32.mrf.mxu0
    %v1057 = vadd.f32 0.0, %v1056
    %v1058 = vpop.f32.mrf.mxu0
    %1059 = vmatprep.mubr.bf16.mxu0 0
    %1060 = vmatmul.mubr.bf16.gmra.mxu0 %v676
    %v1061 = vpop.f32.mrf.mxu0
    %v1062 = vadd.f32 0.0, %v1061
    %v1063 = vpop.f32.mrf.mxu0
    %v1064 = vpop.f32.mrf.mxu0
    %v1065 = vadd.f32 0.0, %v1064
    %v1066 = vpop.f32.mrf.mxu0
    %1067 = vmatprep.mubr.bf16.mxu0 0
    %1068 = vmatmul.mubr.bf16.gmra.mxu0 %v677
    %v1069 = vpop.f32.mrf.mxu0
    %v1070 = vadd.f32 0.0, %v1069
    %v1071 = vpop.f32.mrf.mxu0
    %v1072 = vpop.f32.mrf.mxu0
    %v1073 = vadd.f32 0.0, %v1072
    %v1074 = vpop.f32.mrf.mxu0
    %1075 = vmatprep.mubr.bf16.mxu0 0
    %1076 = vmatmul.mubr.bf16.gmra.mxu0 %v678
    %v1077 = vpop.f32.mrf.mxu0
    %v1078 = vadd.f32 0.0, %v1077
    %v1079 = vpop.f32.mrf.mxu0
    %v1080 = vpop.f32.mrf.mxu0
    %v1081 = vadd.f32 0.0, %v1080
    %v1082 = vpop.f32.mrf.mxu0
    %1083 = vmatprep.mubr.bf16.mxu0 0
    %1084 = vmatmul.mubr.bf16.gmra.mxu0 %v679
    %v1085 = vpop.f32.mrf.mxu0
    %v1086 = vadd.f32 0.0, %v1085
    %v1087 = vpop.f32.mrf.mxu0
    %v1088 = vpop.f32.mrf.mxu0
    %v1089 = vadd.f32 0.0, %v1088
    %v1090 = vpop.f32.mrf.mxu0
    %1091 = vmatprep.mubr.bf16.mxu0 0
    %1092 = vmatmul.mubr.bf16.gmra.mxu0 %v680
    %v1093 = vpop.f32.mrf.mxu0
    %v1094 = vadd.f32 0.0, %v1093
    %v1095 = vpop.f32.mrf.mxu0
    %v1096 = vpop.f32.mrf.mxu0
    %v1097 = vadd.f32 0.0, %v1096
    %v1098 = vpop.f32.mrf.mxu0
    %1099 = vmatprep.mubr.bf16.mxu0 0
    %1100 = vmatmul.mubr.bf16.gmra.mxu0 %v681
    %v1101 = vpop.f32.mrf.mxu0
    %v1102 = vadd.f32 0.0, %v1101
    %v1103 = vpop.f32.mrf.mxu0
    %v1104 = vpop.f32.mrf.mxu0
    %v1105 = vadd.f32 0.0, %v1104
    %v1106 = vpop.f32.mrf.mxu0
    %1107 = vmatprep.mubr.bf16.mxu0 0
    %1108 = vmatmul.mubr.bf16.gmra.mxu0 %v682
    %v1109 = vpop.f32.mrf.mxu0
    %v1110 = vadd.f32 0.0, %v1109
    %v1111 = vpop.f32.mrf.mxu0
    %v1112 = vpop.f32.mrf.mxu0
    %v1113 = vadd.f32 0.0, %v1112
    %v1114 = vpop.f32.mrf.mxu0
    %1115 = vmatprep.mubr.bf16.mxu0 0
    %1116 = vmatmul.mubr.bf16.gmra.mxu0 %v683
    %v1117 = vpop.f32.mrf.mxu0
    %v1118 = vadd.f32 0.0, %v1117
    %v1119 = vpop.f32.mrf.mxu0
    %v1120 = vpop.f32.mrf.mxu0
    %v1121 = vadd.f32 0.0, %v1120
    %v1122 = vpop.f32.mrf.mxu0
    %1123 = vmatprep.mubr.bf16.mxu0 0
    %1124 = vmatmul.mubr.bf16.gmra.mxu0 %v684
    %v1125 = vpop.f32.mrf.mxu0
    %v1126 = vadd.f32 0.0, %v1125
    %v1127 = vpop.f32.mrf.mxu0
    %v1128 = vpop.f32.mrf.mxu0
    %v1129 = vadd.f32 0.0, %v1128
    %v1130 = vpop.f32.mrf.mxu0
    %1131 = vmatprep.mubr.bf16.mxu0 0
    %1132 = vmatmul.mubr.bf16.gmra.mxu0 %v685
    %v1133 = vpop.f32.mrf.mxu0
    %v1134 = vadd.f32 0.0, %v1133
    %v1135 = vpop.f32.mrf.mxu0
    %v1136 = vpop.f32.mrf.mxu0
    %v1137 = vadd.f32 0.0, %v1136
    %v1138 = vpop.f32.mrf.mxu0
    %1139 = vmatprep.mubr.bf16.mxu0 0
    %1140 = vmatmul.mubr.bf16.gmra.mxu0 %v686
    %v1141 = vpop.f32.mrf.mxu0
    %v1142 = vadd.f32 0.0, %v1141
    %v1143 = vpop.f32.mrf.mxu0
    %v1144 = vpop.f32.mrf.mxu0
    %v1145 = vadd.f32 0.0, %v1144
    %v1146 = vpop.f32.mrf.mxu0
    %1147 = vmatprep.mubr.bf16.mxu0 0
    %1148 = vmatmul.mubr.bf16.gmra.mxu0 %v687
    %v1149 = vpop.f32.mrf.mxu0
    %v1150 = vadd.f32 0.0, %v1149
    %v1151 = vpop.f32.mrf.mxu0
    %v1152 = vpop.f32.mrf.mxu0
    %v1153 = vadd.f32 0.0, %v1152
    %v1154 = vpop.f32.mrf.mxu0
    %1155 = vmatprep.mubr.bf16.mxu0 0
    %1156 = vmatmul.mubr.bf16.gmra.mxu0 %v688
    %v1157 = vpop.f32.mrf.mxu0
    %v1158 = vadd.f32 0.0, %v1157
    %v1159 = vpop.f32.mrf.mxu0
    %v1160 = vpop.f32.mrf.mxu0
    %v1161 = vadd.f32 0.0, %v1160
    %v1162 = vpop.f32.mrf.mxu0
    %1163 = vmatprep.mubr.bf16.mxu0 0
    %1164 = vmatmul.mubr.bf16.gmra.mxu0 %v689
    %v1165 = vpop.f32.mrf.mxu0
    %v1166 = vadd.f32 0.0, %v1165
    %v1167 = vpop.f32.mrf.mxu0
    %v1168 = vpop.f32.mrf.mxu0
    %v1169 = vadd.f32 0.0, %v1168
    %v1170 = vpop.f32.mrf.mxu0
    %1171 = vdwg.mxu0
    %v1172 = vmax.f32 %v1046, 0.0
    %v1173 = vmax.f32 %v1049, 0.0
    %v1174 = vmax.f32 %v1054, 0.0
    %v1175 = vmax.f32 %v1057, 0.0
    %v1176 = vmax.f32 %v1062, 0.0
    %v1177 = vmax.f32 %v1065, 0.0
    %v1178 = vmax.f32 %v1070, 0.0
    %v1179 = vmax.f32 %v1073, 0.0
    %v1180 = vmax.f32 %v1078, 0.0
    %v1181 = vmax.f32 %v1081, 0.0
    %v1182 = vmax.f32 %v1086, 0.0
    %v1183 = vmax.f32 %v1089, 0.0
    %v1184 = vmax.f32 %v1094, 0.0
    %v1185 = vmax.f32 %v1097, 0.0
    %v1186 = vmax.f32 %v1102, 0.0
    %v1187 = vmax.f32 %v1105, 0.0
    %v1188 = vmax.f32 %v1110, 0.0
    %v1189 = vmax.f32 %v1113, 0.0
    %v1190 = vmax.f32 %v1118, 0.0
    %v1191 = vmax.f32 %v1121, 0.0
    %v1192 = vmax.f32 %v1126, 0.0
    %v1193 = vmax.f32 %v1129, 0.0
    %v1194 = vmax.f32 %v1134, 0.0
    %v1195 = vmax.f32 %v1137, 0.0
    %v1196 = vmax.f32 %v1142, 0.0
    %v1197 = vmax.f32 %v1145, 0.0
    %v1198 = vmax.f32 %v1150, 0.0
    %v1199 = vmax.f32 %v1153, 0.0
    %v1200 = vmax.f32 %v1158, 0.0
    %v1201 = vmax.f32 %v1161, 0.0
    %v1202 = vmax.f32 %v1166, 0.0
    %v1203 = vmax.f32 %v1169, 0.0
    %v1204 = vld [vmem:[%s4] sm:$0xff]
    %v1205 = vld [vmem:[%s4 + $0x8] sm:$0xff]
    %v1206 = vld [vmem:[%s4 + $0x10] sm:$0xff]
    %v1207 = vld [vmem:[%s4 + $0x18] sm:$0xff]
    %v1208 = vld [vmem:[%s4 + $0x20] sm:$0xff]
    %v1209 = vld [vmem:[%s4 + $0x28] sm:$0xff]
    %v1210 = vld [vmem:[%s4 + $0x30] sm:$0xff]
    %v1211 = vld [vmem:[%s4 + $0x38] sm:$0xff]
    %v1212 = vld [vmem:[%s4 + $0x40] sm:$0xff]
    %v1213 = vld [vmem:[%s4 + $0x48] sm:$0xff]
    %v1214 = vld [vmem:[%s4 + $0x50] sm:$0xff]
    %v1215 = vld [vmem:[%s4 + $0x58] sm:$0xff]
    %v1216 = vld [vmem:[%s4 + $0x60] sm:$0xff]
    %v1217 = vld [vmem:[%s4 + $0x68] sm:$0xff]
    %v1218 = vld [vmem:[%s4 + $0x70] sm:$0xff]
    %v1219 = vld [vmem:[%s4 + $0x78] sm:$0xff]
    %v1220 = vld [vmem:[%s4 + $0x80] sm:$0xff]
    %v1221 = vld [vmem:[%s4 + $0x88] sm:$0xff]
    %v1222 = vld [vmem:[%s4 + $0x90] sm:$0xff]
    %v1223 = vld [vmem:[%s4 + $0x98] sm:$0xff]
    %v1224 = vld [vmem:[%s4 + $0xa0] sm:$0xff]
    %v1225 = vld [vmem:[%s4 + $0xa8] sm:$0xff]
    %v1226 = vld [vmem:[%s4 + $0xb0] sm:$0xff]
    %v1227 = vld [vmem:[%s4 + $0xb8] sm:$0xff]
    %v1228 = vld [vmem:[%s4 + $0xc0] sm:$0xff]
    %v1229 = vld [vmem:[%s4 + $0xc8] sm:$0xff]
    %v1230 = vld [vmem:[%s4 + $0xd0] sm:$0xff]
    %v1231 = vld [vmem:[%s4 + $0xd8] sm:$0xff]
    %v1232 = vld [vmem:[%s4 + $0xe0] sm:$0xff]
    %v1233 = vld [vmem:[%s4 + $0xe8] sm:$0xff]
    %v1234 = vld [vmem:[%s4 + $0xf0] sm:$0xff]
    %v1235 = vld [vmem:[%s4 + $0xf8] sm:$0xff]
    %v1236 = vmul.f32 %v1172, 1.442695
    %v1237 = vpow.pop %v1236
    %v1238 = vmul.f32 %v1173, 1.442695
    %v1239 = vpow.pop %v1238
    %v1240 = vmul.f32 %v1174, 1.442695
    %v1241 = vpow.pop %v1240
    %v1242 = vmul.f32 %v1175, 1.442695
    %v1243 = vpow.pop %v1242
    %v1244 = vmul.f32 %v1176, 1.442695
    %v1245 = vpow.pop %v1244
    %v1246 = vmul.f32 %v1177, 1.442695
    %v1247 = vpow.pop %v1246
    %v1248 = vmul.f32 %v1178, 1.442695
    %v1249 = vpow.pop %v1248
    %v1250 = vmul.f32 %v1179, 1.442695
    %v1251 = vpow.pop %v1250
    %v1252 = vmul.f32 %v1180, 1.442695
    %v1253 = vpow.pop %v1252
    %v1254 = vmul.f32 %v1181, 1.442695
    %v1255 = vpow.pop %v1254
    %v1256 = vmul.f32 %v1182, 1.442695
    %v1257 = vpow.pop %v1256
    %v1258 = vmul.f32 %v1183, 1.442695
    %v1259 = vpow.pop %v1258
    %v1260 = vmul.f32 %v1184, 1.442695
    %v1261 = vpow.pop %v1260
    %v1262 = vmul.f32 %v1185, 1.442695
    %v1263 = vpow.pop %v1262
    %v1264 = vmul.f32 %v1186, 1.442695
    %v1265 = vpow.pop %v1264
    %v1266 = vmul.f32 %v1187, 1.442695
    %v1267 = vpow.pop %v1266
    %v1268 = vmul.f32 %v1188, 1.442695
    %v1269 = vpow.pop %v1268
    %v1270 = vmul.f32 %v1189, 1.442695
    %v1271 = vpow.pop %v1270
    %v1272 = vmul.f32 %v1190, 1.442695
    %v1273 = vpow.pop %v1272
    %v1274 = vmul.f32 %v1191, 1.442695
    %v1275 = vpow.pop %v1274
    %v1276 = vmul.f32 %v1192, 1.442695
    %v1277 = vpow.pop %v1276
    %v1278 = vmul.f32 %v1193, 1.442695
    %v1279 = vpow.pop %v1278
    %v1280 = vmul.f32 %v1194, 1.442695
    %v1281 = vpow.pop %v1280
    %v1282 = vmul.f32 %v1195, 1.442695
    %v1283 = vpow.pop %v1282
    %v1284 = vmul.f32 %v1196, 1.442695
    %v1285 = vpow.pop %v1284
    %v1286 = vmul.f32 %v1197, 1.442695
    %v1287 = vpow.pop %v1286
    %v1288 = vmul.f32 %v1198, 1.442695
    %v1289 = vpow.pop %v1288
    %v1290 = vmul.f32 %v1199, 1.442695
    %v1291 = vpow.pop %v1290
    %v1292 = vmul.f32 %v1200, 1.442695
    %v1293 = vpow.pop %v1292
    %v1294 = vmul.f32 %v1201, 1.442695
    %v1295 = vpow.pop %v1294
    %v1296 = vmul.f32 %v1202, 1.442695
    %v1297 = vpow.pop %v1296
    %v1298 = vmul.f32 %v1203, 1.442695
    %v1299 = vpow.pop %v1298
    %v1300 = vmul.f32 %v1204, %v1237
    %v1301 = vmul.f32 %v1205, %v1239
    %v1302 = vmul.f32 %v1206, %v1241
    %v1303 = vmul.f32 %v1207, %v1243
    %v1304 = vmul.f32 %v1208, %v1245
    %v1305 = vmul.f32 %v1209, %v1247
    %v1306 = vmul.f32 %v1210, %v1249
    %v1307 = vmul.f32 %v1211, %v1251
    %v1308 = vmul.f32 %v1212, %v1253
    %v1309 = vmul.f32 %v1213, %v1255
    %v1310 = vmul.f32 %v1214, %v1257
    %v1311 = vmul.f32 %v1215, %v1259
    %v1312 = vmul.f32 %v1216, %v1261
    %v1313 = vmul.f32 %v1217, %v1263
    %v1314 = vmul.f32 %v1218, %v1265
    %v1315 = vmul.f32 %v1219, %v1267
    %v1316 = vmul.f32 %v1220, %v1269
    %v1317 = vmul.f32 %v1221, %v1271
    %v1318 = vmul.f32 %v1222, %v1273
    %v1319 = vmul.f32 %v1223, %v1275
    %v1320 = vmul.f32 %v1224, %v1277
    %v1321 = vmul.f32 %v1225, %v1279
    %v1322 = vmul.f32 %v1226, %v1281
    %v1323 = vmul.f32 %v1227, %v1283
    %v1324 = vmul.f32 %v1228, %v1285
    %v1325 = vmul.f32 %v1229, %v1287
    %v1326 = vmul.f32 %v1230, %v1289
    %v1327 = vmul.f32 %v1231, %v1291
    %v1328 = vmul.f32 %v1232, %v1293
    %v1329 = vmul.f32 %v1233, %v1295
    %v1330 = vmul.f32 %v1234, %v1297
    %v1331 = vmul.f32 %v1235, %v1299
    %v1332 = vadd.f32 %v1300, %v915
    %v1333 = vadd.f32 %v1301, %v916
    %v1334 = vadd.f32 %v1302, %v917
    %v1335 = vadd.f32 %v1303, %v918
    %v1336 = vadd.f32 %v1304, %v919
    %v1337 = vadd.f32 %v1305, %v920
    %v1338 = vadd.f32 %v1306, %v921
    %v1339 = vadd.f32 %v1307, %v922
    %v1340 = vadd.f32 %v1308, %v923
    %v1341 = vadd.f32 %v1309, %v924
    %v1342 = vadd.f32 %v1310, %v925
    %v1343 = vadd.f32 %v1311, %v926
    %v1344 = vadd.f32 %v1312, %v927
    %v1345 = vadd.f32 %v1313, %v928
    %v1346 = vadd.f32 %v1314, %v929
    %v1347 = vadd.f32 %v1315, %v930
    %v1348 = vadd.f32 %v1316, %v931
    %v1349 = vadd.f32 %v1317, %v932
    %v1350 = vadd.f32 %v1318, %v933
    %v1351 = vadd.f32 %v1319, %v934
    %v1352 = vadd.f32 %v1320, %v935
    %v1353 = vadd.f32 %v1321, %v936
    %v1354 = vadd.f32 %v1322, %v937
    %v1355 = vadd.f32 %v1323, %v938
    %v1356 = vadd.f32 %v1324, %v939
    %v1357 = vadd.f32 %v1325, %v940
    %v1358 = vadd.f32 %v1326, %v941
    %v1359 = vadd.f32 %v1327, %v942
    %v1360 = vadd.f32 %v1328, %v943
    %v1361 = vadd.f32 %v1329, %v944
    %v1362 = vadd.f32 %v1330, %v945
    %v1363 = vadd.f32 %v1331, %v946
    %1364 = vst [vmem:[%s5] sm:$0xff] %v1332
    %1365 = vst [vmem:[%s5 + $0x8] sm:$0xff] %v1333
    %1366 = vst [vmem:[%s5 + $0x10] sm:$0xff] %v1334
    %1367 = vst [vmem:[%s5 + $0x18] sm:$0xff] %v1335
    %1368 = vst [vmem:[%s5 + $0x20] sm:$0xff] %v1336
    %1369 = vst [vmem:[%s5 + $0x28] sm:$0xff] %v1337
    %1370 = vst [vmem:[%s5 + $0x30] sm:$0xff] %v1338
    %1371 = vst [vmem:[%s5 + $0x38] sm:$0xff] %v1339
    %1372 = vst [vmem:[%s5 + $0x40] sm:$0xff] %v1340
    %1373 = vst [vmem:[%s5 + $0x48] sm:$0xff] %v1341
    %1374 = vst [vmem:[%s5 + $0x50] sm:$0xff] %v1342
    %1375 = vst [vmem:[%s5 + $0x58] sm:$0xff] %v1343
    %1376 = vst [vmem:[%s5 + $0x60] sm:$0xff] %v1344
    %1377 = vst [vmem:[%s5 + $0x68] sm:$0xff] %v1345
    %1378 = vst [vmem:[%s5 + $0x70] sm:$0xff] %v1346
    %1379 = vst [vmem:[%s5 + $0x78] sm:$0xff] %v1347
    %1380 = vst [vmem:[%s5 + $0x80] sm:$0xff] %v1348
    %1381 = vst [vmem:[%s5 + $0x88] sm:$0xff] %v1349
    %1382 = vst [vmem:[%s5 + $0x90] sm:$0xff] %v1350
    %1383 = vst [vmem:[%s5 + $0x98] sm:$0xff] %v1351
    %1384 = vst [vmem:[%s5 + $0xa0] sm:$0xff] %v1352
    %1385 = vst [vmem:[%s5 + $0xa8] sm:$0xff] %v1353
    %1386 = vst [vmem:[%s5 + $0xb0] sm:$0xff] %v1354
    %1387 = vst [vmem:[%s5 + $0xb8] sm:$0xff] %v1355
    %1388 = vst [vmem:[%s5 + $0xc0] sm:$0xff] %v1356
    %1389 = vst [vmem:[%s5 + $0xc8] sm:$0xff] %v1357
    %1390 = vst [vmem:[%s5 + $0xd0] sm:$0xff] %v1358
    %1391 = vst [vmem:[%s5 + $0xd8] sm:$0xff] %v1359
    %1392 = vst [vmem:[%s5 + $0xe0] sm:$0xff] %v1360
    %1393 = vst [vmem:[%s5 + $0xe8] sm:$0xff] %v1361
    %1394 = vst [vmem:[%s5 + $0xf0] sm:$0xff] %v1362
    %1395 = vst [vmem:[%s5 + $0xf8] sm:$0xff] %v1363
  $region29: #{vgae_forward.4} parent=0 // pred_fallthru
    _
  // Predicated region
  $region30: #{vgae_forward.4} parent=0 // pred_check
    _
  $region31: #{vgae_forward.4} parent=0 // pred_check_branch
    %1397 = sbr.rel (0) target = $region33
  $region32: #{vgae_forward.4} parent=0 // pred_region
    _
  $region33: #{vgae_forward.4} parent=0 // pred_fallthru
    _
  // Predicated region
  $region34: #{vgae_forward.4} parent=0 // pred_check
    _
  $region35: #{vgae_forward.4} parent=0 // pred_check_branch
    %1399 = sbr.rel (0) target = $region37
  $region36: #{vgae_forward.4} parent=0 // pred_region
    _
  $region37: #{vgae_forward.4} parent=0 // pred_fallthru
    _

</llo_original>
